<compile_context>
chip_gen: v5e
topology: v5e:2x2
jax: 0.10.0
libtpu: 0.0.40
codegen_flags: <defaults>
</compile_context>

<pallas_src>
import functools
import math

import jax
import jax.numpy as jnp
from jax.experimental import pallas as pl
from jax.experimental.pallas import tpu as pltpu

NEG_INF = -1e30   # finite causal-mask fill (no -inf -> NaN footgun)
LN_EPS = 1e-5     # nn.LayerNorm default


@functools.lru_cache(maxsize=None)
def _vmem_limit_bytes():
    """Per-generation scoped-VMEM budget (~half of physical capacity):
    64 MiB on v5e/v6e (128 MiB physical), 32 MiB on v7x (64 MiB physical)."""
    cap = 64 * 1024 * 1024                      # conservative fallback (= v7x physical)
    try:
        cap = int(getattr(pltpu.get_tpu_info(), "vmem_capacity_bytes", cap))
    except Exception:
        pass
    return min(cap // 2, 100 * 1024 * 1024)


def _pick_tile(full, target, align):
    """Largest tile <= target that is a multiple of `align` and divides `full`.
    Falls back to the full extent (block == full dim is always legal).
    NOTE: for large dims with no aligned divisor this returns the full dim —
    pad such dims in the caller (the vocab dim is padded to 128 lanes)."""
    if full <= target:
        return full
    t = (target // align) * align
    while t >= align:
        if full % t == 0:
            return t
        t -= align
    return full


# ----------------------------------------------------------------------------
# Tiled linear (final vocab projection; bf16 operands, f32 accumulation)
# ----------------------------------------------------------------------------
def _linear_direct_kernel(x_ref, w_ref, b_ref, o_ref, *, activation):
    y = jnp.dot(x_ref[...], w_ref[...], preferred_element_type=jnp.float32)
    y = y + b_ref[...]
    if activation == "relu":
        y = jnp.maximum(y, 0.0)
    o_ref[...] = y.astype(o_ref.dtype)


def _linear_acc_kernel(x_ref, w_ref, b_ref, o_ref, acc_ref, *, activation):
    k = pl.program_id(2)

    @pl.when(k == 0)
    def _init():
        acc_ref[...] = jnp.zeros_like(acc_ref)

    acc_ref[...] += jnp.dot(x_ref[...], w_ref[...],
                            preferred_element_type=jnp.float32)

    @pl.when(k == pl.num_programs(2) - 1)
    def _finalize():
        y = acc_ref[...] + b_ref[...]
        if activation == "relu":
            y = jnp.maximum(y, 0.0)
        o_ref[...] = y.astype(o_ref.dtype)


def linear(x2d, w, b2d, *, activation="none", out_dtype=jnp.float32,
           tm=512, tn=1024, tk=512):
    """x2d: (M, K) bf16, w: (K, N) bf16 pre-transposed, b2d: (1, N) f32.
    out_dtype=bf16 when the result feeds another kernel (halves HBM bytes),
    f32 for final logits.  No per-tile operand casts inside the kernel."""
    M, K = x2d.shape
    N = w.shape[1]
    tm = _pick_tile(M, tm, 8)
    tn = _pick_tile(N, tn, 128)
    tk = _pick_tile(K, tk, 128)
    nk = K // tk
    params = pltpu.CompilerParams(
        dimension_semantics=(("parallel", "parallel") if nk == 1
                             else ("parallel", "parallel", "arbitrary")),
        vmem_limit_bytes=_vmem_limit_bytes(),
    )
    # TODO(synk): on v7x add pipeline_mode=pl.Buffered(3) to the x/w specs to
    #             hide DMA issue latency once activations are bf16.
    if nk == 1:
        # Single K step: write dot(x, w) + b straight to o_ref (no accumulator
        # scratch, no extra epilogue copy).
        return pl.pallas_call(
            functools.partial(_linear_direct_kernel, activation=activation),
            out_shape=jax.ShapeDtypeStruct((M, N), out_dtype),
            grid=(M // tm, N // tn),
            in_specs=[
                pl.BlockSpec((tm, K), lambda i, j: (i, 0)),
                pl.BlockSpec((K, tn), lambda i, j: (0, j)),
                pl.BlockSpec((1, tn), lambda i, j: (0, j)),
            ],
            out_specs=pl.BlockSpec((tm, tn), lambda i, j: (i, j)),
            compiler_params=params,
        )(x2d, w, b2d)
    return pl.pallas_call(
        functools.partial(_linear_acc_kernel, activation=activation),
        out_shape=jax.ShapeDtypeStruct((M, N), out_dtype),
        grid=(M // tm, N // tn, nk),
        in_specs=[
            pl.BlockSpec((tm, tk), lambda i, j, k: (i, k)),
            pl.BlockSpec((tk, tn), lambda i, j, k: (k, j)),
            pl.BlockSpec((1, tn), lambda i, j, k: (0, j)),
        ],
        out_specs=pl.BlockSpec((tm, tn), lambda i, j, k: (i, j)),
        scratch_shapes=[pltpu.VMEM((tm, tn), jnp.float32)],
        compiler_params=params,
    )(x2d, w, b2d)


# ----------------------------------------------------------------------------
# In-kernel helpers (traced inside the fused decoder-layer kernel)
# ----------------------------------------------------------------------------
def _layernorm(h, gamma, beta):
    mu = jnp.mean(h, axis=-1, keepdims=True)
    var = jnp.mean(jnp.square(h - mu), axis=-1, keepdims=True)
    return (h - mu) * jax.lax.rsqrt(var + LN_EPS) * gamma + beta


def _mha(q, k, v, w_out, *, heads, causal, scale):
    """Multi-head attention with the output projection folded in per head.

    q: (Nq, D) f32, k/v: (Nk, D) f32, w_out: (D, D) bf16.
    Returns (Nq, D) f32 == concat_h(softmax(q_h k_h^T / sqrt(hd)) v_h) @ w_out
    (bias added by the caller).  Heads are never concatenated along lanes:
    each head's PV result is pushed through its row-slice of w_out and
    accumulated, avoiding lane-offset concat copies / masked partial stores.
    """
    nq, d = q.shape
    nk = k.shape[0]
    hd = d // heads
    # Fold the 1/sqrt(hd) scale into q once (O(N*D)), single bf16 cast per
    # operand slab (no per-head casts; only P and the per-head output cast).
    qb = (q * scale).astype(jnp.bfloat16)
    kb = k.astype(jnp.bfloat16)
    vb = v.astype(jnp.bfloat16)
    if causal:
        row = jax.lax.broadcasted_iota(jnp.int32, (nq, nk), 0)
        col = jax.lax.broadcasted_iota(jnp.int32, (nq, nk), 1)
        keep = col <= row
    acc = jnp.zeros((nq, d), jnp.float32)
    # TODO(synk): per-head QK^T only fills hd of the 256-wide MXU on v6e/v7x;
    #             for hd <= 64 pack two heads per dot (block-diag mask), or use
    #             a flash/online-softmax form for long sequences so the (Nq,Nk)
    #             score slab never materializes.
    for h in range(heads):                     # static unroll (small H)
        sl = slice(h * hd, (h + 1) * hd)
        s = jnp.dot(qb[:, sl], kb[:, sl].T, preferred_element_type=jnp.float32)
        if causal:
            s = jnp.where(keep, s, NEG_INF)
        m = jnp.max(s, axis=-1, keepdims=True)
        p = jnp.exp(s - m)
        l = jnp.sum(p, axis=-1, keepdims=True)
        pv = jnp.dot(p.astype(jnp.bfloat16), vb[:, sl],
                     preferred_element_type=jnp.float32)
        # Normalize after PV (O(Nq*hd) mults); reciprocal rides the EUP slot.
        o_h = pv * pl.reciprocal(l, approx=True)
        acc = acc + jnp.dot(o_h.astype(jnp.bfloat16), w_out[sl, :],
                            preferred_element_type=jnp.float32)
    return acc


# ----------------------------------------------------------------------------
# Fused decoder layer: one pallas_call per layer, grid over batch
# ----------------------------------------------------------------------------
def _decoder_layer_kernel(x_ref, mem_ref,
                          w_qkv_ref, b_qkv_ref, w_sao_ref, b_sao_ref,
                          ln1_g_ref, ln1_b_ref,
                          w_caq_ref, b_caq_ref, w_cakv_ref, b_cakv_ref,
                          w_cao_ref, b_cao_ref, ln2_g_ref, ln2_b_ref,
                          w_ff1_ref, b_ff1_ref, w_ff2_ref, b_ff2_ref,
                          ln3_g_ref, ln3_b_ref,
                          o_ref, *, heads, dim, scale):
    xb = x_ref[0]                              # (N, D) bf16 activations
    x = xb.astype(jnp.float32)                 # f32 residual stream in-kernel
    mem = mem_ref[0]                           # (N, D) bf16 (embedded input)

    # ---- self-attention (causal), post-norm ----
    qkv = jnp.dot(xb, w_qkv_ref[...],
                  preferred_element_type=jnp.float32) + b_qkv_ref[...]
    sa = _mha(qkv[:, :dim], qkv[:, dim:2 * dim], qkv[:, 2 * dim:],
              w_sao_ref[...], heads=heads, causal=True, scale=scale)
    h1 = _layernorm(x + sa + b_sao_ref[...], ln1_g_ref[...], ln1_b_ref[...])

    # ---- cross-attention against memory (no mask), post-norm ----
    q = jnp.dot(h1.astype(jnp.bfloat16), w_caq_ref[...],
                preferred_element_type=jnp.float32) + b_caq_ref[...]
    kv = jnp.dot(mem, w_cakv_ref[...],
                 preferred_element_type=jnp.float32) + b_cakv_ref[...]
    ca = _mha(q, kv[:, :dim], kv[:, dim:], w_cao_ref[...],
              heads=heads, causal=False, scale=scale)
    h2 = _layernorm(h1 + ca + b_cao_ref[...], ln2_g_ref[...], ln2_b_ref[...])

    # ---- feed-forward (ReLU), post-norm ----
    f = jnp.dot(h2.astype(jnp.bfloat16), w_ff1_ref[...],
                preferred_element_type=jnp.float32) + b_ff1_ref[...]
    f = jnp.maximum(f, 0.0).astype(jnp.bfloat16)
    ff = jnp.dot(f, w_ff2_ref[...],
                 preferred_element_type=jnp.float32) + b_ff2_ref[...]
    h3 = _layernorm(h2 + ff, ln3_g_ref[...], ln3_b_ref[...])

    o_ref[0] = h3.astype(o_ref.dtype)


def decoder_layer(x, memory, p, heads):
    """One fused post-norm TransformerDecoderLayer as a single pallas_call
    (instead of ~6 matmul/attention/LN kernels): at small B*N the per-call
    launch/DMA overhead and intermediate HBM round trips vanish, and the
    batch grid axis is "parallel" so both v7x TensorCores get work.
    Sized for weights that fit VMEM (true for this module's dims); for large
    D / FFN fall back to the tiled `linear` + flash-attention path.
    TODO(synk): flash/online-softmax with a KV grid axis for long sequences —
                the full (N, Nk) score slab only scales to a few hundred tokens."""
    B, N, D = x.shape
    scale = 1.0 / math.sqrt(D // heads)

    args = [
        x, memory,
        p["sa_qkv_w"], p["sa_qkv_b"], p["sa_out_w"], p["sa_out_b"],
        p["ln1_g"], p["ln1_b"],
        p["ca_q_w"], p["ca_q_b"], p["ca_kv_w"], p["ca_kv_b"],
        p["ca_out_w"], p["ca_out_b"], p["ln2_g"], p["ln2_b"],
        p["ff_w1"], p["ff_b1"], p["ff_w2"], p["ff_b2"],
        p["ln3_g"], p["ln3_b"],
    ]
    per_batch = lambda b: (b, 0, 0)
    whole = lambda b: (0, 0)          # same block every step -> weights stay resident
    in_specs = [pl.BlockSpec((1, N, D), per_batch),
                pl.BlockSpec((1, N, D), per_batch)]
    in_specs += [pl.BlockSpec(a.shape, whole) for a in args[2:]]

    return pl.pallas_call(
        functools.partial(_decoder_layer_kernel, heads=heads, dim=D, scale=scale),
        out_shape=jax.ShapeDtypeStruct((B, N, D), jnp.bfloat16),
        grid=(B,),
        in_specs=in_specs,
        out_specs=pl.BlockSpec((1, N, D), per_batch),
        compiler_params=pltpu.CompilerParams(
            dimension_semantics=("parallel",),
            vmem_limit_bytes=_vmem_limit_bytes(),
        ),
    )(*args)


# ----------------------------------------------------------------------------
# Model composition
# ----------------------------------------------------------------------------
def causal_transformer_forward(params, tokens, heads, vocab_size):
    B, N = tokens.shape
    D = params["token_emb"].shape[1]
    # TODO(synk): embedding gather + positional add left to XLA; a
    #             PrefetchScalarGridSpec row-gather kernel could stream rows
    #             straight into the first fused layer instead.
    h = params["token_emb"][tokens] + params["pos_emb"][:N][None, :, :]
    h = h.astype(jnp.bfloat16)                 # bf16 activations between kernels
    memory = h                                 # decoder(tgt=h, memory=h)
    for lp in params["layers"]:
        h = decoder_layer(h, memory, lp, heads)
    # Lane-dense (128-padded) vocab projection; slice back to vocab_size.
    logits = linear(h.reshape(B * N, D), params["out_w"], params["out_b"],
                    out_dtype=jnp.float32)
    return logits.reshape(B, N, -1)[..., :vocab_size]


# ----------------------------------------------------------------------------
# Deterministic parameter init
# (weights pre-transposed to (in, out) and stored bf16 for the MXU path;
#  biases / LN params / embeddings f32; biases stored as (1, n) for kernels)
# ----------------------------------------------------------------------------
def init_params(key, dim, heads, layers, vocab_size, ffn_dim=2048, max_pos=512):
    ks = iter(jax.random.split(key, 7 * layers + 8))

    def nrm(shape, scale=0.02, dtype=jnp.bfloat16):
        return (scale * jax.random.normal(next(ks), shape)).astype(dtype)

    def zeros(n):
        return jnp.zeros((1, n), jnp.float32)

    def ones(n):
        return jnp.ones((1, n), jnp.float32)

    layer_params = []
    for _ in range(layers):
        layer_params.append({
            "sa_qkv_w": nrm((dim, 3 * dim)),          # fused Q|K|V, (in, out)
            "sa_qkv_b": zeros(3 * dim),
            "sa_out_w": nrm((dim, dim)),
            "sa_out_b": zeros(dim),
            "ca_q_w": nrm((dim, dim)),
            "ca_q_b": zeros(dim),
            "ca_kv_w": nrm((dim, 2 * dim)),           # fused K|V, (in, out)
            "ca_kv_b": zeros(2 * dim),
            "ca_out_w": nrm((dim, dim)),
            "ca_out_b": zeros(dim),
            "ff_w1": nrm((dim, ffn_dim)),
            "ff_b1": zeros(ffn_dim),
            "ff_w2": nrm((ffn_dim, dim)),
            "ff_b2": zeros(dim),
            "ln1_g": ones(dim), "ln1_b": zeros(dim),
            "ln2_g": ones(dim), "ln2_b": zeros(dim),
            "ln3_g": ones(dim), "ln3_b": zeros(dim),
        })

    # Lane-dense final projection: pad the vocab dim to a multiple of 128 so
    # the logits store is an unmasked full-lane vst; wrapper slices [:vocab].
    vocab_pad = ((vocab_size + 127) // 128) * 128
    out_w = jnp.pad(nrm((dim, vocab_size)),
                    ((0, 0), (0, vocab_pad - vocab_size)))
    out_b = jnp.zeros((1, vocab_pad), jnp.float32)

    return {
        "token_emb": nrm((vocab_size, dim), scale=1.0, dtype=jnp.float32),
        "pos_emb": nrm((max_pos, dim), scale=1.0, dtype=jnp.float32),
        "layers": layer_params,
        "out_w": out_w,
        "out_b": out_b,
    }


if __name__ == "__main__":
    # small config consistent with the module: dim=32, heads=4, layers=2,
    # vocab_size=64, batch=2, seq=8
    DIM, HEADS, LAYERS, VOCAB = 32, 4, 2, 64
    B, N = 2, 8

    key = jax.random.PRNGKey(0)
    pkey, tkey = jax.random.split(key)
    params = init_params(pkey, DIM, HEADS, LAYERS, VOCAB)
    tokens = jax.random.randint(tkey, (B, N), 0, VOCAB, dtype=jnp.int32)

    fwd = jax.jit(functools.partial(causal_transformer_forward,
                                    heads=HEADS, vocab_size=VOCAB))
    logits = jax.block_until_ready(fwd(params, tokens))
    assert logits.shape == (B, N, VOCAB), logits.shape
    assert logits.dtype == jnp.float32
    assert bool(jnp.all(jnp.isfinite(logits)))
    print("KERNEL_OK")
</pallas_src>

<mosaic_0001>
module attributes {stable_mosaic.version = 11 : i64} {
  func.func @_linear_direct_kernel(%arg0: i32, %arg1: i32, %arg2: memref<16x32xbf16, #tpu.memory_space<vmem>>, %arg3: memref<32x128xbf16, #tpu.memory_space<vmem>>, %arg4: memref<1x128xf32, #tpu.memory_space<vmem>>, %arg5: memref<16x128xf32, #tpu.memory_space<vmem>>) attributes {dimension_semantics = [#tpu.dimension_semantics<parallel>, #tpu.dimension_semantics<parallel>], iteration_bounds = array<i64: 1, 1>, scalar_prefetch = 0 : i64, scratch_operands = 0 : i64, tpu.core_type = #tpu.core_type<tc>, window_params = [{transform_indices = @transform_0, window_bounds = array<i64: 16, 32>}, {transform_indices = @transform_1, window_bounds = array<i64: 32, 128>}, {transform_indices = @transform_2, window_bounds = array<i64: 1, 128>}, {transform_indices = @transform_3, window_bounds = array<i64: 16, 128>}]} {
    %c0 = arith.constant 0 : index
    %c0_0 = arith.constant 0 : index
    %0 = vector.load %arg2[%c0, %c0_0] : memref<16x32xbf16, #tpu.memory_space<vmem>>, vector<16x32xbf16>
    %c0_1 = arith.constant 0 : index
    %c0_2 = arith.constant 0 : index
    %1 = vector.load %arg3[%c0_1, %c0_2] : memref<32x128xbf16, #tpu.memory_space<vmem>>, vector<32x128xbf16>
    %cst = arith.constant dense<0.000000e+00> : vector<16x128xf32>
    %2 = tpu.matmul %0, %1, %cst {dimension_numbers = #tpu.dot_dimension_numbers<[1], [0], [0], [1], [0, 0, 1, 1], [], []>} : vector<16x32xbf16>, vector<32x128xbf16>, vector<16x128xf32> -> vector<16x128xf32>
    %c0_3 = arith.constant 0 : index
    %c0_4 = arith.constant 0 : index
    %3 = vector.load %arg4[%c0_3, %c0_4] : memref<1x128xf32, #tpu.memory_space<vmem>>, vector<1x128xf32>
    %4 = vector.broadcast %3 : vector<1x128xf32> to vector<16x128xf32>
    %5 = arith.addf %2, %4 : vector<16x128xf32>
    %c0_5 = arith.constant 0 : index
    %c0_6 = arith.constant 0 : index
    %6 = vector.load %arg5[%c0_5, %c0_6] : memref<16x128xf32, #tpu.memory_space<vmem>>, vector<16x128xf32>
    tpu.vector_store %arg5[%c0_5, %c0_6], %5 {strides = array<i32>} : memref<16x128xf32, #tpu.memory_space<vmem>>, vector<16x128xf32>,
    return
  }
  func.func @transform_0(%arg0: i32, %arg1: i32) -> (i32, i32) {
    %c0_i32 = arith.constant 0 : i32
    %c0_i32_0 = arith.constant 0 : i32
    return %arg0, %c0_i32 : i32, i32
  }
  func.func @transform_1(%arg0: i32, %arg1: i32) -> (i32, i32) {
    %c0_i32 = arith.constant 0 : i32
    %c0_i32_0 = arith.constant 0 : i32
    return %c0_i32, %arg1 : i32, i32
  }
  func.func @transform_2(%arg0: i32, %arg1: i32) -> (i32, i32) {
    %c0_i32 = arith.constant 0 : i32
    %c0_i32_0 = arith.constant 0 : i32
    return %c0_i32, %arg1 : i32, i32
  }
  func.func @transform_3(%arg0: i32, %arg1: i32) -> (i32, i32) {
    %c0_i32 = arith.constant 0 : i32
    return %arg0, %arg1 : i32, i32
  }
}

module attributes {stable_mosaic.version = 11 : i64} {
  func.func @_decoder_layer_kernel(%arg0: i32, %arg1: memref<1x8x32xbf16, #tpu.memory_space<vmem>>, %arg2: memref<1x8x32xbf16, #tpu.memory_space<vmem>>, %arg3: memref<32x96xbf16, #tpu.memory_space<vmem>>, %arg4: memref<1x96xf32, #tpu.memory_space<vmem>>, %arg5: memref<32x32xbf16, #tpu.memory_space<vmem>>, %arg6: memref<1x32xf32, #tpu.memory_space<vmem>>, %arg7: memref<1x32xf32, #tpu.memory_space<vmem>>, %arg8: memref<1x32xf32, #tpu.memory_space<vmem>>, %arg9: memref<32x32xbf16, #tpu.memory_space<vmem>>, %arg10: memref<1x32xf32, #tpu.memory_space<vmem>>, %arg11: memref<32x64xbf16, #tpu.memory_space<vmem>>, %arg12: memref<1x64xf32, #tpu.memory_space<vmem>>, %arg13: memref<32x32xbf16, #tpu.memory_space<vmem>>, %arg14: memref<1x32xf32, #tpu.memory_space<vmem>>, %arg15: memref<1x32xf32, #tpu.memory_space<vmem>>, %arg16: memref<1x32xf32, #tpu.memory_space<vmem>>, %arg17: memref<32x2048xbf16, #tpu.memory_space<vmem>>, %arg18: memref<1x2048xf32, #tpu.memory_space<vmem>>, %arg19: memref<2048x32xbf16, #tpu.memory_space<vmem>>, %arg20: memref<1x32xf32, #tpu.memory_space<vmem>>, %arg21: memref<1x32xf32, #tpu.memory_space<vmem>>, %arg22: memref<1x32xf32, #tpu.memory_space<vmem>>, %arg23: memref<1x8x32xbf16, #tpu.memory_space<vmem>>) attributes {dimension_semantics = [#tpu.dimension_semantics<parallel>], iteration_bounds = array<i64: 2>, scalar_prefetch = 0 : i64, scratch_operands = 0 : i64, tpu.core_type = #tpu.core_type<tc>, window_params = [{transform_indices = @transform_0, window_bounds = array<i64: 1, 8, 32>}, {transform_indices = @transform_1, window_bounds = array<i64: 1, 8, 32>}, {pipeline_mode = #tpu.pipeline_mode<synchronous>, transform_indices = @transform_2, window_bounds = array<i64: 32, 96>}, {pipeline_mode = #tpu.pipeline_mode<synchronous>, transform_indices = @transform_3, window_bounds = array<i64: 1, 96>}, {pipeline_mode = #tpu.pipeline_mode<synchronous>, transform_indices = @transform_4, window_bounds = array<i64: 32, 32>}, {pipeline_mode = #tpu.pipeline_mode<synchronous>, transform_indices = @transform_5, window_bounds = array<i64: 1, 32>}, {pipeline_mode = #tpu.pipeline_mode<synchronous>, transform_indices = @transform_6, window_bounds = array<i64: 1, 32>}, {pipeline_mode = #tpu.pipeline_mode<synchronous>, transform_indices = @transform_7, window_bounds = array<i64: 1, 32>}, {pipeline_mode = #tpu.pipeline_mode<synchronous>, transform_indices = @transform_8, window_bounds = array<i64: 32, 32>}, {pipeline_mode = #tpu.pipeline_mode<synchronous>, transform_indices = @transform_9, window_bounds = array<i64: 1, 32>}, {pipeline_mode = #tpu.pipeline_mode<synchronous>, transform_indices = @transform_10, window_bounds = array<i64: 32, 64>}, {pipeline_mode = #tpu.pipeline_mode<synchronous>, transform_indices = @transform_11, window_bounds = array<i64: 1, 64>}, {pipeline_mode = #tpu.pipeline_mode<synchronous>, transform_indices = @transform_12, window_bounds = array<i64: 32, 32>}, {pipeline_mode = #tpu.pipeline_mode<synchronous>, transform_indices = @transform_13, window_bounds = array<i64: 1, 32>}, {pipeline_mode = #tpu.pipeline_mode<synchronous>, transform_indices = @transform_14, window_bounds = array<i64: 1, 32>}, {pipeline_mode = #tpu.pipeline_mode<synchronous>, transform_indices = @transform_15, window_bounds = array<i64: 1, 32>}, {pipeline_mode = #tpu.pipeline_mode<synchronous>, transform_indices = @transform_16, window_bounds = array<i64: 32, 2048>}, {pipeline_mode = #tpu.pipeline_mode<synchronous>, transform_indices = @transform_17, window_bounds = array<i64: 1, 2048>}, {pipeline_mode = #tpu.pipeline_mode<synchronous>, transform_indices = @transform_18, window_bounds = array<i64: 2048, 32>}, {pipeline_mode = #tpu.pipeline_mode<synchronous>, transform_indices = @transform_19, window_bounds = array<i64: 1, 32>}, {pipeline_mode = #tpu.pipeline_mode<synchronous>, transform_indices = @transform_20, window_bounds = array<i64: 1, 32>}, {pipeline_mode = #tpu.pipeline_mode<synchronous>, transform_indices = @transform_21, window_bounds = array<i64: 1, 32>}, {transform_indices = @transform_22, window_bounds = array<i64: 1, 8, 32>}]} {
    %c0 = arith.constant 0 : index
    %c0_0 = arith.constant 0 : index
    %c0_1 = arith.constant 0 : index
    %0 = vector.load %arg1[%c0, %c0_0, %c0_1] : memref<1x8x32xbf16, #tpu.memory_space<vmem>>, vector<1x8x32xbf16>
    %1 = vector.shape_cast %0 : vector<1x8x32xbf16> to vector<8x32xbf16>
    %2 = arith.extf %1 : vector<8x32xbf16> to vector<8x32xf32>
    %c0_2 = arith.constant 0 : index
    %c0_3 = arith.constant 0 : index
    %c0_4 = arith.constant 0 : index
    %3 = vector.load %arg2[%c0_2, %c0_3, %c0_4] : memref<1x8x32xbf16, #tpu.memory_space<vmem>>, vector<1x8x32xbf16>
    %4 = vector.shape_cast %3 : vector<1x8x32xbf16> to vector<8x32xbf16>
    %c0_5 = arith.constant 0 : index
    %c0_6 = arith.constant 0 : index
    %5 = vector.load %arg3[%c0_5, %c0_6] : memref<32x96xbf16, #tpu.memory_space<vmem>>, vector<32x96xbf16>
    %cst = arith.constant dense<0.000000e+00> : vector<8x96xf32>
    %6 = tpu.matmul %1, %5, %cst {dimension_numbers = #tpu.dot_dimension_numbers<[1], [0], [0], [1], [0, 0, 1, 1], [], []>} : vector<8x32xbf16>, vector<32x96xbf16>, vector<8x96xf32> -> vector<8x96xf32>
    %c0_7 = arith.constant 0 : index
    %c0_8 = arith.constant 0 : index
    %7 = vector.load %arg4[%c0_7, %c0_8] : memref<1x96xf32, #tpu.memory_space<vmem>>, vector<1x96xf32>
    %8 = vector.broadcast %7 : vector<1x96xf32> to vector<8x96xf32>
    %9 = arith.addf %6, %8 : vector<8x96xf32>
    %10 = vector.extract_strided_slice %9 {offsets = [0, 0], sizes = [8, 32], strides = [1, 1]} : vector<8x96xf32> to vector<8x32xf32>
    %11 = vector.extract_strided_slice %9 {offsets = [0, 32], sizes = [8, 32], strides = [1, 1]} : vector<8x96xf32> to vector<8x32xf32>
    %12 = vector.extract_strided_slice %9 {offsets = [0, 64], sizes = [8, 32], strides = [1, 1]} : vector<8x96xf32> to vector<8x32xf32>
    %c0_9 = arith.constant 0 : index
    %c0_10 = arith.constant 0 : index
    %13 = vector.load %arg5[%c0_9, %c0_10] : memref<32x32xbf16, #tpu.memory_space<vmem>>, vector<32x32xbf16>
    %cst_11 = arith.constant 0.353553385 : f32
    %14 = vector.broadcast %cst_11 : f32 to vector<8x32xf32>
    %15 = arith.mulf %10, %14 : vector<8x32xf32>
    %16 = arith.truncf %15 : vector<8x32xf32> to vector<8x32xbf16>
    %17 = arith.truncf %11 : vector<8x32xf32> to vector<8x32xbf16>
    %18 = arith.truncf %12 : vector<8x32xf32> to vector<8x32xbf16>
    %19 = tpu.iota {dimensions = array<i32: 0>} : vector<8x8xi32>
    %20 = tpu.iota {dimensions = array<i32: 1>} : vector<8x8xi32>
    %21 = arith.cmpi sle, %20, %19 : vector<8x8xi32>
    %cst_12 = arith.constant 0.000000e+00 : f32
    %22 = vector.broadcast %cst_12 : f32 to vector<8x32xf32>
    %23 = vector.extract_strided_slice %16 {offsets = [0, 0], sizes = [8, 8], strides = [1, 1]} : vector<8x32xbf16> to vector<8x8xbf16>
    %24 = vector.extract_strided_slice %17 {offsets = [0, 0], sizes = [8, 8], strides = [1, 1]} : vector<8x32xbf16> to vector<8x8xbf16>
    %25 = tpu.transpose %24, [1, 0] : vector<8x8xbf16> -> vector<8x8xbf16>
    %cst_13 = arith.constant dense<0.000000e+00> : vector<8x8xf32>
    %26 = tpu.matmul %23, %25, %cst_13 {dimension_numbers = #tpu.dot_dimension_numbers<[1], [0], [0], [1], [0, 0, 1, 1], [], []>} : vector<8x8xbf16>, vector<8x8xbf16>, vector<8x8xf32> -> vector<8x8xf32>
    %cst_14 = arith.constant -1.000000e+30 : f32
    %27 = vector.broadcast %cst_14 : f32 to vector<8x8xf32>
    %28 = arith.select %21, %26, %27 : vector<8x8xi1>, vector<8x8xf32>
    %cst_15 = arith.constant dense<0xFF800000> : vector<8xf32>
    %29 = vector.multi_reduction <maximumf>, %28, %cst_15 [1] : vector<8x8xf32> to vector<8xf32>
    %30 = vector.shape_cast %29 : vector<8xf32> to vector<8x1xf32>
    %31 = vector.broadcast %30 : vector<8x1xf32> to vector<8x8xf32>
    %32 = arith.subf %28, %31 : vector<8x8xf32>
    %33 = math.exp %32 : vector<8x8xf32>
    %cst_16 = arith.constant dense<0.000000e+00> : vector<8xf32>
    %34 = vector.multi_reduction <add>, %33, %cst_16 [1] : vector<8x8xf32> to vector<8xf32>
    %35 = vector.shape_cast %34 : vector<8xf32> to vector<8x1xf32>
    %36 = arith.truncf %33 : vector<8x8xf32> to vector<8x8xbf16>
    %37 = vector.extract_strided_slice %18 {offsets = [0, 0], sizes = [8, 8], strides = [1, 1]} : vector<8x32xbf16> to vector<8x8xbf16>
    %cst_17 = arith.constant dense<0.000000e+00> : vector<8x8xf32>
    %38 = tpu.matmul %36, %37, %cst_17 {dimension_numbers = #tpu.dot_dimension_numbers<[1], [0], [0], [1], [0, 0, 1, 1], [], []>} : vector<8x8xbf16>, vector<8x8xbf16>, vector<8x8xf32> -> vector<8x8xf32>
    %39 = tpu.reciprocal %35 {approx = true} : vector<8x1xf32> -> vector<8x1xf32>
    %40 = vector.broadcast %39 : vector<8x1xf32> to vector<8x8xf32>
    %41 = arith.mulf %38, %40 : vector<8x8xf32>
    %42 = arith.truncf %41 : vector<8x8xf32> to vector<8x8xbf16>
    %43 = vector.extract_strided_slice %13 {offsets = [0, 0], sizes = [8, 32], strides = [1, 1]} : vector<32x32xbf16> to vector<8x32xbf16>
    %cst_18 = arith.constant dense<0.000000e+00> : vector<8x32xf32>
    %44 = tpu.matmul %42, %43, %cst_18 {dimension_numbers = #tpu.dot_dimension_numbers<[1], [0], [0], [1], [0, 0, 1, 1], [], []>} : vector<8x8xbf16>, vector<8x32xbf16>, vector<8x32xf32> -> vector<8x32xf32>
    %45 = arith.addf %22, %44 : vector<8x32xf32>
    %46 = vector.extract_strided_slice %16 {offsets = [0, 8], sizes = [8, 8], strides = [1, 1]} : vector<8x32xbf16> to vector<8x8xbf16>
    %47 = vector.extract_strided_slice %17 {offsets = [0, 8], sizes = [8, 8], strides = [1, 1]} : vector<8x32xbf16> to vector<8x8xbf16>
    %48 = tpu.transpose %47, [1, 0] : vector<8x8xbf16> -> vector<8x8xbf16>
    %cst_19 = arith.constant dense<0.000000e+00> : vector<8x8xf32>
    %49 = tpu.matmul %46, %48, %cst_19 {dimension_numbers = #tpu.dot_dimension_numbers<[1], [0], [0], [1], [0, 0, 1, 1], [], []>} : vector<8x8xbf16>, vector<8x8xbf16>, vector<8x8xf32> -> vector<8x8xf32>
    %cst_20 = arith.constant -1.000000e+30 : f32
    %50 = vector.broadcast %cst_20 : f32 to vector<8x8xf32>
    %51 = arith.select %21, %49, %50 : vector<8x8xi1>, vector<8x8xf32>
    %cst_21 = arith.constant dense<0xFF800000> : vector<8xf32>
    %52 = vector.multi_reduction <maximumf>, %51, %cst_21 [1] : vector<8x8xf32> to vector<8xf32>
    %53 = vector.shape_cast %52 : vector<8xf32> to vector<8x1xf32>
    %54 = vector.broadcast %53 : vector<8x1xf32> to vector<8x8xf32>
    %55 = arith.subf %51, %54 : vector<8x8xf32>
    %56 = math.exp %55 : vector<8x8xf32>
    %cst_22 = arith.constant dense<0.000000e+00> : vector<8xf32>
    %57 = vector.multi_reduction <add>, %56, %cst_22 [1] : vector<8x8xf32> to vector<8xf32>
    %58 = vector.shape_cast %57 : vector<8xf32> to vector<8x1xf32>
    %59 = arith.truncf %56 : vector<8x8xf32> to vector<8x8xbf16>
    %60 = vector.extract_strided_slice %18 {offsets = [0, 8], sizes = [8, 8], strides = [1, 1]} : vector<8x32xbf16> to vector<8x8xbf16>
    %cst_23 = arith.constant dense<0.000000e+00> : vector<8x8xf32>
    %61 = tpu.matmul %59, %60, %cst_23 {dimension_numbers = #tpu.dot_dimension_numbers<[1], [0], [0], [1], [0, 0, 1, 1], [], []>} : vector<8x8xbf16>, vector<8x8xbf16>, vector<8x8xf32> -> vector<8x8xf32>
    %62 = tpu.reciprocal %58 {approx = true} : vector<8x1xf32> -> vector<8x1xf32>
    %63 = vector.broadcast %62 : vector<8x1xf32> to vector<8x8xf32>
    %64 = arith.mulf %61, %63 : vector<8x8xf32>
    %65 = arith.truncf %64 : vector<8x8xf32> to vector<8x8xbf16>
    %66 = vector.extract_strided_slice %13 {offsets = [8, 0], sizes = [8, 32], strides = [1, 1]} : vector<32x32xbf16> to vector<8x32xbf16>
    %cst_24 = arith.constant dense<0.000000e+00> : vector<8x32xf32>
    %67 = tpu.matmul %65, %66, %cst_24 {dimension_numbers = #tpu.dot_dimension_numbers<[1], [0], [0], [1], [0, 0, 1, 1], [], []>} : vector<8x8xbf16>, vector<8x32xbf16>, vector<8x32xf32> -> vector<8x32xf32>
    %68 = arith.addf %45, %67 : vector<8x32xf32>
    %69 = vector.extract_strided_slice %16 {offsets = [0, 16], sizes = [8, 8], strides = [1, 1]} : vector<8x32xbf16> to vector<8x8xbf16>
    %70 = vector.extract_strided_slice %17 {offsets = [0, 16], sizes = [8, 8], strides = [1, 1]} : vector<8x32xbf16> to vector<8x8xbf16>
    %71 = tpu.transpose %70, [1, 0] : vector<8x8xbf16> -> vector<8x8xbf16>
    %cst_25 = arith.constant dense<0.000000e+00> : vector<8x8xf32>
    %72 = tpu.matmul %69, %71, %cst_25 {dimension_numbers = #tpu.dot_dimension_numbers<[1], [0], [0], [1], [0, 0, 1, 1], [], []>} : vector<8x8xbf16>, vector<8x8xbf16>, vector<8x8xf32> -> vector<8x8xf32>
    %cst_26 = arith.constant -1.000000e+30 : f32
    %73 = vector.broadcast %cst_26 : f32 to vector<8x8xf32>
    %74 = arith.select %21, %72, %73 : vector<8x8xi1>, vector<8x8xf32>
    %cst_27 = arith.constant dense<0xFF800000> : vector<8xf32>
    %75 = vector.multi_reduction <maximumf>, %74, %cst_27 [1] : vector<8x8xf32> to vector<8xf32>
    %76 = vector.shape_cast %75 : vector<8xf32> to vector<8x1xf32>
    %77 = vector.broadcast %76 : vector<8x1xf32> to vector<8x8xf32>
    %78 = arith.subf %74, %77 : vector<8x8xf32>
    %79 = math.exp %78 : vector<8x8xf32>
    %cst_28 = arith.constant dense<0.000000e+00> : vector<8xf32>
    %80 = vector.multi_reduction <add>, %79, %cst_28 [1] : vector<8x8xf32> to vector<8xf32>
    %81 = vector.shape_cast %80 : vector<8xf32> to vector<8x1xf32>
    %82 = arith.truncf %79 : vector<8x8xf32> to vector<8x8xbf16>
    %83 = vector.extract_strided_slice %18 {offsets = [0, 16], sizes = [8, 8], strides = [1, 1]} : vector<8x32xbf16> to vector<8x8xbf16>
    %cst_29 = arith.constant dense<0.000000e+00> : vector<8x8xf32>
    %84 = tpu.matmul %82, %83, %cst_29 {dimension_numbers = #tpu.dot_dimension_numbers<[1], [0], [0], [1], [0, 0, 1, 1], [], []>} : vector<8x8xbf16>, vector<8x8xbf16>, vector<8x8xf32> -> vector<8x8xf32>
    %85 = tpu.reciprocal %81 {approx = true} : vector<8x1xf32> -> vector<8x1xf32>
    %86 = vector.broadcast %85 : vector<8x1xf32> to vector<8x8xf32>
    %87 = arith.mulf %84, %86 : vector<8x8xf32>
    %88 = arith.truncf %87 : vector<8x8xf32> to vector<8x8xbf16>
    %89 = vector.extract_strided_slice %13 {offsets = [16, 0], sizes = [8, 32], strides = [1, 1]} : vector<32x32xbf16> to vector<8x32xbf16>
    %cst_30 = arith.constant dense<0.000000e+00> : vector<8x32xf32>
    %90 = tpu.matmul %88, %89, %cst_30 {dimension_numbers = #tpu.dot_dimension_numbers<[1], [0], [0], [1], [0, 0, 1, 1], [], []>} : vector<8x8xbf16>, vector<8x32xbf16>, vector<8x32xf32> -> vector<8x32xf32>
    %91 = arith.addf %68, %90 : vector<8x32xf32>
    %92 = vector.extract_strided_slice %16 {offsets = [0, 24], sizes = [8, 8], strides = [1, 1]} : vector<8x32xbf16> to vector<8x8xbf16>
    %93 = vector.extract_strided_slice %17 {offsets = [0, 24], sizes = [8, 8], strides = [1, 1]} : vector<8x32xbf16> to vector<8x8xbf16>
    %94 = tpu.transpose %93, [1, 0] : vector<8x8xbf16> -> vector<8x8xbf16>
    %cst_31 = arith.constant dense<0.000000e+00> : vector<8x8xf32>
    %95 = tpu.matmul %92, %94, %cst_31 {dimension_numbers = #tpu.dot_dimension_numbers<[1], [0], [0], [1], [0, 0, 1, 1], [], []>} : vector<8x8xbf16>, vector<8x8xbf16>, vector<8x8xf32> -> vector<8x8xf32>
    %cst_32 = arith.constant -1.000000e+30 : f32
    %96 = vector.broadcast %cst_32 : f32 to vector<8x8xf32>
    %97 = arith.select %21, %95, %96 : vector<8x8xi1>, vector<8x8xf32>
    %cst_33 = arith.constant dense<0xFF800000> : vector<8xf32>
    %98 = vector.multi_reduction <maximumf>, %97, %cst_33 [1] : vector<8x8xf32> to vector<8xf32>
    %99 = vector.shape_cast %98 : vector<8xf32> to vector<8x1xf32>
    %100 = vector.broadcast %99 : vector<8x1xf32> to vector<8x8xf32>
    %101 = arith.subf %97, %100 : vector<8x8xf32>
    %102 = math.exp %101 : vector<8x8xf32>
    %cst_34 = arith.constant dense<0.000000e+00> : vector<8xf32>
    %103 = vector.multi_reduction <add>, %102, %cst_34 [1] : vector<8x8xf32> to vector<8xf32>
    %104 = vector.shape_cast %103 : vector<8xf32> to vector<8x1xf32>
    %105 = arith.truncf %102 : vector<8x8xf32> to vector<8x8xbf16>
    %106 = vector.extract_strided_slice %18 {offsets = [0, 24], sizes = [8, 8], strides = [1, 1]} : vector<8x32xbf16> to vector<8x8xbf16>
    %cst_35 = arith.constant dense<0.000000e+00> : vector<8x8xf32>
    %107 = tpu.matmul %105, %106, %cst_35 {dimension_numbers = #tpu.dot_dimension_numbers<[1], [0], [0], [1], [0, 0, 1, 1], [], []>} : vector<8x8xbf16>, vector<8x8xbf16>, vector<8x8xf32> -> vector<8x8xf32>
    %108 = tpu.reciprocal %104 {approx = true} : vector<8x1xf32> -> vector<8x1xf32>
    %109 = vector.broadcast %108 : vector<8x1xf32> to vector<8x8xf32>
    %110 = arith.mulf %107, %109 : vector<8x8xf32>
    %111 = arith.truncf %110 : vector<8x8xf32> to vector<8x8xbf16>
    %112 = vector.extract_strided_slice %13 {offsets = [24, 0], sizes = [8, 32], strides = [1, 1]} : vector<32x32xbf16> to vector<8x32xbf16>
    %cst_36 = arith.constant dense<0.000000e+00> : vector<8x32xf32>
    %113 = tpu.matmul %111, %112, %cst_36 {dimension_numbers = #tpu.dot_dimension_numbers<[1], [0], [0], [1], [0, 0, 1, 1], [], []>} : vector<8x8xbf16>, vector<8x32xbf16>, vector<8x32xf32> -> vector<8x32xf32>
    %114 = arith.addf %91, %113 : vector<8x32xf32>
    %115 = arith.addf %2, %114 : vector<8x32xf32>
    %c0_37 = arith.constant 0 : index
    %c0_38 = arith.constant 0 : index
    %116 = vector.load %arg6[%c0_37, %c0_38] : memref<1x32xf32, #tpu.memory_space<vmem>>, vector<1x32xf32>
    %117 = vector.broadcast %116 : vector<1x32xf32> to vector<8x32xf32>
    %118 = arith.addf %115, %117 : vector<8x32xf32>
    %c0_39 = arith.constant 0 : index
    %c0_40 = arith.constant 0 : index
    %119 = vector.load %arg7[%c0_39, %c0_40] : memref<1x32xf32, #tpu.memory_space<vmem>>, vector<1x32xf32>
    %c0_41 = arith.constant 0 : index
    %c0_42 = arith.constant 0 : index
    %120 = vector.load %arg8[%c0_41, %c0_42] : memref<1x32xf32, #tpu.memory_space<vmem>>, vector<1x32xf32>
    %cst_43 = arith.constant dense<0.000000e+00> : vector<8xf32>
    %121 = vector.multi_reduction <add>, %118, %cst_43 [1] : vector<8x32xf32> to vector<8xf32>
    %122 = vector.shape_cast %121 : vector<8xf32> to vector<8x1xf32>
    %cst_44 = arith.constant 3.200000e+01 : f32
    %123 = vector.broadcast %cst_44 : f32 to vector<8x1xf32>
    %124 = arith.divf %122, %123 : vector<8x1xf32>
    %125 = vector.broadcast %124 : vector<8x1xf32> to vector<8x32xf32>
    %126 = arith.subf %118, %125 : vector<8x32xf32>
    %127 = arith.mulf %126, %126 : vector<8x32xf32>
    %cst_45 = arith.constant dense<0.000000e+00> : vector<8xf32>
    %128 = vector.multi_reduction <add>, %127, %cst_45 [1] : vector<8x32xf32> to vector<8xf32>
    %129 = vector.shape_cast %128 : vector<8xf32> to vector<8x1xf32>
    %cst_46 = arith.constant 3.200000e+01 : f32
    %130 = vector.broadcast %cst_46 : f32 to vector<8x1xf32>
    %131 = arith.divf %129, %130 : vector<8x1xf32>
    %132 = vector.broadcast %124 : vector<8x1xf32> to vector<8x32xf32>
    %133 = arith.subf %118, %132 : vector<8x32xf32>
    %cst_47 = arith.constant 9.99999974E-6 : f32
    %134 = vector.broadcast %cst_47 : f32 to vector<8x1xf32>
    %135 = arith.addf %131, %134 : vector<8x1xf32>
    %136 = math.rsqrt %135 : vector<8x1xf32>
    %137 = vector.broadcast %136 : vector<8x1xf32> to vector<8x32xf32>
    %138 = arith.mulf %133, %137 : vector<8x32xf32>
    %139 = vector.broadcast %119 : vector<1x32xf32> to vector<8x32xf32>
    %140 = arith.mulf %138, %139 : vector<8x32xf32>
    %141 = vector.broadcast %120 : vector<1x32xf32> to vector<8x32xf32>
    %142 = arith.addf %140, %141 : vector<8x32xf32>
    %143 = arith.truncf %142 : vector<8x32xf32> to vector<8x32xbf16>
    %c0_48 = arith.constant 0 : index
    %c0_49 = arith.constant 0 : index
    %144 = vector.load %arg9[%c0_48, %c0_49] : memref<32x32xbf16, #tpu.memory_space<vmem>>, vector<32x32xbf16>
    %cst_50 = arith.constant dense<0.000000e+00> : vector<8x32xf32>
    %145 = tpu.matmul %143, %144, %cst_50 {dimension_numbers = #tpu.dot_dimension_numbers<[1], [0], [0], [1], [0, 0, 1, 1], [], []>} : vector<8x32xbf16>, vector<32x32xbf16>, vector<8x32xf32> -> vector<8x32xf32>
    %c0_51 = arith.constant 0 : index
    %c0_52 = arith.constant 0 : index
    %146 = vector.load %arg10[%c0_51, %c0_52] : memref<1x32xf32, #tpu.memory_space<vmem>>, vector<1x32xf32>
    %147 = vector.broadcast %146 : vector<1x32xf32> to vector<8x32xf32>
    %148 = arith.addf %145, %147 : vector<8x32xf32>
    %c0_53 = arith.constant 0 : index
    %c0_54 = arith.constant 0 : index
    %149 = vector.load %arg11[%c0_53, %c0_54] : memref<32x64xbf16, #tpu.memory_space<vmem>>, vector<32x64xbf16>
    %cst_55 = arith.constant dense<0.000000e+00> : vector<8x64xf32>
    %150 = tpu.matmul %4, %149, %cst_55 {dimension_numbers = #tpu.dot_dimension_numbers<[1], [0], [0], [1], [0, 0, 1, 1], [], []>} : vector<8x32xbf16>, vector<32x64xbf16>, vector<8x64xf32> -> vector<8x64xf32>
    %c0_56 = arith.constant 0 : index
    %c0_57 = arith.constant 0 : index
    %151 = vector.load %arg12[%c0_56, %c0_57] : memref<1x64xf32, #tpu.memory_space<vmem>>, vector<1x64xf32>
    %152 = vector.broadcast %151 : vector<1x64xf32> to vector<8x64xf32>
    %153 = arith.addf %150, %152 : vector<8x64xf32>
    %154 = vector.extract_strided_slice %153 {offsets = [0, 0], sizes = [8, 32], strides = [1, 1]} : vector<8x64xf32> to vector<8x32xf32>
    %155 = vector.extract_strided_slice %153 {offsets = [0, 32], sizes = [8, 32], strides = [1, 1]} : vector<8x64xf32> to vector<8x32xf32>
    %c0_58 = arith.constant 0 : index
    %c0_59 = arith.constant 0 : index
    %156 = vector.load %arg13[%c0_58, %c0_59] : memref<32x32xbf16, #tpu.memory_space<vmem>>, vector<32x32xbf16>
    %cst_60 = arith.constant 0.353553385 : f32
    %157 = vector.broadcast %cst_60 : f32 to vector<8x32xf32>
    %158 = arith.mulf %148, %157 : vector<8x32xf32>
    %159 = arith.truncf %158 : vector<8x32xf32> to vector<8x32xbf16>
    %160 = arith.truncf %154 : vector<8x32xf32> to vector<8x32xbf16>
    %161 = arith.truncf %155 : vector<8x32xf32> to vector<8x32xbf16>
    %cst_61 = arith.constant 0.000000e+00 : f32
    %162 = vector.broadcast %cst_61 : f32 to vector<8x32xf32>
    %163 = vector.extract_strided_slice %159 {offsets = [0, 0], sizes = [8, 8], strides = [1, 1]} : vector<8x32xbf16> to vector<8x8xbf16>
    %164 = vector.extract_strided_slice %160 {offsets = [0, 0], sizes = [8, 8], strides = [1, 1]} : vector<8x32xbf16> to vector<8x8xbf16>
    %165 = tpu.transpose %164, [1, 0] : vector<8x8xbf16> -> vector<8x8xbf16>
    %cst_62 = arith.constant dense<0.000000e+00> : vector<8x8xf32>
    %166 = tpu.matmul %163, %165, %cst_62 {dimension_numbers = #tpu.dot_dimension_numbers<[1], [0], [0], [1], [0, 0, 1, 1], [], []>} : vector<8x8xbf16>, vector<8x8xbf16>, vector<8x8xf32> -> vector<8x8xf32>
    %cst_63 = arith.constant dense<0xFF800000> : vector<8xf32>
    %167 = vector.multi_reduction <maximumf>, %166, %cst_63 [1] : vector<8x8xf32> to vector<8xf32>
    %168 = vector.shape_cast %167 : vector<8xf32> to vector<8x1xf32>
    %169 = vector.broadcast %168 : vector<8x1xf32> to vector<8x8xf32>
    %170 = arith.subf %166, %169 : vector<8x8xf32>
    %171 = math.exp %170 : vector<8x8xf32>
    %cst_64 = arith.constant dense<0.000000e+00> : vector<8xf32>
    %172 = vector.multi_reduction <add>, %171, %cst_64 [1] : vector<8x8xf32> to vector<8xf32>
    %173 = vector.shape_cast %172 : vector<8xf32> to vector<8x1xf32>
    %174 = arith.truncf %171 : vector<8x8xf32> to vector<8x8xbf16>
    %175 = vector.extract_strided_slice %161 {offsets = [0, 0], sizes = [8, 8], strides = [1, 1]} : vector<8x32xbf16> to vector<8x8xbf16>
    %cst_65 = arith.constant dense<0.000000e+00> : vector<8x8xf32>
    %176 = tpu.matmul %174, %175, %cst_65 {dimension_numbers = #tpu.dot_dimension_numbers<[1], [0], [0], [1], [0, 0, 1, 1], [], []>} : vector<8x8xbf16>, vector<8x8xbf16>, vector<8x8xf32> -> vector<8x8xf32>
    %177 = tpu.reciprocal %173 {approx = true} : vector<8x1xf32> -> vector<8x1xf32>
    %178 = vector.broadcast %177 : vector<8x1xf32> to vector<8x8xf32>
    %179 = arith.mulf %176, %178 : vector<8x8xf32>
    %180 = arith.truncf %179 : vector<8x8xf32> to vector<8x8xbf16>
    %181 = vector.extract_strided_slice %156 {offsets = [0, 0], sizes = [8, 32], strides = [1, 1]} : vector<32x32xbf16> to vector<8x32xbf16>
    %cst_66 = arith.constant dense<0.000000e+00> : vector<8x32xf32>
    %182 = tpu.matmul %180, %181, %cst_66 {dimension_numbers = #tpu.dot_dimension_numbers<[1], [0], [0], [1], [0, 0, 1, 1], [], []>} : vector<8x8xbf16>, vector<8x32xbf16>, vector<8x32xf32> -> vector<8x32xf32>
    %183 = arith.addf %162, %182 : vector<8x32xf32>
    %184 = vector.extract_strided_slice %159 {offsets = [0, 8], sizes = [8, 8], strides = [1, 1]} : vector<8x32xbf16> to vector<8x8xbf16>
    %185 = vector.extract_strided_slice %160 {offsets = [0, 8], sizes = [8, 8], strides = [1, 1]} : vector<8x32xbf16> to vector<8x8xbf16>
    %186 = tpu.transpose %185, [1, 0] : vector<8x8xbf16> -> vector<8x8xbf16>
    %cst_67 = arith.constant dense<0.000000e+00> : vector<8x8xf32>
    %187 = tpu.matmul %184, %186, %cst_67 {dimension_numbers = #tpu.dot_dimension_numbers<[1], [0], [0], [1], [0, 0, 1, 1], [], []>} : vector<8x8xbf16>, vector<8x8xbf16>, vector<8x8xf32> -> vector<8x8xf32>
    %cst_68 = arith.constant dense<0xFF800000> : vector<8xf32>
    %188 = vector.multi_reduction <maximumf>, %187, %cst_68 [1] : vector<8x8xf32> to vector<8xf32>
    %189 = vector.shape_cast %188 : vector<8xf32> to vector<8x1xf32>
    %190 = vector.broadcast %189 : vector<8x1xf32> to vector<8x8xf32>
    %191 = arith.subf %187, %190 : vector<8x8xf32>
    %192 = math.exp %191 : vector<8x8xf32>
    %cst_69 = arith.constant dense<0.000000e+00> : vector<8xf32>
    %193 = vector.multi_reduction <add>, %192, %cst_69 [1] : vector<8x8xf32> to vector<8xf32>
    %194 = vector.shape_cast %193 : vector<8xf32> to vector<8x1xf32>
    %195 = arith.truncf %192 : vector<8x8xf32> to vector<8x8xbf16>
    %196 = vector.extract_strided_slice %161 {offsets = [0, 8], sizes = [8, 8], strides = [1, 1]} : vector<8x32xbf16> to vector<8x8xbf16>
    %cst_70 = arith.constant dense<0.000000e+00> : vector<8x8xf32>
    %197 = tpu.matmul %195, %196, %cst_70 {dimension_numbers = #tpu.dot_dimension_numbers<[1], [0], [0], [1], [0, 0, 1, 1], [], []>} : vector<8x8xbf16>, vector<8x8xbf16>, vector<8x8xf32> -> vector<8x8xf32>
    %198 = tpu.reciprocal %194 {approx = true} : vector<8x1xf32> -> vector<8x1xf32>
    %199 = vector.broadcast %198 : vector<8x1xf32> to vector<8x8xf32>
    %200 = arith.mulf %197, %199 : vector<8x8xf32>
    %201 = arith.truncf %200 : vector<8x8xf32> to vector<8x8xbf16>
    %202 = vector.extract_strided_slice %156 {offsets = [8, 0], sizes = [8, 32], strides = [1, 1]} : vector<32x32xbf16> to vector<8x32xbf16>
    %cst_71 = arith.constant dense<0.000000e+00> : vector<8x32xf32>
    %203 = tpu.matmul %201, %202, %cst_71 {dimension_numbers = #tpu.dot_dimension_numbers<[1], [0], [0], [1], [0, 0, 1, 1], [], []>} : vector<8x8xbf16>, vector<8x32xbf16>, vector<8x32xf32> -> vector<8x32xf32>
    %204 = arith.addf %183, %203 : vector<8x32xf32>
    %205 = vector.extract_strided_slice %159 {offsets = [0, 16], sizes = [8, 8], strides = [1, 1]} : vector<8x32xbf16> to vector<8x8xbf16>
    %206 = vector.extract_strided_slice %160 {offsets = [0, 16], sizes = [8, 8], strides = [1, 1]} : vector<8x32xbf16> to vector<8x8xbf16>
    %207 = tpu.transpose %206, [1, 0] : vector<8x8xbf16> -> vector<8x8xbf16>
    %cst_72 = arith.constant dense<0.000000e+00> : vector<8x8xf32>
    %208 = tpu.matmul %205, %207, %cst_72 {dimension_numbers = #tpu.dot_dimension_numbers<[1], [0], [0], [1], [0, 0, 1, 1], [], []>} : vector<8x8xbf16>, vector<8x8xbf16>, vector<8x8xf32> -> vector<8x8xf32>
    %cst_73 = arith.constant dense<0xFF800000> : vector<8xf32>
    %209 = vector.multi_reduction <maximumf>, %208, %cst_73 [1] : vector<8x8xf32> to vector<8xf32>
    %210 = vector.shape_cast %209 : vector<8xf32> to vector<8x1xf32>
    %211 = vector.broadcast %210 : vector<8x1xf32> to vector<8x8xf32>
    %212 = arith.subf %208, %211 : vector<8x8xf32>
    %213 = math.exp %212 : vector<8x8xf32>
    %cst_74 = arith.constant dense<0.000000e+00> : vector<8xf32>
    %214 = vector.multi_reduction <add>, %213, %cst_74 [1] : vector<8x8xf32> to vector<8xf32>
    %215 = vector.shape_cast %214 : vector<8xf32> to vector<8x1xf32>
    %216 = arith.truncf %213 : vector<8x8xf32> to vector<8x8xbf16>
    %217 = vector.extract_strided_slice %161 {offsets = [0, 16], sizes = [8, 8], strides = [1, 1]} : vector<8x32xbf16> to vector<8x8xbf16>
    %cst_75 = arith.constant dense<0.000000e+00> : vector<8x8xf32>
    %218 = tpu.matmul %216, %217, %cst_75 {dimension_numbers = #tpu.dot_dimension_numbers<[1], [0], [0], [1], [0, 0, 1, 1], [], []>} : vector<8x8xbf16>, vector<8x8xbf16>, vector<8x8xf32> -> vector<8x8xf32>
    %219 = tpu.reciprocal %215 {approx = true} : vector<8x1xf32> -> vector<8x1xf32>
    %220 = vector.broadcast %219 : vector<8x1xf32> to vector<8x8xf32>
    %221 = arith.mulf %218, %220 : vector<8x8xf32>
    %222 = arith.truncf %221 : vector<8x8xf32> to vector<8x8xbf16>
    %223 = vector.extract_strided_slice %156 {offsets = [16, 0], sizes = [8, 32], strides = [1, 1]} : vector<32x32xbf16> to vector<8x32xbf16>
    %cst_76 = arith.constant dense<0.000000e+00> : vector<8x32xf32>
    %224 = tpu.matmul %222, %223, %cst_76 {dimension_numbers = #tpu.dot_dimension_numbers<[1], [0], [0], [1], [0, 0, 1, 1], [], []>} : vector<8x8xbf16>, vector<8x32xbf16>, vector<8x32xf32> -> vector<8x32xf32>
    %225 = arith.addf %204, %224 : vector<8x32xf32>
    %226 = vector.extract_strided_slice %159 {offsets = [0, 24], sizes = [8, 8], strides = [1, 1]} : vector<8x32xbf16> to vector<8x8xbf16>
    %227 = vector.extract_strided_slice %160 {offsets = [0, 24], sizes = [8, 8], strides = [1, 1]} : vector<8x32xbf16> to vector<8x8xbf16>
    %228 = tpu.transpose %227, [1, 0] : vector<8x8xbf16> -> vector<8x8xbf16>
    %cst_77 = arith.constant dense<0.000000e+00> : vector<8x8xf32>
    %229 = tpu.matmul %226, %228, %cst_77 {dimension_numbers = #tpu.dot_dimension_numbers<[1], [0], [0], [1], [0, 0, 1, 1], [], []>} : vector<8x8xbf16>, vector<8x8xbf16>, vector<8x8xf32> -> vector<8x8xf32>
    %cst_78 = arith.constant dense<0xFF800000> : vector<8xf32>
    %230 = vector.multi_reduction <maximumf>, %229, %cst_78 [1] : vector<8x8xf32> to vector<8xf32>
    %231 = vector.shape_cast %230 : vector<8xf32> to vector<8x1xf32>
    %232 = vector.broadcast %231 : vector<8x1xf32> to vector<8x8xf32>
    %233 = arith.subf %229, %232 : vector<8x8xf32>
    %234 = math.exp %233 : vector<8x8xf32>
    %cst_79 = arith.constant dense<0.000000e+00> : vector<8xf32>
    %235 = vector.multi_reduction <add>, %234, %cst_79 [1] : vector<8x8xf32> to vector<8xf32>
    %236 = vector.shape_cast %235 : vector<8xf32> to vector<8x1xf32>
    %237 = arith.truncf %234 : vector<8x8xf32> to vector<8x8xbf16>
    %238 = vector.extract_strided_slice %161 {offsets = [0, 24], sizes = [8, 8], strides = [1, 1]} : vector<8x32xbf16> to vector<8x8xbf16>
    %cst_80 = arith.constant dense<0.000000e+00> : vector<8x8xf32>
    %239 = tpu.matmul %237, %238, %cst_80 {dimension_numbers = #tpu.dot_dimension_numbers<[1], [0], [0], [1], [0, 0, 1, 1], [], []>} : vector<8x8xbf16>, vector<8x8xbf16>, vector<8x8xf32> -> vector<8x8xf32>
    %240 = tpu.reciprocal %236 {approx = true} : vector<8x1xf32> -> vector<8x1xf32>
    %241 = vector.broadcast %240 : vector<8x1xf32> to vector<8x8xf32>
    %242 = arith.mulf %239, %241 : vector<8x8xf32>
    %243 = arith.truncf %242 : vector<8x8xf32> to vector<8x8xbf16>
    %244 = vector.extract_strided_slice %156 {offsets = [24, 0], sizes = [8, 32], strides = [1, 1]} : vector<32x32xbf16> to vector<8x32xbf16>
    %cst_81 = arith.constant dense<0.000000e+00> : vector<8x32xf32>
    %245 = tpu.matmul %243, %244, %cst_81 {dimension_numbers = #tpu.dot_dimension_numbers<[1], [0], [0], [1], [0, 0, 1, 1], [], []>} : vector<8x8xbf16>, vector<8x32xbf16>, vector<8x32xf32> -> vector<8x32xf32>
    %246 = arith.addf %225, %245 : vector<8x32xf32>
    %247 = arith.addf %142, %246 : vector<8x32xf32>
    %c0_82 = arith.constant 0 : index
    %c0_83 = arith.constant 0 : index
    %248 = vector.load %arg14[%c0_82, %c0_83] : memref<1x32xf32, #tpu.memory_space<vmem>>, vector<1x32xf32>
    %249 = vector.broadcast %248 : vector<1x32xf32> to vector<8x32xf32>
    %250 = arith.addf %247, %249 : vector<8x32xf32>
    %c0_84 = arith.constant 0 : index
    %c0_85 = arith.constant 0 : index
    %251 = vector.load %arg15[%c0_84, %c0_85] : memref<1x32xf32, #tpu.memory_space<vmem>>, vector<1x32xf32>
    %c0_86 = arith.constant 0 : index
    %c0_87 = arith.constant 0 : index
    %252 = vector.load %arg16[%c0_86, %c0_87] : memref<1x32xf32, #tpu.memory_space<vmem>>, vector<1x32xf32>
    %cst_88 = arith.constant dense<0.000000e+00> : vector<8xf32>
    %253 = vector.multi_reduction <add>, %250, %cst_88 [1] : vector<8x32xf32> to vector<8xf32>
    %254 = vector.shape_cast %253 : vector<8xf32> to vector<8x1xf32>
    %cst_89 = arith.constant 3.200000e+01 : f32
    %255 = vector.broadcast %cst_89 : f32 to vector<8x1xf32>
    %256 = arith.divf %254, %255 : vector<8x1xf32>
    %257 = vector.broadcast %256 : vector<8x1xf32> to vector<8x32xf32>
    %258 = arith.subf %250, %257 : vector<8x32xf32>
    %259 = arith.mulf %258, %258 : vector<8x32xf32>
    %cst_90 = arith.constant dense<0.000000e+00> : vector<8xf32>
    %260 = vector.multi_reduction <add>, %259, %cst_90 [1] : vector<8x32xf32> to vector<8xf32>
    %261 = vector.shape_cast %260 : vector<8xf32> to vector<8x1xf32>
    %cst_91 = arith.constant 3.200000e+01 : f32
    %262 = vector.broadcast %cst_91 : f32 to vector<8x1xf32>
    %263 = arith.divf %261, %262 : vector<8x1xf32>
    %264 = vector.broadcast %256 : vector<8x1xf32> to vector<8x32xf32>
    %265 = arith.subf %250, %264 : vector<8x32xf32>
    %cst_92 = arith.constant 9.99999974E-6 : f32
    %266 = vector.broadcast %cst_92 : f32 to vector<8x1xf32>
    %267 = arith.addf %263, %266 : vector<8x1xf32>
    %268 = math.rsqrt %267 : vector<8x1xf32>
    %269 = vector.broadcast %268 : vector<8x1xf32> to vector<8x32xf32>
    %270 = arith.mulf %265, %269 : vector<8x32xf32>
    %271 = vector.broadcast %251 : vector<1x32xf32> to vector<8x32xf32>
    %272 = arith.mulf %270, %271 : vector<8x32xf32>
    %273 = vector.broadcast %252 : vector<1x32xf32> to vector<8x32xf32>
    %274 = arith.addf %272, %273 : vector<8x32xf32>
    %275 = arith.truncf %274 : vector<8x32xf32> to vector<8x32xbf16>
    %c0_93 = arith.constant 0 : index
    %c0_94 = arith.constant 0 : index
    %276 = vector.load %arg17[%c0_93, %c0_94] : memref<32x2048xbf16, #tpu.memory_space<vmem>>, vector<32x2048xbf16>
    %cst_95 = arith.constant dense<0.000000e+00> : vector<8x2048xf32>
    %277 = tpu.matmul %275, %276, %cst_95 {dimension_numbers = #tpu.dot_dimension_numbers<[1], [0], [0], [1], [0, 0, 1, 1], [], []>} : vector<8x32xbf16>, vector<32x2048xbf16>, vector<8x2048xf32> -> vector<8x2048xf32>
    %c0_96 = arith.constant 0 : index
    %c0_97 = arith.constant 0 : index
    %278 = vector.load %arg18[%c0_96, %c0_97] : memref<1x2048xf32, #tpu.memory_space<vmem>>, vector<1x2048xf32>
    %279 = vector.broadcast %278 : vector<1x2048xf32> to vector<8x2048xf32>
    %280 = arith.addf %277, %279 : vector<8x2048xf32>
    %cst_98 = arith.constant 0.000000e+00 : f32
    %281 = vector.broadcast %cst_98 : f32 to vector<8x2048xf32>
    %282 = arith.maximumf %280, %281 : vector<8x2048xf32>
    %283 = arith.truncf %282 : vector<8x2048xf32> to vector<8x2048xbf16>
    %c0_99 = arith.constant 0 : index
    %c0_100 = arith.constant 0 : index
    %284 = vector.load %arg19[%c0_99, %c0_100] : memref<2048x32xbf16, #tpu.memory_space<vmem>>, vector<2048x32xbf16>
    %cst_101 = arith.constant dense<0.000000e+00> : vector<8x32xf32>
    %285 = tpu.matmul %283, %284, %cst_101 {dimension_numbers = #tpu.dot_dimension_numbers<[1], [0], [0], [1], [0, 0, 1, 1], [], []>} : vector<8x2048xbf16>, vector<2048x32xbf16>, vector<8x32xf32> -> vector<8x32xf32>
    %c0_102 = arith.constant 0 : index
    %c0_103 = arith.constant 0 : index
    %286 = vector.load %arg20[%c0_102, %c0_103] : memref<1x32xf32, #tpu.memory_space<vmem>>, vector<1x32xf32>
    %287 = vector.broadcast %286 : vector<1x32xf32> to vector<8x32xf32>
    %288 = arith.addf %285, %287 : vector<8x32xf32>
    %289 = arith.addf %274, %288 : vector<8x32xf32>
    %c0_104 = arith.constant 0 : index
    %c0_105 = arith.constant 0 : index
    %290 = vector.load %arg21[%c0_104, %c0_105] : memref<1x32xf32, #tpu.memory_space<vmem>>, vector<1x32xf32>
    %c0_106 = arith.constant 0 : index
    %c0_107 = arith.constant 0 : index
    %291 = vector.load %arg22[%c0_106, %c0_107] : memref<1x32xf32, #tpu.memory_space<vmem>>, vector<1x32xf32>
    %cst_108 = arith.constant dense<0.000000e+00> : vector<8xf32>
    %292 = vector.multi_reduction <add>, %289, %cst_108 [1] : vector<8x32xf32> to vector<8xf32>
    %293 = vector.shape_cast %292 : vector<8xf32> to vector<8x1xf32>
    %cst_109 = arith.constant 3.200000e+01 : f32
    %294 = vector.broadcast %cst_109 : f32 to vector<8x1xf32>
    %295 = arith.divf %293, %294 : vector<8x1xf32>
    %296 = vector.broadcast %295 : vector<8x1xf32> to vector<8x32xf32>
    %297 = arith.subf %289, %296 : vector<8x32xf32>
    %298 = arith.mulf %297, %297 : vector<8x32xf32>
    %cst_110 = arith.constant dense<0.000000e+00> : vector<8xf32>
    %299 = vector.multi_reduction <add>, %298, %cst_110 [1] : vector<8x32xf32> to vector<8xf32>
    %300 = vector.shape_cast %299 : vector<8xf32> to vector<8x1xf32>
    %cst_111 = arith.constant 3.200000e+01 : f32
    %301 = vector.broadcast %cst_111 : f32 to vector<8x1xf32>
    %302 = arith.divf %300, %301 : vector<8x1xf32>
    %303 = vector.broadcast %295 : vector<8x1xf32> to vector<8x32xf32>
    %304 = arith.subf %289, %303 : vector<8x32xf32>
    %cst_112 = arith.constant 9.99999974E-6 : f32
    %305 = vector.broadcast %cst_112 : f32 to vector<8x1xf32>
    %306 = arith.addf %302, %305 : vector<8x1xf32>
    %307 = math.rsqrt %306 : vector<8x1xf32>
    %308 = vector.broadcast %307 : vector<8x1xf32> to vector<8x32xf32>
    %309 = arith.mulf %304, %308 : vector<8x32xf32>
    %310 = vector.broadcast %290 : vector<1x32xf32> to vector<8x32xf32>
    %311 = arith.mulf %309, %310 : vector<8x32xf32>
    %312 = vector.broadcast %291 : vector<1x32xf32> to vector<8x32xf32>
    %313 = arith.addf %311, %312 : vector<8x32xf32>
    %314 = arith.truncf %313 : vector<8x32xf32> to vector<8x32xbf16>
    %c0_113 = arith.constant 0 : index
    %c0_114 = arith.constant 0 : index
    %c0_115 = arith.constant 0 : index
    %315 = vector.load %arg23[%c0_113, %c0_114, %c0_115] : memref<1x8x32xbf16, #tpu.memory_space<vmem>>, vector<1x8x32xbf16>
    %316 = vector.shape_cast %315 : vector<1x8x32xbf16> to vector<8x32xbf16>
    %317 = vector.shape_cast %314 : vector<8x32xbf16> to vector<1x8x32xbf16>
    tpu.vector_store %arg23[%c0_113, %c0_114, %c0_115], %317 {strides = array<i32>} : memref<1x8x32xbf16, #tpu.memory_space<vmem>>, vector<1x8x32xbf16>,
    return
  }
  func.func @transform_0(%arg0: i32) -> (i32, i32, i32) {
    %c0_i32 = arith.constant 0 : i32
    %c0_i32_0 = arith.constant 0 : i32
    %c0_i32_1 = arith.constant 0 : i32
    return %arg0, %c0_i32, %c0_i32_0 : i32, i32, i32
  }
  func.func @transform_1(%arg0: i32) -> (i32, i32, i32) {
    %c0_i32 = arith.constant 0 : i32
    %c0_i32_0 = arith.constant 0 : i32
    %c0_i32_1 = arith.constant 0 : i32
    return %arg0, %c0_i32, %c0_i32_0 : i32, i32, i32
  }
  func.func @transform_2(%arg0: i32) -> (i32, i32) {
    %c0_i32 = arith.constant 0 : i32
    %c0_i32_0 = arith.constant 0 : i32
    %c0_i32_1 = arith.constant 0 : i32
    return %c0_i32, %c0_i32_0 : i32, i32
  }
  func.func @transform_3(%arg0: i32) -> (i32, i32) {
    %c0_i32 = arith.constant 0 : i32
    %c0_i32_0 = arith.constant 0 : i32
    %c0_i32_1 = arith.constant 0 : i32
    return %c0_i32, %c0_i32_0 : i32, i32
  }
  func.func @transform_4(%arg0: i32) -> (i32, i32) {
    %c0_i32 = arith.constant 0 : i32
    %c0_i32_0 = arith.constant 0 : i32
    %c0_i32_1 = arith.constant 0 : i32
    return %c0_i32, %c0_i32_0 : i32, i32
  }
  func.func @transform_5(%arg0: i32) -> (i32, i32) {
    %c0_i32 = arith.constant 0 : i32
    %c0_i32_0 = arith.constant 0 : i32
    %c0_i32_1 = arith.constant 0 : i32
    return %c0_i32, %c0_i32_0 : i32, i32
  }
  func.func @transform_6(%arg0: i32) -> (i32, i32) {
    %c0_i32 = arith.constant 0 : i32
    %c0_i32_0 = arith.constant 0 : i32
    %c0_i32_1 = arith.constant 0 : i32
    return %c0_i32, %c0_i32_0 : i32, i32
  }
  func.func @transform_7(%arg0: i32) -> (i32, i32) {
    %c0_i32 = arith.constant 0 : i32
    %c0_i32_0 = arith.constant 0 : i32
    %c0_i32_1 = arith.constant 0 : i32
    return %c0_i32, %c0_i32_0 : i32, i32
  }
  func.func @transform_8(%arg0: i32) -> (i32, i32) {
    %c0_i32 = arith.constant 0 : i32
    %c0_i32_0 = arith.constant 0 : i32
    %c0_i32_1 = arith.constant 0 : i32
    return %c0_i32, %c0_i32_0 : i32, i32
  }
  func.func @transform_9(%arg0: i32) -> (i32, i32) {
    %c0_i32 = arith.constant 0 : i32
    %c0_i32_0 = arith.constant 0 : i32
    %c0_i32_1 = arith.constant 0 : i32
    return %c0_i32, %c0_i32_0 : i32, i32
  }
  func.func @transform_10(%arg0: i32) -> (i32, i32) {
    %c0_i32 = arith.constant 0 : i32
    %c0_i32_0 = arith.constant 0 : i32
    %c0_i32_1 = arith.constant 0 : i32
    return %c0_i32, %c0_i32_0 : i32, i32
  }
  func.func @transform_11(%arg0: i32) -> (i32, i32) {
    %c0_i32 = arith.constant 0 : i32
    %c0_i32_0 = arith.constant 0 : i32
    %c0_i32_1 = arith.constant 0 : i32
    return %c0_i32, %c0_i32_0 : i32, i32
  }
  func.func @transform_12(%arg0: i32) -> (i32, i32) {
    %c0_i32 = arith.constant 0 : i32
    %c0_i32_0 = arith.constant 0 : i32
    %c0_i32_1 = arith.constant 0 : i32
    return %c0_i32, %c0_i32_0 : i32, i32
  }
  func.func @transform_13(%arg0: i32) -> (i32, i32) {
    %c0_i32 = arith.constant 0 : i32
    %c0_i32_0 = arith.constant 0 : i32
    %c0_i32_1 = arith.constant 0 : i32
    return %c0_i32, %c0_i32_0 : i32, i32
  }
  func.func @transform_14(%arg0: i32) -> (i32, i32) {
    %c0_i32 = arith.constant 0 : i32
    %c0_i32_0 = arith.constant 0 : i32
    %c0_i32_1 = arith.constant 0 : i32
    return %c0_i32, %c0_i32_0 : i32, i32
  }
  func.func @transform_15(%arg0: i32) -> (i32, i32) {
    %c0_i32 = arith.constant 0 : i32
    %c0_i32_0 = arith.constant 0 : i32
    %c0_i32_1 = arith.constant 0 : i32
    return %c0_i32, %c0_i32_0 : i32, i32
  }
  func.func @transform_16(%arg0: i32) -> (i32, i32) {
    %c0_i32 = arith.constant 0 : i32
    %c0_i32_0 = arith.constant 0 : i32
    %c0_i32_1 = arith.constant 0 : i32
    return %c0_i32, %c0_i32_0 : i32, i32
  }
  func.func @transform_17(%arg0: i32) -> (i32, i32) {
    %c0_i32 = arith.constant 0 : i32
    %c0_i32_0 = arith.constant 0 : i32
    %c0_i32_1 = arith.constant 0 : i32
    return %c0_i32, %c0_i32_0 : i32, i32
  }
  func.func @transform_18(%arg0: i32) -> (i32, i32) {
    %c0_i32 = arith.constant 0 : i32
    %c0_i32_0 = arith.constant 0 : i32
    %c0_i32_1 = arith.constant 0 : i32
    return %c0_i32, %c0_i32_0 : i32, i32
  }
  func.func @transform_19(%arg0: i32) -> (i32, i32) {
    %c0_i32 = arith.constant 0 : i32
    %c0_i32_0 = arith.constant 0 : i32
    %c0_i32_1 = arith.constant 0 : i32
    return %c0_i32, %c0_i32_0 : i32, i32
  }
  func.func @transform_20(%arg0: i32) -> (i32, i32) {
    %c0_i32 = arith.constant 0 : i32
    %c0_i32_0 = arith.constant 0 : i32
    %c0_i32_1 = arith.constant 0 : i32
    return %c0_i32, %c0_i32_0 : i32, i32
  }
  func.func @transform_21(%arg0: i32) -> (i32, i32) {
    %c0_i32 = arith.constant 0 : i32
    %c0_i32_0 = arith.constant 0 : i32
    %c0_i32_1 = arith.constant 0 : i32
    return %c0_i32, %c0_i32_0 : i32, i32
  }
  func.func @transform_22(%arg0: i32) -> (i32, i32, i32) {
    %c0_i32 = arith.constant 0 : i32
    %c0_i32_0 = arith.constant 0 : i32
    %c0_i32_1 = arith.constant 0 : i32
    return %arg0, %c0_i32, %c0_i32_0 : i32, i32, i32
  }
}

</mosaic_0001>

<llo_original>
// kernel: causal_transformer_forward.5
$region0: #{causal_transformer_forward.5}
  #allocation0 [shape = 'u32[]', space=smem, size = 0x4, offset = 0x4, fixed_abs, tag = 'smem constant byte address 0x4 - core index']
  #allocation1 [shape = 'u32[72,128]{1,0:T(1,128)}', space=vmem, size = 0x9000, scoped, tag = 'internal scratch']
  %s0 = inlined_call_operand.vmem [shape: bf16[16,32], index: 0, kind: input, shape index: {}]
  %s1 = inlined_call_operand.vmem [shape: bf16[32,128], index: 1, kind: input, shape index: {}]
  %s2 = inlined_call_operand.vmem [shape: f32[1,128], index: 2, kind: input, shape index: {}]
  %s3 = inlined_call_operand.hbm [shape: f32[16,128], index: 3, kind: output, shape index: {}]
  %s4 = sld [smem:[#allocation0]]
  $region22: #{causal_transformer_forward.5} parent=0
    _
  %s6 = ssub.s32 1, %s4
  %s7 = scalar_select 0, %s6, %s4
  $region1: #{causal_transformer_forward.5} parent=0
    #allocation2 [shape = 'u8[8192]{0}', space=vmem, size = 0x2000, scoped, tag = 'output window, operand 0, single buffered']
    #allocation3 [shape = 's32[1]{0}', space=sflag, size = 0x4, scoped, tag = 'scoped memory for causal_transformer_forward.5']
    %8 = vsyncpa [#allocation3], 0
    // Predicated region
    $region2: #{causal_transformer_forward.5} parent=1 // pred_check
      _
    $region3: #{causal_transformer_forward.5} parent=1 // pred_check_branch
      %10 = sbr.rel (0) target = $region5
    $region4: #{causal_transformer_forward.5} parent=1 // pred_region
      _
    $region5: #{causal_transformer_forward.5} parent=1 // pred_fallthru
      _
    // Predicated region
    $region6: #{causal_transformer_forward.5} parent=1 // pred_check
      _
    $region7: #{causal_transformer_forward.5} parent=1 // pred_check_branch
      %12 = sbr.rel (0) target = $region9
    $region8: #{causal_transformer_forward.5} parent=1 // pred_region
      _
    $region9: #{causal_transformer_forward.5} parent=1 // pred_fallthru
      _
    // Predicated region
    $region10: #{causal_transformer_forward.5} parent=1 // pred_check
      _
    $region11: #{causal_transformer_forward.5} parent=1 // pred_check_branch
      %14 = sbr.rel (0) target = $region13
    $region12: #{causal_transformer_forward.5} parent=1 // pred_region
      _
    $region13: #{causal_transformer_forward.5} parent=1 // pred_fallthru
      _
    %v16 = vld [vmem:[%s0] sm:$0xf]
    %v17 = vld [vmem:[%s0 + $0x4] sm:$0xf]
    %v18 = vld [vmem:[%s1] sm:$0xf]
    %v19 = vld [vmem:[%s1 + $0x4] sm:$0xf]
    %v20 = vld [vmem:[%s1 + $0x8] sm:$0xf]
    %v21 = vld [vmem:[%s1 + $0xc] sm:$0xf]
    %v22 = vld [vmem:[%s2] sm:$0x1]
    %v24 = vperm.slane %v22, 0
    %v28 = vunpack.c.l.b16 %v16
    %v29 = vunpack.c.l.b16 %v17
    %v30 = vpack.c.b16 %v29, %v28
    %v35 = vunpack.c.l.b16 %v18
    %v36 = vunpack.c.l.b16 %v19
    %v37 = vunpack.c.l.b16 %v20
    %v38 = vunpack.c.l.b16 %v21
    %v39 = vpack.c.b16 %v36, %v35
    %v40 = vpack.c.b16 %v38, %v37
    %vm43 = vcmask 261120
    %v45 = vsel %vm43, %v30, 0
    %47 = vmatpush.bf16.msra.mxu0 0
    %48 = vmatpush.bf16.msra.mxu0 0
    %49 = vmatpush.bf16.msra.mxu0 0
    %50 = vmatpush.bf16.msra.mxu0 0
    %51 = vmatpush.bf16.msra.mxu0 0
    %52 = vmatpush.bf16.msra.mxu0 0
    %53 = vmatpush.bf16.msra.mxu0 %v40
    %54 = vmatpush.bf16.msra.mxu0 %v39
    %55 = vmatmul.bf16.gmra.mxu0 %v45
    %v56 = vpop.f32.mrf.mxu0
    %v57 = vadd.f32 %v24, %v56
    %v58 = vpop.f32.mrf.mxu0
    %v59 = vadd.f32 %v24, %v58
    %60 = vdwg.mxu0
    %61 = vst [vmem:[#allocation2] sm:$0xff] %v57
    %62 = vst [vmem:[#allocation2 + $0x8] sm:$0xff] %v59
    // Predicated region
    $region14: #{causal_transformer_forward.5} parent=1 // pred_check
      _
    $region15: #{causal_transformer_forward.5} parent=1 // pred_check_branch
      %64 = sbr.rel (0) target = $region17
    $region16: #{causal_transformer_forward.5} parent=1 // pred_region
      %66 = vsyncadd [#allocation3], 0
      %s67 = sshll.u32 [#allocation2], 4
      %s68 = int_to_ptr.vmem [resolvable:$true] %s67
      %s69 = sshll.u32 %s3, 4
      %s70 = int_to_ptr.hbm [resolvable:$true] %s69
      %75 = dma.vmem_to_hbm [thread:$0]  %s68, 256, %s70, [#allocation3], 128, 128, 8
    $region17: #{causal_transformer_forward.5} parent=1 // pred_fallthru
      _
    // Predicated region
    $region18: #{causal_transformer_forward.5} parent=1 // pred_check
      _
    $region19: #{causal_transformer_forward.5} parent=1 // pred_check_branch
      %77 = sbr.rel (0) target = $region21
    $region20: #{causal_transformer_forward.5} parent=1 // pred_region
      %79 = dma.done [#allocation3], 256
    $region21: #{causal_transformer_forward.5} parent=1 // pred_fallthru
      _
    %80 = vsyncpa [#allocation3], 1

// kernel: causal_transformer_forward.3
$region0: #{causal_transformer_forward.3}
  #allocation0 [shape = 'u32[]', space=smem, size = 0x4, offset = 0x4, fixed_abs, tag = 'smem constant byte address 0x4 - core index']
  #allocation1 [shape = 'u32[72,128]{1,0:T(1,128)}', space=vmem, size = 0x9000, scoped, tag = 'internal scratch']
  %s0 = inlined_call_operand.vmem [shape: bf16[2,8,32], index: 0, kind: input, shape index: {}, may-alias: {0,1}]
  %s1 = inlined_call_operand.vmem [shape: bf16[2,8,32], index: 1, kind: input, shape index: {}, may-alias: {0,1}]
  %s2 = inlined_call_operand.vmem [shape: bf16[32,96], index: 2, kind: input, shape index: {}]
  %s3 = inlined_call_operand.vmem [shape: f32[1,96], index: 3, kind: input, shape index: {}]
  %s4 = inlined_call_operand.vmem [shape: bf16[32,32], index: 4, kind: input, shape index: {}]
  %s5 = inlined_call_operand.vmem [shape: f32[1,32], index: 5, kind: input, shape index: {}]
  %s6 = inlined_call_operand.vmem [shape: f32[1,32], index: 6, kind: input, shape index: {}]
  %s7 = inlined_call_operand.vmem [shape: f32[1,32], index: 7, kind: input, shape index: {}]
  %s8 = inlined_call_operand.vmem [shape: bf16[32,32], index: 8, kind: input, shape index: {}]
  %s9 = inlined_call_operand.vmem [shape: f32[1,32], index: 9, kind: input, shape index: {}]
  %s10 = inlined_call_operand.vmem [shape: bf16[32,64], index: 10, kind: input, shape index: {}]
  %s11 = inlined_call_operand.vmem [shape: f32[1,64], index: 11, kind: input, shape index: {}]
  %s12 = inlined_call_operand.vmem [shape: bf16[32,32], index: 12, kind: input, shape index: {}]
  %s13 = inlined_call_operand.vmem [shape: f32[1,32], index: 13, kind: input, shape index: {}]
  %s14 = inlined_call_operand.vmem [shape: f32[1,32], index: 14, kind: input, shape index: {}]
  %s15 = inlined_call_operand.vmem [shape: f32[1,32], index: 15, kind: input, shape index: {}]
  %s16 = inlined_call_operand.vmem [shape: bf16[32,2048], index: 16, kind: input, shape index: {}]
  %s17 = inlined_call_operand.vmem [shape: f32[1,2048], index: 17, kind: input, shape index: {}]
  %s18 = inlined_call_operand.vmem [shape: bf16[2048,32], index: 18, kind: input, shape index: {}]
  %s19 = inlined_call_operand.vmem [shape: f32[1,32], index: 19, kind: input, shape index: {}]
  %s20 = inlined_call_operand.vmem [shape: f32[1,32], index: 20, kind: input, shape index: {}]
  %s21 = inlined_call_operand.vmem [shape: f32[1,32], index: 21, kind: input, shape index: {}]
  %s22 = inlined_call_operand.vmem [shape: bf16[2,8,32], index: 22, kind: output, shape index: {}]
  %s23 = sld [smem:[#allocation0]]
  $region121: #{causal_transformer_forward.3} parent=0
    _
  %s25 = ssub.s32 1, %s23
  %s26 = scalar_select 0, %s25, %s23
  loop: start=0, step=1, limit=4
  $region2: #{causal_transformer_forward.3} parent=0 // loop_pre_header
    _
  $region3: #{causal_transformer_forward.3} parent=0 // loop_header
    %s28 = sphi 0, %s32
    %p29 = scmp.ge.s32.totalorder %s28, 4
    %s38 = sphi 0, %s40
    %s41 = sphi 0, %s38
    %s42 = sphi 0, %s41
    %s58 = sphi 0, %s42
    %s64 = sphi 0, %s66
    %s67 = sphi 0, %s64
    %s68 = sphi 0, %s67
    %s84 = sphi 0, %s68
    %s88 = sphi 0, %s88
    %s90 = sphi 0, %s88
    %s91 = sphi 0, %s90
    %s105 = sphi 0, %s91
    %s109 = sphi 0, %s109
    %s111 = sphi 0, %s109
    %s112 = sphi 0, %s111
    %s126 = sphi 0, %s112
    %s130 = sphi 0, %s130
    %s132 = sphi 0, %s130
    %s133 = sphi 0, %s132
    %s147 = sphi 0, %s133
    %s151 = sphi 0, %s151
    %s153 = sphi 0, %s151
    %s154 = sphi 0, %s153
    %s168 = sphi 0, %s154
    %s172 = sphi 0, %s172
    %s174 = sphi 0, %s172
    %s175 = sphi 0, %s174
    %s189 = sphi 0, %s175
    %s193 = sphi 0, %s193
    %s195 = sphi 0, %s193
    %s196 = sphi 0, %s195
    %s210 = sphi 0, %s196
    %s214 = sphi 0, %s214
    %s216 = sphi 0, %s214
    %s217 = sphi 0, %s216
    %s231 = sphi 0, %s217
    %s235 = sphi 0, %s235
    %s237 = sphi 0, %s235
    %s238 = sphi 0, %s237
    %s252 = sphi 0, %s238
    %s256 = sphi 0, %s256
    %s258 = sphi 0, %s256
    %s259 = sphi 0, %s258
    %s273 = sphi 0, %s259
    %s277 = sphi 0, %s277
    %s279 = sphi 0, %s277
    %s280 = sphi 0, %s279
    %s294 = sphi 0, %s280
    %s298 = sphi 0, %s298
    %s300 = sphi 0, %s298
    %s301 = sphi 0, %s300
    %s315 = sphi 0, %s301
    %s319 = sphi 0, %s319
    %s321 = sphi 0, %s319
    %s322 = sphi 0, %s321
    %s336 = sphi 0, %s322
    %s340 = sphi 0, %s340
    %s342 = sphi 0, %s340
    %s343 = sphi 0, %s342
    %s357 = sphi 0, %s343
    %s361 = sphi 0, %s361
    %s363 = sphi 0, %s361
    %s364 = sphi 0, %s363
    %s378 = sphi 0, %s364
    %s382 = sphi 0, %s382
    %s384 = sphi 0, %s382
    %s385 = sphi 0, %s384
    %s399 = sphi 0, %s385
    %s403 = sphi 0, %s403
    %s405 = sphi 0, %s403
    %s406 = sphi 0, %s405
    %s420 = sphi 0, %s406
    %s424 = sphi 0, %s424
    %s426 = sphi 0, %s424
    %s427 = sphi 0, %s426
    %s441 = sphi 0, %s427
    %s445 = sphi 0, %s445
    %s447 = sphi 0, %s445
    %s448 = sphi 0, %s447
    %s462 = sphi 0, %s448
    %s466 = sphi 0, %s466
    %s468 = sphi 0, %s466
    %s469 = sphi 0, %s468
    %s483 = sphi 0, %s469
    %s487 = sphi 0, %s487
    %s489 = sphi 0, %s487
    %s490 = sphi 0, %s489
    %s504 = sphi 0, %s490
    %s510 = sphi 0, %s512
    %s513 = sphi 0, %s510
    %s514 = sphi 0, %s513
    %s530 = sphi 0, %s514
  $region4: #{causal_transformer_forward.3} parent=0 // loop_header_branch
    %31 = sbr.rel (%p29) target = $region8
  $region5: #{causal_transformer_forward.3} parent=0 // loop_body
    %s33 = ssub.s32 %s28, 1
    %s34 = ssub.s32 %s28, 2
    %s35 = sadd.s32 %s28, 1
    %s36 = ssub.s32 %s28, %s35
    %p37 = scmp.eq.s32.totalorder %s36, 0
    %s39 = sadd.s32 %s38, 1
    %s40 = scalar_select %p37, %s38, %s39
    %p43 = pneg %p37
    %p44 = scmp.eq.s32.totalorder %s28, 1
    %p45 = por %p43, %p44
    %p46 = scmp.ne.s32.totalorder %s38, %s41
    %p47 = scmp.eq.s32.totalorder %s28, 0
    %p48 = por %p46, %p47
    %p49 = scmp.ne.s32.totalorder %s38, %s41
    %p50 = scmp.eq.s32.totalorder %s33, 1
    %p51 = por %p49, %p50
    %p52 = scmp.ne.s32.totalorder %s41, %s42
    %p53 = scmp.eq.s32.totalorder %s33, 0
    %p54 = por %p52, %p53
    %p55 = scmp.ne.s32.totalorder %s41, %s42
    %p56 = scmp.eq.s32.totalorder %s34, 1
    %p57 = por %p55, %p56
    %p59 = scmp.ne.s32.totalorder %s42, %s58
    %p60 = scmp.eq.s32.totalorder %s34, 0
    %p61 = por %p59, %p60
    %s62 = ssub.s32 %s28, %s35
    %p63 = scmp.eq.s32.totalorder %s62, 0
    %s65 = sadd.s32 %s64, 1
    %s66 = scalar_select %p63, %s64, %s65
    %p69 = pneg %p63
    %p70 = scmp.eq.s32.totalorder %s28, 1
    %p71 = por %p69, %p70
    %p72 = scmp.ne.s32.totalorder %s64, %s67
    %p73 = scmp.eq.s32.totalorder %s28, 0
    %p74 = por %p72, %p73
    %p75 = scmp.ne.s32.totalorder %s64, %s67
    %p76 = scmp.eq.s32.totalorder %s33, 1
    %p77 = por %p75, %p76
    %p78 = scmp.ne.s32.totalorder %s67, %s68
    %p79 = scmp.eq.s32.totalorder %s33, 0
    %p80 = por %p78, %p79
    %p81 = scmp.ne.s32.totalorder %s67, %s68
    %p82 = scmp.eq.s32.totalorder %s34, 1
    %p83 = por %p81, %p82
    %p85 = scmp.ne.s32.totalorder %s68, %s84
    %p86 = scmp.eq.s32.totalorder %s34, 0
    %p87 = por %p85, %p86
    %s89 = sadd.s32 %s88, 1
    %p92 = scmp.eq.s32.totalorder %s28, 1
    %p93 = scmp.ne.s32.totalorder %s88, %s90
    %p94 = scmp.eq.s32.totalorder %s28, 0
    %p95 = por %p93, %p94
    %p96 = scmp.ne.s32.totalorder %s88, %s90
    %p97 = scmp.eq.s32.totalorder %s33, 1
    %p98 = por %p96, %p97
    %p99 = scmp.ne.s32.totalorder %s90, %s91
    %p100 = scmp.eq.s32.totalorder %s33, 0
    %p101 = por %p99, %p100
    %p102 = scmp.ne.s32.totalorder %s90, %s91
    %p103 = scmp.eq.s32.totalorder %s34, 1
    %p104 = por %p102, %p103
    %p106 = scmp.ne.s32.totalorder %s91, %s105
    %p107 = scmp.eq.s32.totalorder %s34, 0
    %p108 = por %p106, %p107
    %s110 = sadd.s32 %s109, 1
    %p113 = scmp.eq.s32.totalorder %s28, 1
    %p114 = scmp.ne.s32.totalorder %s109, %s111
    %p115 = scmp.eq.s32.totalorder %s28, 0
    %p116 = por %p114, %p115
    %p117 = scmp.ne.s32.totalorder %s109, %s111
    %p118 = scmp.eq.s32.totalorder %s33, 1
    %p119 = por %p117, %p118
    %p120 = scmp.ne.s32.totalorder %s111, %s112
    %p121 = scmp.eq.s32.totalorder %s33, 0
    %p122 = por %p120, %p121
    %p123 = scmp.ne.s32.totalorder %s111, %s112
    %p124 = scmp.eq.s32.totalorder %s34, 1
    %p125 = por %p123, %p124
    %p127 = scmp.ne.s32.totalorder %s112, %s126
    %p128 = scmp.eq.s32.totalorder %s34, 0
    %p129 = por %p127, %p128
    %s131 = sadd.s32 %s130, 1
    %p134 = scmp.eq.s32.totalorder %s28, 1
    %p135 = scmp.ne.s32.totalorder %s130, %s132
    %p136 = scmp.eq.s32.totalorder %s28, 0
    %p137 = por %p135, %p136
    %p138 = scmp.ne.s32.totalorder %s130, %s132
    %p139 = scmp.eq.s32.totalorder %s33, 1
    %p140 = por %p138, %p139
    %p141 = scmp.ne.s32.totalorder %s132, %s133
    %p142 = scmp.eq.s32.totalorder %s33, 0
    %p143 = por %p141, %p142
    %p144 = scmp.ne.s32.totalorder %s132, %s133
    %p145 = scmp.eq.s32.totalorder %s34, 1
    %p146 = por %p144, %p145
    %p148 = scmp.ne.s32.totalorder %s133, %s147
    %p149 = scmp.eq.s32.totalorder %s34, 0
    %p150 = por %p148, %p149
    %s152 = sadd.s32 %s151, 1
    %p155 = scmp.eq.s32.totalorder %s28, 1
    %p156 = scmp.ne.s32.totalorder %s151, %s153
    %p157 = scmp.eq.s32.totalorder %s28, 0
    %p158 = por %p156, %p157
    %p159 = scmp.ne.s32.totalorder %s151, %s153
    %p160 = scmp.eq.s32.totalorder %s33, 1
    %p161 = por %p159, %p160
    %p162 = scmp.ne.s32.totalorder %s153, %s154
    %p163 = scmp.eq.s32.totalorder %s33, 0
    %p164 = por %p162, %p163
    %p165 = scmp.ne.s32.totalorder %s153, %s154
    %p166 = scmp.eq.s32.totalorder %s34, 1
    %p167 = por %p165, %p166
    %p169 = scmp.ne.s32.totalorder %s154, %s168
    %p170 = scmp.eq.s32.totalorder %s34, 0
    %p171 = por %p169, %p170
    %s173 = sadd.s32 %s172, 1
    %p176 = scmp.eq.s32.totalorder %s28, 1
    %p177 = scmp.ne.s32.totalorder %s172, %s174
    %p178 = scmp.eq.s32.totalorder %s28, 0
    %p179 = por %p177, %p178
    %p180 = scmp.ne.s32.totalorder %s172, %s174
    %p181 = scmp.eq.s32.totalorder %s33, 1
    %p182 = por %p180, %p181
    %p183 = scmp.ne.s32.totalorder %s174, %s175
    %p184 = scmp.eq.s32.totalorder %s33, 0
    %p185 = por %p183, %p184
    %p186 = scmp.ne.s32.totalorder %s174, %s175
    %p187 = scmp.eq.s32.totalorder %s34, 1
    %p188 = por %p186, %p187
    %p190 = scmp.ne.s32.totalorder %s175, %s189
    %p191 = scmp.eq.s32.totalorder %s34, 0
    %p192 = por %p190, %p191
    %s194 = sadd.s32 %s193, 1
    %p197 = scmp.eq.s32.totalorder %s28, 1
    %p198 = scmp.ne.s32.totalorder %s193, %s195
    %p199 = scmp.eq.s32.totalorder %s28, 0
    %p200 = por %p198, %p199
    %p201 = scmp.ne.s32.totalorder %s193, %s195
    %p202 = scmp.eq.s32.totalorder %s33, 1
    %p203 = por %p201, %p202
    %p204 = scmp.ne.s32.totalorder %s195, %s196
    %p205 = scmp.eq.s32.totalorder %s33, 0
    %p206 = por %p204, %p205
    %p207 = scmp.ne.s32.totalorder %s195, %s196
    %p208 = scmp.eq.s32.totalorder %s34, 1
    %p209 = por %p207, %p208
    %p211 = scmp.ne.s32.totalorder %s196, %s210
    %p212 = scmp.eq.s32.totalorder %s34, 0
    %p213 = por %p211, %p212
    %s215 = sadd.s32 %s214, 1
    %p218 = scmp.eq.s32.totalorder %s28, 1
    %p219 = scmp.ne.s32.totalorder %s214, %s216
    %p220 = scmp.eq.s32.totalorder %s28, 0
    %p221 = por %p219, %p220
    %p222 = scmp.ne.s32.totalorder %s214, %s216
    %p223 = scmp.eq.s32.totalorder %s33, 1
    %p224 = por %p222, %p223
    %p225 = scmp.ne.s32.totalorder %s216, %s217
    %p226 = scmp.eq.s32.totalorder %s33, 0
    %p227 = por %p225, %p226
    %p228 = scmp.ne.s32.totalorder %s216, %s217
    %p229 = scmp.eq.s32.totalorder %s34, 1
    %p230 = por %p228, %p229
    %p232 = scmp.ne.s32.totalorder %s217, %s231
    %p233 = scmp.eq.s32.totalorder %s34, 0
    %p234 = por %p232, %p233
    %s236 = sadd.s32 %s235, 1
    %p239 = scmp.eq.s32.totalorder %s28, 1
    %p240 = scmp.ne.s32.totalorder %s235, %s237
    %p241 = scmp.eq.s32.totalorder %s28, 0
    %p242 = por %p240, %p241
    %p243 = scmp.ne.s32.totalorder %s235, %s237
    %p244 = scmp.eq.s32.totalorder %s33, 1
    %p245 = por %p243, %p244
    %p246 = scmp.ne.s32.totalorder %s237, %s238
    %p247 = scmp.eq.s32.totalorder %s33, 0
    %p248 = por %p246, %p247
    %p249 = scmp.ne.s32.totalorder %s237, %s238
    %p250 = scmp.eq.s32.totalorder %s34, 1
    %p251 = por %p249, %p250
    %p253 = scmp.ne.s32.totalorder %s238, %s252
    %p254 = scmp.eq.s32.totalorder %s34, 0
    %p255 = por %p253, %p254
    %s257 = sadd.s32 %s256, 1
    %p260 = scmp.eq.s32.totalorder %s28, 1
    %p261 = scmp.ne.s32.totalorder %s256, %s258
    %p262 = scmp.eq.s32.totalorder %s28, 0
    %p263 = por %p261, %p262
    %p264 = scmp.ne.s32.totalorder %s256, %s258
    %p265 = scmp.eq.s32.totalorder %s33, 1
    %p266 = por %p264, %p265
    %p267 = scmp.ne.s32.totalorder %s258, %s259
    %p268 = scmp.eq.s32.totalorder %s33, 0
    %p269 = por %p267, %p268
    %p270 = scmp.ne.s32.totalorder %s258, %s259
    %p271 = scmp.eq.s32.totalorder %s34, 1
    %p272 = por %p270, %p271
    %p274 = scmp.ne.s32.totalorder %s259, %s273
    %p275 = scmp.eq.s32.totalorder %s34, 0
    %p276 = por %p274, %p275
    %s278 = sadd.s32 %s277, 1
    %p281 = scmp.eq.s32.totalorder %s28, 1
    %p282 = scmp.ne.s32.totalorder %s277, %s279
    %p283 = scmp.eq.s32.totalorder %s28, 0
    %p284 = por %p282, %p283
    %p285 = scmp.ne.s32.totalorder %s277, %s279
    %p286 = scmp.eq.s32.totalorder %s33, 1
    %p287 = por %p285, %p286
    %p288 = scmp.ne.s32.totalorder %s279, %s280
    %p289 = scmp.eq.s32.totalorder %s33, 0
    %p290 = por %p288, %p289
    %p291 = scmp.ne.s32.totalorder %s279, %s280
    %p292 = scmp.eq.s32.totalorder %s34, 1
    %p293 = por %p291, %p292
    %p295 = scmp.ne.s32.totalorder %s280, %s294
    %p296 = scmp.eq.s32.totalorder %s34, 0
    %p297 = por %p295, %p296
    %s299 = sadd.s32 %s298, 1
    %p302 = scmp.eq.s32.totalorder %s28, 1
    %p303 = scmp.ne.s32.totalorder %s298, %s300
    %p304 = scmp.eq.s32.totalorder %s28, 0
    %p305 = por %p303, %p304
    %p306 = scmp.ne.s32.totalorder %s298, %s300
    %p307 = scmp.eq.s32.totalorder %s33, 1
    %p308 = por %p306, %p307
    %p309 = scmp.ne.s32.totalorder %s300, %s301
    %p310 = scmp.eq.s32.totalorder %s33, 0
    %p311 = por %p309, %p310
    %p312 = scmp.ne.s32.totalorder %s300, %s301
    %p313 = scmp.eq.s32.totalorder %s34, 1
    %p314 = por %p312, %p313
    %p316 = scmp.ne.s32.totalorder %s301, %s315
    %p317 = scmp.eq.s32.totalorder %s34, 0
    %p318 = por %p316, %p317
    %s320 = sadd.s32 %s319, 1
    %p323 = scmp.eq.s32.totalorder %s28, 1
    %p324 = scmp.ne.s32.totalorder %s319, %s321
    %p325 = scmp.eq.s32.totalorder %s28, 0
    %p326 = por %p324, %p325
    %p327 = scmp.ne.s32.totalorder %s319, %s321
    %p328 = scmp.eq.s32.totalorder %s33, 1
    %p329 = por %p327, %p328
    %p330 = scmp.ne.s32.totalorder %s321, %s322
    %p331 = scmp.eq.s32.totalorder %s33, 0
    %p332 = por %p330, %p331
    %p333 = scmp.ne.s32.totalorder %s321, %s322
    %p334 = scmp.eq.s32.totalorder %s34, 1
    %p335 = por %p333, %p334
    %p337 = scmp.ne.s32.totalorder %s322, %s336
    %p338 = scmp.eq.s32.totalorder %s34, 0
    %p339 = por %p337, %p338
    %s341 = sadd.s32 %s340, 1
    %p344 = scmp.eq.s32.totalorder %s28, 1
    %p345 = scmp.ne.s32.totalorder %s340, %s342
    %p346 = scmp.eq.s32.totalorder %s28, 0
    %p347 = por %p345, %p346
    %p348 = scmp.ne.s32.totalorder %s340, %s342
    %p349 = scmp.eq.s32.totalorder %s33, 1
    %p350 = por %p348, %p349
    %p351 = scmp.ne.s32.totalorder %s342, %s343
    %p352 = scmp.eq.s32.totalorder %s33, 0
    %p353 = por %p351, %p352
    %p354 = scmp.ne.s32.totalorder %s342, %s343
    %p355 = scmp.eq.s32.totalorder %s34, 1
    %p356 = por %p354, %p355
    %p358 = scmp.ne.s32.totalorder %s343, %s357
    %p359 = scmp.eq.s32.totalorder %s34, 0
    %p360 = por %p358, %p359
    %s362 = sadd.s32 %s361, 1
    %p365 = scmp.eq.s32.totalorder %s28, 1
    %p366 = scmp.ne.s32.totalorder %s361, %s363
    %p367 = scmp.eq.s32.totalorder %s28, 0
    %p368 = por %p366, %p367
    %p369 = scmp.ne.s32.totalorder %s361, %s363
    %p370 = scmp.eq.s32.totalorder %s33, 1
    %p371 = por %p369, %p370
    %p372 = scmp.ne.s32.totalorder %s363, %s364
    %p373 = scmp.eq.s32.totalorder %s33, 0
    %p374 = por %p372, %p373
    %p375 = scmp.ne.s32.totalorder %s363, %s364
    %p376 = scmp.eq.s32.totalorder %s34, 1
    %p377 = por %p375, %p376
    %p379 = scmp.ne.s32.totalorder %s364, %s378
    %p380 = scmp.eq.s32.totalorder %s34, 0
    %p381 = por %p379, %p380
    %s383 = sadd.s32 %s382, 1
    %p386 = scmp.eq.s32.totalorder %s28, 1
    %p387 = scmp.ne.s32.totalorder %s382, %s384
    %p388 = scmp.eq.s32.totalorder %s28, 0
    %p389 = por %p387, %p388
    %p390 = scmp.ne.s32.totalorder %s382, %s384
    %p391 = scmp.eq.s32.totalorder %s33, 1
    %p392 = por %p390, %p391
    %p393 = scmp.ne.s32.totalorder %s384, %s385
    %p394 = scmp.eq.s32.totalorder %s33, 0
    %p395 = por %p393, %p394
    %p396 = scmp.ne.s32.totalorder %s384, %s385
    %p397 = scmp.eq.s32.totalorder %s34, 1
    %p398 = por %p396, %p397
    %p400 = scmp.ne.s32.totalorder %s385, %s399
    %p401 = scmp.eq.s32.totalorder %s34, 0
    %p402 = por %p400, %p401
    %s404 = sadd.s32 %s403, 1
    %p407 = scmp.eq.s32.totalorder %s28, 1
    %p408 = scmp.ne.s32.totalorder %s403, %s405
    %p409 = scmp.eq.s32.totalorder %s28, 0
    %p410 = por %p408, %p409
    %p411 = scmp.ne.s32.totalorder %s403, %s405
    %p412 = scmp.eq.s32.totalorder %s33, 1
    %p413 = por %p411, %p412
    %p414 = scmp.ne.s32.totalorder %s405, %s406
    %p415 = scmp.eq.s32.totalorder %s33, 0
    %p416 = por %p414, %p415
    %p417 = scmp.ne.s32.totalorder %s405, %s406
    %p418 = scmp.eq.s32.totalorder %s34, 1
    %p419 = por %p417, %p418
    %p421 = scmp.ne.s32.totalorder %s406, %s420
    %p422 = scmp.eq.s32.totalorder %s34, 0
    %p423 = por %p421, %p422
    %s425 = sadd.s32 %s424, 1
    %p428 = scmp.eq.s32.totalorder %s28, 1
    %p429 = scmp.ne.s32.totalorder %s424, %s426
    %p430 = scmp.eq.s32.totalorder %s28, 0
    %p431 = por %p429, %p430
    %p432 = scmp.ne.s32.totalorder %s424, %s426
    %p433 = scmp.eq.s32.totalorder %s33, 1
    %p434 = por %p432, %p433
    %p435 = scmp.ne.s32.totalorder %s426, %s427
    %p436 = scmp.eq.s32.totalorder %s33, 0
    %p437 = por %p435, %p436
    %p438 = scmp.ne.s32.totalorder %s426, %s427
    %p439 = scmp.eq.s32.totalorder %s34, 1
    %p440 = por %p438, %p439
    %p442 = scmp.ne.s32.totalorder %s427, %s441
    %p443 = scmp.eq.s32.totalorder %s34, 0
    %p444 = por %p442, %p443
    %s446 = sadd.s32 %s445, 1
    %p449 = scmp.eq.s32.totalorder %s28, 1
    %p450 = scmp.ne.s32.totalorder %s445, %s447
    %p451 = scmp.eq.s32.totalorder %s28, 0
    %p452 = por %p450, %p451
    %p453 = scmp.ne.s32.totalorder %s445, %s447
    %p454 = scmp.eq.s32.totalorder %s33, 1
    %p455 = por %p453, %p454
    %p456 = scmp.ne.s32.totalorder %s447, %s448
    %p457 = scmp.eq.s32.totalorder %s33, 0
    %p458 = por %p456, %p457
    %p459 = scmp.ne.s32.totalorder %s447, %s448
    %p460 = scmp.eq.s32.totalorder %s34, 1
    %p461 = por %p459, %p460
    %p463 = scmp.ne.s32.totalorder %s448, %s462
    %p464 = scmp.eq.s32.totalorder %s34, 0
    %p465 = por %p463, %p464
    %s467 = sadd.s32 %s466, 1
    %p470 = scmp.eq.s32.totalorder %s28, 1
    %p471 = scmp.ne.s32.totalorder %s466, %s468
    %p472 = scmp.eq.s32.totalorder %s28, 0
    %p473 = por %p471, %p472
    %p474 = scmp.ne.s32.totalorder %s466, %s468
    %p475 = scmp.eq.s32.totalorder %s33, 1
    %p476 = por %p474, %p475
    %p477 = scmp.ne.s32.totalorder %s468, %s469
    %p478 = scmp.eq.s32.totalorder %s33, 0
    %p479 = por %p477, %p478
    %p480 = scmp.ne.s32.totalorder %s468, %s469
    %p481 = scmp.eq.s32.totalorder %s34, 1
    %p482 = por %p480, %p481
    %p484 = scmp.ne.s32.totalorder %s469, %s483
    %p485 = scmp.eq.s32.totalorder %s34, 0
    %p486 = por %p484, %p485
    %s488 = sadd.s32 %s487, 1
    %p491 = scmp.eq.s32.totalorder %s28, 1
    %p492 = scmp.ne.s32.totalorder %s487, %s489
    %p493 = scmp.eq.s32.totalorder %s28, 0
    %p494 = por %p492, %p493
    %p495 = scmp.ne.s32.totalorder %s487, %s489
    %p496 = scmp.eq.s32.totalorder %s33, 1
    %p497 = por %p495, %p496
    %p498 = scmp.ne.s32.totalorder %s489, %s490
    %p499 = scmp.eq.s32.totalorder %s33, 0
    %p500 = por %p498, %p499
    %p501 = scmp.ne.s32.totalorder %s489, %s490
    %p502 = scmp.eq.s32.totalorder %s34, 1
    %p503 = por %p501, %p502
    %p505 = scmp.ne.s32.totalorder %s490, %s504
    %p506 = scmp.eq.s32.totalorder %s34, 0
    %p507 = por %p505, %p506
    %s508 = ssub.s32 %s28, %s35
    %p509 = scmp.eq.s32.totalorder %s508, 0
    %s511 = sadd.s32 %s510, 1
    %s512 = scalar_select %p509, %s510, %s511
    %p515 = pneg %p509
    %p516 = scmp.eq.s32.totalorder %s28, 1
    %p517 = por %p515, %p516
    %p518 = scmp.ne.s32.totalorder %s510, %s513
    %p519 = scmp.eq.s32.totalorder %s28, 0
    %p520 = por %p518, %p519
    %p521 = scmp.ne.s32.totalorder %s510, %s513
    %p522 = scmp.eq.s32.totalorder %s33, 1
    %p523 = por %p521, %p522
    %p524 = scmp.ne.s32.totalorder %s513, %s514
    %p525 = scmp.eq.s32.totalorder %s33, 0
    %p526 = por %p524, %p525
    %p527 = scmp.ne.s32.totalorder %s513, %s514
    %p528 = scmp.eq.s32.totalorder %s34, 1
    %p529 = por %p527, %p528
    %p531 = scmp.ne.s32.totalorder %s514, %s530
    %p532 = scmp.eq.s32.totalorder %s34, 0
    %p533 = por %p531, %p532
    %p534 = scmp.le.s32.totalorder 1, %s28
    %p535 = scmp.lt.s32.totalorder %s28, 3
    %p536 = pnand %p534, %p535
    %p537 = pneg %p536
    // Predicated region
    $region9: #{causal_transformer_forward.3} parent=5 // pred_check
      _
    $region10: #{causal_transformer_forward.3} parent=5 // pred_check_branch
      %539 = sbr.rel (%p536) target = $region12
    $region11: #{causal_transformer_forward.3} parent=5 // pred_region
      %s540 = ssub.s32 %s28, 1
      // Predicated region
      $region13: #{causal_transformer_forward.3} parent=11 // pred_check
        %p541 = pneg %p101
      $region14: #{causal_transformer_forward.3} parent=11 // pred_check_branch
        %543 = sbr.rel (%p541) target = $region16
      $region15: #{causal_transformer_forward.3} parent=11 // pred_region
        _
      $region16: #{causal_transformer_forward.3} parent=11 // pred_fallthru
        _
      // Predicated region
      $region17: #{causal_transformer_forward.3} parent=11 // pred_check
        %p544 = pneg %p122
      $region18: #{causal_transformer_forward.3} parent=11 // pred_check_branch
        %546 = sbr.rel (%p544) target = $region20
      $region19: #{causal_transformer_forward.3} parent=11 // pred_region
        _
      $region20: #{causal_transformer_forward.3} parent=11 // pred_fallthru
        _
      // Predicated region
      $region21: #{causal_transformer_forward.3} parent=11 // pred_check
        %p547 = pneg %p143
      $region22: #{causal_transformer_forward.3} parent=11 // pred_check_branch
        %549 = sbr.rel (%p547) target = $region24
      $region23: #{causal_transformer_forward.3} parent=11 // pred_region
        _
      $region24: #{causal_transformer_forward.3} parent=11 // pred_fallthru
        _
      // Predicated region
      $region25: #{causal_transformer_forward.3} parent=11 // pred_check
        %p550 = pneg %p164
      $region26: #{causal_transformer_forward.3} parent=11 // pred_check_branch
        %552 = sbr.rel (%p550) target = $region28
      $region27: #{causal_transformer_forward.3} parent=11 // pred_region
        _
      $region28: #{causal_transformer_forward.3} parent=11 // pred_fallthru
        _
      // Predicated region
      $region29: #{causal_transformer_forward.3} parent=11 // pred_check
        %p553 = pneg %p185
      $region30: #{causal_transformer_forward.3} parent=11 // pred_check_branch
        %555 = sbr.rel (%p553) target = $region32
      $region31: #{causal_transformer_forward.3} parent=11 // pred_region
        _
      $region32: #{causal_transformer_forward.3} parent=11 // pred_fallthru
        _
      // Predicated region
      $region33: #{causal_transformer_forward.3} parent=11 // pred_check
        %p556 = pneg %p206
      $region34: #{causal_transformer_forward.3} parent=11 // pred_check_branch
        %558 = sbr.rel (%p556) target = $region36
      $region35: #{causal_transformer_forward.3} parent=11 // pred_region
        _
      $region36: #{causal_transformer_forward.3} parent=11 // pred_fallthru
        _
      // Predicated region
      $region37: #{causal_transformer_forward.3} parent=11 // pred_check
        %p559 = pneg %p227
      $region38: #{causal_transformer_forward.3} parent=11 // pred_check_branch
        %561 = sbr.rel (%p559) target = $region40
      $region39: #{causal_transformer_forward.3} parent=11 // pred_region
        _
      $region40: #{causal_transformer_forward.3} parent=11 // pred_fallthru
        _
      // Predicated region
      $region41: #{causal_transformer_forward.3} parent=11 // pred_check
        %p562 = pneg %p248
      $region42: #{causal_transformer_forward.3} parent=11 // pred_check_branch
        %564 = sbr.rel (%p562) target = $region44
      $region43: #{causal_transformer_forward.3} parent=11 // pred_region
        _
      $region44: #{causal_transformer_forward.3} parent=11 // pred_fallthru
        _
      // Predicated region
      $region45: #{causal_transformer_forward.3} parent=11 // pred_check
        %p565 = pneg %p269
      $region46: #{causal_transformer_forward.3} parent=11 // pred_check_branch
        %567 = sbr.rel (%p565) target = $region48
      $region47: #{causal_transformer_forward.3} parent=11 // pred_region
        _
      $region48: #{causal_transformer_forward.3} parent=11 // pred_fallthru
        _
      // Predicated region
      $region49: #{causal_transformer_forward.3} parent=11 // pred_check
        %p568 = pneg %p290
      $region50: #{causal_transformer_forward.3} parent=11 // pred_check_branch
        %570 = sbr.rel (%p568) target = $region52
      $region51: #{causal_transformer_forward.3} parent=11 // pred_region
        _
      $region52: #{causal_transformer_forward.3} parent=11 // pred_fallthru
        _
      // Predicated region
      $region53: #{causal_transformer_forward.3} parent=11 // pred_check
        %p571 = pneg %p311
      $region54: #{causal_transformer_forward.3} parent=11 // pred_check_branch
        %573 = sbr.rel (%p571) target = $region56
      $region55: #{causal_transformer_forward.3} parent=11 // pred_region
        _
      $region56: #{causal_transformer_forward.3} parent=11 // pred_fallthru
        _
      // Predicated region
      $region57: #{causal_transformer_forward.3} parent=11 // pred_check
        %p574 = pneg %p332
      $region58: #{causal_transformer_forward.3} parent=11 // pred_check_branch
        %576 = sbr.rel (%p574) target = $region60
      $region59: #{causal_transformer_forward.3} parent=11 // pred_region
        _
      $region60: #{causal_transformer_forward.3} parent=11 // pred_fallthru
        _
      // Predicated region
      $region61: #{causal_transformer_forward.3} parent=11 // pred_check
        %p577 = pneg %p353
      $region62: #{causal_transformer_forward.3} parent=11 // pred_check_branch
        %579 = sbr.rel (%p577) target = $region64
      $region63: #{causal_transformer_forward.3} parent=11 // pred_region
        _
      $region64: #{causal_transformer_forward.3} parent=11 // pred_fallthru
        _
      // Predicated region
      $region65: #{causal_transformer_forward.3} parent=11 // pred_check
        %p580 = pneg %p374
      $region66: #{causal_transformer_forward.3} parent=11 // pred_check_branch
        %582 = sbr.rel (%p580) target = $region68
      $region67: #{causal_transformer_forward.3} parent=11 // pred_region
        _
      $region68: #{causal_transformer_forward.3} parent=11 // pred_fallthru
        _
      // Predicated region
      $region69: #{causal_transformer_forward.3} parent=11 // pred_check
        %p583 = pneg %p395
      $region70: #{causal_transformer_forward.3} parent=11 // pred_check_branch
        %585 = sbr.rel (%p583) target = $region72
      $region71: #{causal_transformer_forward.3} parent=11 // pred_region
        _
      $region72: #{causal_transformer_forward.3} parent=11 // pred_fallthru
        _
      // Predicated region
      $region73: #{causal_transformer_forward.3} parent=11 // pred_check
        %p586 = pneg %p416
      $region74: #{causal_transformer_forward.3} parent=11 // pred_check_branch
        %588 = sbr.rel (%p586) target = $region76
      $region75: #{causal_transformer_forward.3} parent=11 // pred_region
        _
      $region76: #{causal_transformer_forward.3} parent=11 // pred_fallthru
        _
      // Predicated region
      $region77: #{causal_transformer_forward.3} parent=11 // pred_check
        %p589 = pneg %p437
      $region78: #{causal_transformer_forward.3} parent=11 // pred_check_branch
        %591 = sbr.rel (%p589) target = $region80
      $region79: #{causal_transformer_forward.3} parent=11 // pred_region
        _
      $region80: #{causal_transformer_forward.3} parent=11 // pred_fallthru
        _
      // Predicated region
      $region81: #{causal_transformer_forward.3} parent=11 // pred_check
        %p592 = pneg %p458
      $region82: #{causal_transformer_forward.3} parent=11 // pred_check_branch
        %594 = sbr.rel (%p592) target = $region84
      $region83: #{causal_transformer_forward.3} parent=11 // pred_region
        _
      $region84: #{causal_transformer_forward.3} parent=11 // pred_fallthru
        _
      // Predicated region
      $region85: #{causal_transformer_forward.3} parent=11 // pred_check
        %p595 = pneg %p479
      $region86: #{causal_transformer_forward.3} parent=11 // pred_check_branch
        %597 = sbr.rel (%p595) target = $region88
      $region87: #{causal_transformer_forward.3} parent=11 // pred_region
        _
      $region88: #{causal_transformer_forward.3} parent=11 // pred_fallthru
        _
      // Predicated region
      $region89: #{causal_transformer_forward.3} parent=11 // pred_check
        %p598 = pneg %p500
      $region90: #{causal_transformer_forward.3} parent=11 // pred_check_branch
        %600 = sbr.rel (%p598) target = $region92
      $region91: #{causal_transformer_forward.3} parent=11 // pred_region
        _
      $region92: #{causal_transformer_forward.3} parent=11 // pred_fallthru
        _
    $region12: #{causal_transformer_forward.3} parent=5 // pred_fallthru
      _
    %p601 = scmp.lt.s32.totalorder %s28, 2
    // Predicated region
    $region93: #{causal_transformer_forward.3} parent=5 // pred_check
      %p602 = pneg %p601
    $region94: #{causal_transformer_forward.3} parent=5 // pred_check_branch
      %604 = sbr.rel (%p602) target = $region96
    $region95: #{causal_transformer_forward.3} parent=5 // pred_region
      // Predicated region
      $region97: #{causal_transformer_forward.3} parent=95 // pred_check
        %p605 = pneg %p48
      $region98: #{causal_transformer_forward.3} parent=95 // pred_check_branch
        %607 = sbr.rel (%p605) target = $region100
      $region99: #{causal_transformer_forward.3} parent=95 // pred_region
        %p608 = scmp.lt.s32.totalorder %s28, 1
        %s609 = scalar_select %p608, %s28, 1
        %s610 = smul.addr %s609, 4
        %s611 = scalar_lea.vmem %s0, %s610
      $region100: #{causal_transformer_forward.3} parent=95 // pred_fallthru
        _
      // Predicated region
      $region101: #{causal_transformer_forward.3} parent=95 // pred_check
        %p612 = pneg %p74
      $region102: #{causal_transformer_forward.3} parent=95 // pred_check_branch
        %614 = sbr.rel (%p612) target = $region104
      $region103: #{causal_transformer_forward.3} parent=95 // pred_region
        %p615 = scmp.lt.s32.totalorder %s28, 1
        %s616 = scalar_select %p615, %s28, 1
        %s617 = smul.addr %s616, 4
        %s618 = scalar_lea.vmem %s1, %s617
      $region104: #{causal_transformer_forward.3} parent=95 // pred_fallthru
        _
    $region96: #{causal_transformer_forward.3} parent=5 // pred_fallthru
      _
    %p619 = scmp.le.s32.totalorder 1, %s28
    %p620 = scmp.lt.s32.totalorder %s28, 3
    %p621 = pnand %p619, %p620
    %p622 = pneg %p621
    // Predicated region
    $region105: #{causal_transformer_forward.3} parent=5 // pred_check
      _
    $region106: #{causal_transformer_forward.3} parent=5 // pred_check_branch
      %624 = sbr.rel (%p621) target = $region108
    $region107: #{causal_transformer_forward.3} parent=5 // pred_region
      %s625 = ssub.s32 %s28, 1
      %p626 = scmp.lt.s32.totalorder %s33, 1
      %s627 = scalar_select %p626, %s33, 1
      %s628 = smul.addr %s627, 4
      %s629 = scalar_lea.vmem %s0, %s628
      %p630 = pneg %p54
      %p631 = pneg %p51
      %p632 = scmp.lt.s32.totalorder %s33, 1
      %s633 = scalar_select %p632, %s33, 1
      %s634 = smul.addr %s633, 4
      %s635 = scalar_lea.vmem %s1, %s634
      %p636 = pneg %p80
      %p637 = pneg %p77
      %p638 = pneg %p101
      %p639 = pneg %p98
      %p640 = pneg %p122
      %p641 = pneg %p119
      %p642 = pneg %p143
      %p643 = pneg %p140
      %p644 = pneg %p164
      %p645 = pneg %p161
      %p646 = pneg %p185
      %p647 = pneg %p182
      %p648 = pneg %p206
      %p649 = pneg %p203
      %p650 = pneg %p227
      %p651 = pneg %p224
      %p652 = pneg %p248
      %p653 = pneg %p245
      %p654 = pneg %p269
      %p655 = pneg %p266
      %p656 = pneg %p290
      %p657 = pneg %p287
      %p658 = pneg %p311
      %p659 = pneg %p308
      %p660 = pneg %p332
      %p661 = pneg %p329
      %p662 = pneg %p353
      %p663 = pneg %p350
      %p664 = pneg %p374
      %p665 = pneg %p371
      %p666 = pneg %p395
      %p667 = pneg %p392
      %p668 = pneg %p416
      %p669 = pneg %p413
      %p670 = pneg %p437
      %p671 = pneg %p434
      %p672 = pneg %p458
      %p673 = pneg %p455
      %p674 = pneg %p479
      %p675 = pneg %p476
      %p676 = pneg %p500
      %p677 = pneg %p497
      %p678 = pneg %p526
      %p679 = pneg %p523
      %p680 = scmp.lt.s32.totalorder %s33, 1
      %s681 = scalar_select %p680, %s33, 1
      %s682 = smul.addr %s681, 4
      %s683 = scalar_lea.vmem %s22, %s682
      %p684 = scmp.lt.s32.totalorder %s33, 1
      %s685 = scalar_select %p684, %s33, 1
      %s686 = smul.addr %s685, 4
      %s687 = scalar_lea.vmem %s0, %s686
      %p688 = scmp.lt.s32.totalorder %s33, 1
      %s689 = scalar_select %p688, %s33, 1
      %s690 = smul.addr %s689, 4
      %s691 = scalar_lea.vmem %s1, %s690
      %p692 = scmp.lt.s32.totalorder %s33, 1
      %s693 = scalar_select %p692, %s33, 1
      %s694 = smul.addr %s693, 4
      %s695 = scalar_lea.vmem %s22, %s694
      %v697 = vld [vmem:[%s687] sm:$0xf]
      %v698 = vunpack.c.l.bf16 %v697
      %v699 = vld [vmem:[%s691] sm:$0xf]
      %v700 = vld [vmem:[%s2] sm:$0xf]
      %v701 = vld [vmem:[%s2 + $0x4] sm:$0xf]
      %v702 = vld [vmem:[%s2 + $0x8] sm:$0xf]
      %v703 = vld [vmem:[%s2 + $0xc] sm:$0xf]
      %v704 = vld [vmem:[%s3] sm:$0x1]
      %v706 = vperm.slane %v704, 0
      %v712 = vunpack.c.l.b16 %v700
      %v713 = vunpack.c.l.b16 %v701
      %v714 = vunpack.c.l.b16 %v702
      %v715 = vunpack.c.l.b16 %v703
      %v716 = vpack.c.b16 %v713, %v712
      %v717 = vpack.c.b16 %v715, %v714
      %vm720 = vcmask 261120
      %v722 = vsel %vm720, %v697, 0
      %724 = vmatpush.bf16.msra.mxu0 0
      %725 = vmatpush.bf16.msra.mxu0 0
      %726 = vmatpush.bf16.msra.mxu0 0
      %727 = vmatpush.bf16.msra.mxu0 0
      %728 = vmatpush.bf16.msra.mxu0 0
      %729 = vmatpush.bf16.msra.mxu0 0
      %730 = vmatpush.bf16.msra.mxu0 %v717
      %731 = vmatpush.bf16.msra.mxu0 %v716
      %732 = vmatmul.bf16.gmra.mxu0 %v722
      %v733 = vpop.f32.mrf.mxu0
      %v734 = vadd.f32 %v706, %v733
      %v735 = vpop.f32.mrf.mxu0
      %736 = vdwg.mxu0
      %v737 = vld [vmem:[%s4] sm:$0xf]
      %v738 = vld [vmem:[%s4 + $0x4] sm:$0xf]
      %v739 = vld [vmem:[%s4 + $0x8] sm:$0xf]
      %v740 = vld [vmem:[%s4 + $0xc] sm:$0xf]
      %v741 = vmul.f32 %v734, 0.35355338
      %v742 = vpack.c.bf16 %v741, %v741
      %v743 = vpack.c.bf16 %v734, %v734
      %v744 = vlaneseq
      %v745 = vshrl.u32 %v744, 7
      %v746 = vlaneseq
      %v747 = vand.u32 %v746, 127
      %vm748 = vcmp.le.s32.totalorder %v747, %v745
      %v750 = vunpack.c.l.b16 %v743
      %v751 = vpack.c.b16 %v750, %v750
      %752 = vrot.lane.b32.xlu0 %v751, 96
      %v753 = vpop.permute.xlu0 %752
      %vm754 = vcmask 64512
      %v756 = vsel %vm754, %v742, 0
      %v759 = vsel %vm754, %v753, 0
      %761 = vmatpush.bf16.xpose.msra.mxu0 0
      %762 = vmatpush.bf16.xpose.msra.mxu0 0
      %763 = vmatpush.bf16.xpose.msra.mxu0 0
      %764 = vmatpush.bf16.xpose.msra.mxu0 0
      %765 = vmatpush.bf16.xpose.msra.mxu0 0
      %766 = vmatpush.bf16.xpose.msra.mxu0 0
      %767 = vmatpush.bf16.xpose.msra.mxu0 0
      %768 = vmatpush.bf16.xpose.msra.mxu0 %v759
      %769 = vmatmul.bf16.gmra.mxu0 %v756
      %v770 = vpop.f32.mrf.mxu0
      %v771 = vadd.f32 0.0, %v770
      %v772 = vpop.f32.mrf.mxu0
      %773 = vdwg.mxu0
      %v774 = vsel %vm748, %v771, -1e+30
      %v775 = vsel %vm754, %v774, -inf
      %776 = vmax.xlane.f32.xlu0 %v775
      %v777 = vpop.xlane.xlu0 %776
      %v778 = vsub.f32 %v774, %v777
      %v779 = vmul.f32 %v778, 1.442695
      %v780 = vpow.pop %v779
      %v781 = vsel %vm754, %v780, 0.0
      %782 = vadd.xlane.f32.xlu0 %v781
      %v783 = vpop.xlane.xlu0 %782
      %v784 = vpack.c.bf16 %v780, %v780
      %785 = vrot.lane.b32.xlu0 %v751, 64
      %v786 = vpop.permute.xlu0 %785
      %v788 = vsel %vm754, %v784, 0
      %vm790 = vcmask 1043456
      %v792 = vsel %vm790, %v786, 0
      %794 = vmatpush.bf16.msra.mxu0 0
      %795 = vmatpush.bf16.msra.mxu0 0
      %796 = vmatpush.bf16.msra.mxu0 0
      %797 = vmatpush.bf16.msra.mxu0 0
      %798 = vmatpush.bf16.msra.mxu0 0
      %799 = vmatpush.bf16.msra.mxu0 0
      %800 = vmatpush.bf16.msra.mxu0 0
      %801 = vmatpush.bf16.msra.mxu0 %v792
      %802 = vmatmul.bf16.gmra.mxu0 %v788
      %v803 = vpop.f32.mrf.mxu0
      %v804 = vadd.f32 0.0, %v803
      %v805 = vpop.f32.mrf.mxu0
      %806 = vdwg.mxu0
      %v807 = vrcp.pop %v783
      %v808 = vmul.f32 %v804, %v807
      %v809 = vpack.c.bf16 %v808, %v808
      %v811 = vunpack.c.l.b16 %v742
      %v812 = vpack.c.b16 %v811, %v811
      %813 = vrot.lane.b32.xlu0 %v812, 120
      %v814 = vpop.permute.xlu0 %813
      %815 = vrot.lane.b32.xlu0 %v751, 88
      %v816 = vpop.permute.xlu0 %815
      %v818 = vsel %vm754, %v814, 0
      %v821 = vsel %vm754, %v816, 0
      %823 = vmatpush.bf16.xpose.msra.mxu0 0
      %824 = vmatpush.bf16.xpose.msra.mxu0 0
      %825 = vmatpush.bf16.xpose.msra.mxu0 0
      %826 = vmatpush.bf16.xpose.msra.mxu0 0
      %827 = vmatpush.bf16.xpose.msra.mxu0 0
      %828 = vmatpush.bf16.xpose.msra.mxu0 0
      %829 = vmatpush.bf16.xpose.msra.mxu0 0
      %830 = vmatpush.bf16.xpose.msra.mxu0 %v821
      %831 = vmatmul.bf16.gmra.mxu0 %v818
      %v832 = vpop.f32.mrf.mxu0
      %v833 = vadd.f32 0.0, %v832
      %v834 = vpop.f32.mrf.mxu0
      %835 = vdwg.mxu0
      %v836 = vsel %vm748, %v833, -1e+30
      %v837 = vsel %vm754, %v836, -inf
      %838 = vmax.xlane.f32.xlu0 %v837
      %v839 = vpop.xlane.xlu0 %838
      %v840 = vsub.f32 %v836, %v839
      %v841 = vmul.f32 %v840, 1.442695
      %v842 = vpow.pop %v841
      %v843 = vsel %vm754, %v842, 0.0
      %844 = vadd.xlane.f32.xlu0 %v843
      %v845 = vpop.xlane.xlu0 %844
      %v846 = vpack.c.bf16 %v842, %v842
      %847 = vrot.lane.b32.xlu0 %v751, 56
      %v848 = vpop.permute.xlu0 %847
      %v850 = vsel %vm754, %v846, 0
      %v853 = vsel %vm790, %v848, 0
      %855 = vmatpush.bf16.msra.mxu0 0
      %856 = vmatpush.bf16.msra.mxu0 0
      %857 = vmatpush.bf16.msra.mxu0 0
      %858 = vmatpush.bf16.msra.mxu0 0
      %859 = vmatpush.bf16.msra.mxu0 0
      %860 = vmatpush.bf16.msra.mxu0 0
      %861 = vmatpush.bf16.msra.mxu0 0
      %862 = vmatpush.bf16.msra.mxu0 %v853
      %863 = vmatmul.bf16.gmra.mxu0 %v850
      %v864 = vpop.f32.mrf.mxu0
      %v865 = vadd.f32 0.0, %v864
      %v866 = vpop.f32.mrf.mxu0
      %867 = vdwg.mxu0
      %v868 = vrcp.pop %v845
      %v869 = vmul.f32 %v865, %v868
      %v870 = vpack.c.bf16 %v869, %v869
      %v872 = vsel %vm754, %v870, 0
      %v875 = vsel %vm790, %v738, 0
      %877 = vmatpush.bf16.msra.mxu0 0
      %878 = vmatpush.bf16.msra.mxu0 0
      %879 = vmatpush.bf16.msra.mxu0 0
      %880 = vmatpush.bf16.msra.mxu0 0
      %881 = vmatpush.bf16.msra.mxu0 0
      %882 = vmatpush.bf16.msra.mxu0 0
      %883 = vmatpush.bf16.msra.mxu0 0
      %884 = vmatpush.bf16.msra.mxu0 %v875
      %885 = vmatmul.bf16.gmra.mxu0 %v872
      %v886 = vpop.f32.mrf.mxu0
      %v887 = vadd.f32 0.0, %v886
      %v888 = vpop.f32.mrf.mxu0
      %889 = vdwg.mxu0
      %v891 = vsel %vm754, %v809, 0
      %v894 = vsel %vm790, %v737, 0
      %896 = vmatpush.bf16.msra.mxu0 0
      %897 = vmatpush.bf16.msra.mxu0 0
      %898 = vmatpush.bf16.msra.mxu0 0
      %899 = vmatpush.bf16.msra.mxu0 0
      %900 = vmatpush.bf16.msra.mxu0 0
      %901 = vmatpush.bf16.msra.mxu0 0
      %902 = vmatpush.bf16.msra.mxu0 0
      %903 = vmatpush.bf16.msra.mxu0 %v894
      %904 = vmatmul.bf16.gmra.mxu0 %v891
      %v905 = vpop.f32.mrf.mxu0
      %v906 = vadd.f32 %v887, %v905
      %v907 = vpop.f32.mrf.mxu0
      %908 = vdwg.mxu0
      %909 = vrot.lane.b32.xlu0 %v812, 112
      %v910 = vpop.permute.xlu0 %909
      %911 = vrot.lane.b32.xlu0 %v751, 80
      %v912 = vpop.permute.xlu0 %911
      %v914 = vsel %vm754, %v910, 0
      %v917 = vsel %vm754, %v912, 0
      %919 = vmatpush.bf16.xpose.msra.mxu0 0
      %920 = vmatpush.bf16.xpose.msra.mxu0 0
      %921 = vmatpush.bf16.xpose.msra.mxu0 0
      %922 = vmatpush.bf16.xpose.msra.mxu0 0
      %923 = vmatpush.bf16.xpose.msra.mxu0 0
      %924 = vmatpush.bf16.xpose.msra.mxu0 0
      %925 = vmatpush.bf16.xpose.msra.mxu0 0
      %926 = vmatpush.bf16.xpose.msra.mxu0 %v917
      %927 = vmatmul.bf16.gmra.mxu0 %v914
      %v928 = vpop.f32.mrf.mxu0
      %v929 = vadd.f32 0.0, %v928
      %v930 = vpop.f32.mrf.mxu0
      %931 = vdwg.mxu0
      %v932 = vsel %vm748, %v929, -1e+30
      %v933 = vsel %vm754, %v932, -inf
      %934 = vmax.xlane.f32.xlu0 %v933
      %v935 = vpop.xlane.xlu0 %934
      %v936 = vsub.f32 %v932, %v935
      %v937 = vmul.f32 %v936, 1.442695
      %v938 = vpow.pop %v937
      %v939 = vsel %vm754, %v938, 0.0
      %940 = vadd.xlane.f32.xlu0 %v939
      %v941 = vpop.xlane.xlu0 %940
      %v942 = vpack.c.bf16 %v938, %v938
      %943 = vrot.lane.b32.xlu0 %v751, 48
      %v944 = vpop.permute.xlu0 %943
      %v946 = vsel %vm754, %v942, 0
      %v949 = vsel %vm790, %v944, 0
      %951 = vmatpush.bf16.msra.mxu0 0
      %952 = vmatpush.bf16.msra.mxu0 0
      %953 = vmatpush.bf16.msra.mxu0 0
      %954 = vmatpush.bf16.msra.mxu0 0
      %955 = vmatpush.bf16.msra.mxu0 0
      %956 = vmatpush.bf16.msra.mxu0 0
      %957 = vmatpush.bf16.msra.mxu0 0
      %958 = vmatpush.bf16.msra.mxu0 %v949
      %959 = vmatmul.bf16.gmra.mxu0 %v946
      %v960 = vpop.f32.mrf.mxu0
      %v961 = vadd.f32 0.0, %v960
      %v962 = vpop.f32.mrf.mxu0
      %963 = vdwg.mxu0
      %v964 = vrcp.pop %v941
      %v965 = vmul.f32 %v961, %v964
      %v966 = vpack.c.bf16 %v965, %v965
      %v968 = vsel %vm754, %v966, 0
      %v971 = vsel %vm790, %v739, 0
      %973 = vmatpush.bf16.msra.mxu0 0
      %974 = vmatpush.bf16.msra.mxu0 0
      %975 = vmatpush.bf16.msra.mxu0 0
      %976 = vmatpush.bf16.msra.mxu0 0
      %977 = vmatpush.bf16.msra.mxu0 0
      %978 = vmatpush.bf16.msra.mxu0 0
      %979 = vmatpush.bf16.msra.mxu0 0
      %980 = vmatpush.bf16.msra.mxu0 %v971
      %981 = vmatmul.bf16.gmra.mxu0 %v968
      %v982 = vpop.f32.mrf.mxu0
      %v983 = vadd.f32 0.0, %v982
      %v984 = vpop.f32.mrf.mxu0
      %985 = vdwg.mxu0
      %v986 = vadd.f32 %v906, %v983
      %987 = vrot.lane.b32.xlu0 %v812, 104
      %v988 = vpop.permute.xlu0 %987
      %989 = vrot.lane.b32.xlu0 %v751, 72
      %v990 = vpop.permute.xlu0 %989
      %v992 = vsel %vm754, %v988, 0
      %v995 = vsel %vm754, %v990, 0
      %997 = vmatpush.bf16.xpose.msra.mxu0 0
      %998 = vmatpush.bf16.xpose.msra.mxu0 0
      %999 = vmatpush.bf16.xpose.msra.mxu0 0
      %1000 = vmatpush.bf16.xpose.msra.mxu0 0
      %1001 = vmatpush.bf16.xpose.msra.mxu0 0
      %1002 = vmatpush.bf16.xpose.msra.mxu0 0
      %1003 = vmatpush.bf16.xpose.msra.mxu0 0
      %1004 = vmatpush.bf16.xpose.msra.mxu0 %v995
      %1005 = vmatmul.bf16.gmra.mxu0 %v992
      %v1006 = vpop.f32.mrf.mxu0
      %v1007 = vadd.f32 0.0, %v1006
      %v1008 = vpop.f32.mrf.mxu0
      %1009 = vdwg.mxu0
      %v1010 = vsel %vm748, %v1007, -1e+30
      %v1011 = vsel %vm754, %v1010, -inf
      %1012 = vmax.xlane.f32.xlu0 %v1011
      %v1013 = vpop.xlane.xlu0 %1012
      %v1014 = vsub.f32 %v1010, %v1013
      %v1015 = vmul.f32 %v1014, 1.442695
      %v1016 = vpow.pop %v1015
      %v1017 = vsel %vm754, %v1016, 0.0
      %1018 = vadd.xlane.f32.xlu0 %v1017
      %v1019 = vpop.xlane.xlu0 %1018
      %v1020 = vpack.c.bf16 %v1016, %v1016
      %1021 = vrot.lane.b32.xlu0 %v751, 40
      %v1022 = vpop.permute.xlu0 %1021
      %v1024 = vsel %vm754, %v1020, 0
      %v1027 = vsel %vm790, %v1022, 0
      %1029 = vmatpush.bf16.msra.mxu0 0
      %1030 = vmatpush.bf16.msra.mxu0 0
      %1031 = vmatpush.bf16.msra.mxu0 0
      %1032 = vmatpush.bf16.msra.mxu0 0
      %1033 = vmatpush.bf16.msra.mxu0 0
      %1034 = vmatpush.bf16.msra.mxu0 0
      %1035 = vmatpush.bf16.msra.mxu0 0
      %1036 = vmatpush.bf16.msra.mxu0 %v1027
      %1037 = vmatmul.bf16.gmra.mxu0 %v1024
      %v1038 = vpop.f32.mrf.mxu0
      %v1039 = vadd.f32 0.0, %v1038
      %v1040 = vpop.f32.mrf.mxu0
      %1041 = vdwg.mxu0
      %v1042 = vrcp.pop %v1019
      %v1043 = vmul.f32 %v1039, %v1042
      %v1044 = vpack.c.bf16 %v1043, %v1043
      %v1046 = vsel %vm754, %v1044, 0
      %v1049 = vsel %vm790, %v740, 0
      %1051 = vmatpush.bf16.msra.mxu0 0
      %1052 = vmatpush.bf16.msra.mxu0 0
      %1053 = vmatpush.bf16.msra.mxu0 0
      %1054 = vmatpush.bf16.msra.mxu0 0
      %1055 = vmatpush.bf16.msra.mxu0 0
      %1056 = vmatpush.bf16.msra.mxu0 0
      %1057 = vmatpush.bf16.msra.mxu0 0
      %1058 = vmatpush.bf16.msra.mxu0 %v1049
      %1059 = vmatmul.bf16.gmra.mxu0 %v1046
      %v1060 = vpop.f32.mrf.mxu0
      %v1061 = vadd.f32 0.0, %v1060
      %v1062 = vpop.f32.mrf.mxu0
      %1063 = vdwg.mxu0
      %v1064 = vadd.f32 %v986, %v1061
      %v1065 = vadd.f32 %v698, %v1064
      %v1066 = vld [vmem:[%s5] sm:$0x1]
      %v1068 = vperm.slane %v1066, 0
      %v1070 = vadd.f32 %v1065, %v1068
      %v1071 = vld [vmem:[%s6] sm:$0x1]
      %v1072 = vld [vmem:[%s7] sm:$0x1]
      %v1073 = vsel %vm720, %v1070, 0.0
      %1074 = vadd.xlane.f32.xlu0 %v1073
      %v1075 = vpop.xlane.xlu0 %1074
      %v1076 = vrcp.pop 32.0
      %v1077 = vmul.f32 32.0, %v1076
      %v1078 = vsub.f32 1.0, %v1077
      %v1079 = vmul.f32 %v1076, %v1078
      %v1080 = vadd.f32 %v1076, %v1079
      %vm1081 = vweird.f32 %v1076
      %v1082 = vsel %vm1081, %v1076, %v1080
      %v1083 = vmul.f32 %v1075, %v1082
      %v1084 = vsub.f32 %v1070, %v1083
      %v1085 = vmul.f32 %v1084, %v1084
      %v1086 = vsel %vm720, %v1085, 0.0
      %1087 = vadd.xlane.f32.xlu0 %v1086
      %v1088 = vpop.xlane.xlu0 %1087
      %v1089 = vmul.f32 %v1088, %v1082
      %v1090 = vadd.f32 %v1089, 1e-05
      %v1091 = vrsqrt.pop %v1090
      %v1092 = vmul.f32 %v1091, %v1090
      %v1093 = vmul.f32 %v1092, %v1091
      %v1094 = vmul.f32 0.5, %v1093
      %v1095 = vsub.f32 1.5, %v1094
      %v1096 = vmul.f32 %v1091, %v1095
      %vm1097 = vweird.f32 %v1090
      %vm1098 = vweird.f32 %v1091
      %vm1099 = vmor %vm1097, %vm1098
      %v1100 = vsel %vm1099, %v1091, %v1096
      %v1101 = vmul.f32 %v1084, %v1100
      %v1103 = vperm.slane %v1071, 0
      %v1105 = vmul.f32 %v1101, %v1103
      %v1107 = vperm.slane %v1072, 0
      %v1109 = vadd.f32 %v1105, %v1107
      %v1110 = vpack.c.bf16 %v1109, %v1109
      %v1111 = vld [vmem:[%s8] sm:$0xf]
      %v1112 = vld [vmem:[%s8 + $0x4] sm:$0xf]
      %v1113 = vld [vmem:[%s8 + $0x8] sm:$0xf]
      %v1114 = vld [vmem:[%s8 + $0xc] sm:$0xf]
      %v1115 = vld [vmem:[%s9] sm:$0x1]
      %v1117 = vperm.slane %v1115, 0
      %v1123 = vunpack.c.l.b16 %v1111
      %v1124 = vunpack.c.l.b16 %v1112
      %v1125 = vunpack.c.l.b16 %v1113
      %v1126 = vunpack.c.l.b16 %v1114
      %v1127 = vpack.c.b16 %v1124, %v1123
      %v1128 = vpack.c.b16 %v1126, %v1125
      %v1132 = vsel %vm720, %v1110, 0
      %1134 = vmatpush.bf16.msra.mxu0 0
      %1135 = vmatpush.bf16.msra.mxu0 0
      %1136 = vmatpush.bf16.msra.mxu0 0
      %1137 = vmatpush.bf16.msra.mxu0 0
      %1138 = vmatpush.bf16.msra.mxu0 0
      %1139 = vmatpush.bf16.msra.mxu0 0
      %1140 = vmatpush.bf16.msra.mxu0 %v1128
      %1141 = vmatpush.bf16.msra.mxu0 %v1127
      %1142 = vmatmul.bf16.gmra.mxu0 %v1132
      %v1143 = vpop.f32.mrf.mxu0
      %v1144 = vadd.f32 %v1117, %v1143
      %v1145 = vpop.f32.mrf.mxu0
      %1146 = vdwg.mxu0
      %v1147 = vld [vmem:[%s10] sm:$0xf]
      %v1148 = vld [vmem:[%s10 + $0x4] sm:$0xf]
      %v1149 = vld [vmem:[%s10 + $0x8] sm:$0xf]
      %v1150 = vld [vmem:[%s10 + $0xc] sm:$0xf]
      %v1151 = vld [vmem:[%s11] sm:$0x1]
      %v1153 = vperm.slane %v1151, 0
      %v1159 = vunpack.c.l.b16 %v1147
      %v1160 = vunpack.c.l.b16 %v1148
      %v1161 = vunpack.c.l.b16 %v1149
      %v1162 = vunpack.c.l.b16 %v1150
      %v1163 = vpack.c.b16 %v1160, %v1159
      %v1164 = vpack.c.b16 %v1162, %v1161
      %v1168 = vsel %vm720, %v699, 0
      %1170 = vmatpush.bf16.msra.mxu0 0
      %1171 = vmatpush.bf16.msra.mxu0 0
      %1172 = vmatpush.bf16.msra.mxu0 0
      %1173 = vmatpush.bf16.msra.mxu0 0
      %1174 = vmatpush.bf16.msra.mxu0 0
      %1175 = vmatpush.bf16.msra.mxu0 0
      %1176 = vmatpush.bf16.msra.mxu0 %v1164
      %1177 = vmatpush.bf16.msra.mxu0 %v1163
      %1178 = vmatmul.bf16.gmra.mxu0 %v1168
      %v1179 = vpop.f32.mrf.mxu0
      %v1180 = vadd.f32 %v1153, %v1179
      %v1181 = vpop.f32.mrf.mxu0
      %1182 = vdwg.mxu0
      %v1183 = vld [vmem:[%s12] sm:$0xf]
      %v1184 = vld [vmem:[%s12 + $0x4] sm:$0xf]
      %v1185 = vld [vmem:[%s12 + $0x8] sm:$0xf]
      %v1186 = vld [vmem:[%s12 + $0xc] sm:$0xf]
      %v1187 = vmul.f32 %v1144, 0.35355338
      %v1188 = vpack.c.bf16 %v1187, %v1187
      %v1189 = vpack.c.bf16 %v1180, %v1180
      %v1191 = vsel %vm754, %v1188, 0
      %v1194 = vsel %vm754, %v1189, 0
      %1196 = vmatpush.bf16.xpose.msra.mxu0 0
      %1197 = vmatpush.bf16.xpose.msra.mxu0 0
      %1198 = vmatpush.bf16.xpose.msra.mxu0 0
      %1199 = vmatpush.bf16.xpose.msra.mxu0 0
      %1200 = vmatpush.bf16.xpose.msra.mxu0 0
      %1201 = vmatpush.bf16.xpose.msra.mxu0 0
      %1202 = vmatpush.bf16.xpose.msra.mxu0 0
      %1203 = vmatpush.bf16.xpose.msra.mxu0 %v1194
      %1204 = vmatmul.bf16.gmra.mxu0 %v1191
      %v1205 = vpop.f32.mrf.mxu0
      %v1206 = vadd.f32 0.0, %v1205
      %v1207 = vpop.f32.mrf.mxu0
      %1208 = vdwg.mxu0
      %v1209 = vsel %vm754, %v1206, -inf
      %1210 = vmax.xlane.f32.xlu0 %v1209
      %v1211 = vpop.xlane.xlu0 %1210
      %v1212 = vsub.f32 %v1206, %v1211
      %v1213 = vmul.f32 %v1212, 1.442695
      %v1214 = vpow.pop %v1213
      %v1215 = vsel %vm754, %v1214, 0.0
      %1216 = vadd.xlane.f32.xlu0 %v1215
      %v1217 = vpop.xlane.xlu0 %1216
      %v1218 = vpack.c.bf16 %v1214, %v1214
      %v1220 = vunpack.c.l.b16 %v1189
      %v1221 = vpack.c.b16 %v1220, %v1220
      %1222 = vrot.lane.b32.xlu0 %v1221, 96
      %v1223 = vpop.permute.xlu0 %1222
      %v1225 = vsel %vm754, %v1218, 0
      %v1228 = vsel %vm790, %v1223, 0
      %1230 = vmatpush.bf16.msra.mxu0 0
      %1231 = vmatpush.bf16.msra.mxu0 0
      %1232 = vmatpush.bf16.msra.mxu0 0
      %1233 = vmatpush.bf16.msra.mxu0 0
      %1234 = vmatpush.bf16.msra.mxu0 0
      %1235 = vmatpush.bf16.msra.mxu0 0
      %1236 = vmatpush.bf16.msra.mxu0 0
      %1237 = vmatpush.bf16.msra.mxu0 %v1228
      %1238 = vmatmul.bf16.gmra.mxu0 %v1225
      %v1239 = vpop.f32.mrf.mxu0
      %v1240 = vadd.f32 0.0, %v1239
      %v1241 = vpop.f32.mrf.mxu0
      %1242 = vdwg.mxu0
      %v1243 = vrcp.pop %v1217
      %v1244 = vmul.f32 %v1240, %v1243
      %v1245 = vpack.c.bf16 %v1244, %v1244
      %v1247 = vunpack.c.l.b16 %v1188
      %v1248 = vpack.c.b16 %v1247, %v1247
      %1249 = vrot.lane.b32.xlu0 %v1248, 120
      %v1250 = vpop.permute.xlu0 %1249
      %1251 = vrot.lane.b32.xlu0 %v1221, 120
      %v1252 = vpop.permute.xlu0 %1251
      %v1254 = vsel %vm754, %v1250, 0
      %v1257 = vsel %vm754, %v1252, 0
      %1259 = vmatpush.bf16.xpose.msra.mxu0 0
      %1260 = vmatpush.bf16.xpose.msra.mxu0 0
      %1261 = vmatpush.bf16.xpose.msra.mxu0 0
      %1262 = vmatpush.bf16.xpose.msra.mxu0 0
      %1263 = vmatpush.bf16.xpose.msra.mxu0 0
      %1264 = vmatpush.bf16.xpose.msra.mxu0 0
      %1265 = vmatpush.bf16.xpose.msra.mxu0 0
      %1266 = vmatpush.bf16.xpose.msra.mxu0 %v1257
      %1267 = vmatmul.bf16.gmra.mxu0 %v1254
      %v1268 = vpop.f32.mrf.mxu0
      %v1269 = vadd.f32 0.0, %v1268
      %v1270 = vpop.f32.mrf.mxu0
      %1271 = vdwg.mxu0
      %v1272 = vsel %vm754, %v1269, -inf
      %1273 = vmax.xlane.f32.xlu0 %v1272
      %v1274 = vpop.xlane.xlu0 %1273
      %v1275 = vsub.f32 %v1269, %v1274
      %v1276 = vmul.f32 %v1275, 1.442695
      %v1277 = vpow.pop %v1276
      %v1278 = vsel %vm754, %v1277, 0.0
      %1279 = vadd.xlane.f32.xlu0 %v1278
      %v1280 = vpop.xlane.xlu0 %1279
      %v1281 = vpack.c.bf16 %v1277, %v1277
      %1282 = vrot.lane.b32.xlu0 %v1221, 88
      %v1283 = vpop.permute.xlu0 %1282
      %v1285 = vsel %vm754, %v1281, 0
      %v1288 = vsel %vm790, %v1283, 0
      %1290 = vmatpush.bf16.msra.mxu0 0
      %1291 = vmatpush.bf16.msra.mxu0 0
      %1292 = vmatpush.bf16.msra.mxu0 0
      %1293 = vmatpush.bf16.msra.mxu0 0
      %1294 = vmatpush.bf16.msra.mxu0 0
      %1295 = vmatpush.bf16.msra.mxu0 0
      %1296 = vmatpush.bf16.msra.mxu0 0
      %1297 = vmatpush.bf16.msra.mxu0 %v1288
      %1298 = vmatmul.bf16.gmra.mxu0 %v1285
      %v1299 = vpop.f32.mrf.mxu0
      %v1300 = vadd.f32 0.0, %v1299
      %v1301 = vpop.f32.mrf.mxu0
      %1302 = vdwg.mxu0
      %v1303 = vrcp.pop %v1280
      %v1304 = vmul.f32 %v1300, %v1303
      %v1305 = vpack.c.bf16 %v1304, %v1304
      %v1307 = vsel %vm754, %v1305, 0
      %v1310 = vsel %vm790, %v1184, 0
      %1312 = vmatpush.bf16.msra.mxu0 0
      %1313 = vmatpush.bf16.msra.mxu0 0
      %1314 = vmatpush.bf16.msra.mxu0 0
      %1315 = vmatpush.bf16.msra.mxu0 0
      %1316 = vmatpush.bf16.msra.mxu0 0
      %1317 = vmatpush.bf16.msra.mxu0 0
      %1318 = vmatpush.bf16.msra.mxu0 0
      %1319 = vmatpush.bf16.msra.mxu0 %v1310
      %1320 = vmatmul.bf16.gmra.mxu0 %v1307
      %v1321 = vpop.f32.mrf.mxu0
      %v1322 = vadd.f32 0.0, %v1321
      %v1323 = vpop.f32.mrf.mxu0
      %1324 = vdwg.mxu0
      %v1326 = vsel %vm754, %v1245, 0
      %v1329 = vsel %vm790, %v1183, 0
      %1331 = vmatpush.bf16.msra.mxu0 0
      %1332 = vmatpush.bf16.msra.mxu0 0
      %1333 = vmatpush.bf16.msra.mxu0 0
      %1334 = vmatpush.bf16.msra.mxu0 0
      %1335 = vmatpush.bf16.msra.mxu0 0
      %1336 = vmatpush.bf16.msra.mxu0 0
      %1337 = vmatpush.bf16.msra.mxu0 0
      %1338 = vmatpush.bf16.msra.mxu0 %v1329
      %1339 = vmatmul.bf16.gmra.mxu0 %v1326
      %v1340 = vpop.f32.mrf.mxu0
      %v1341 = vadd.f32 %v1322, %v1340
      %v1342 = vpop.f32.mrf.mxu0
      %1343 = vdwg.mxu0
      %1344 = vrot.lane.b32.xlu0 %v1248, 112
      %v1345 = vpop.permute.xlu0 %1344
      %1346 = vrot.lane.b32.xlu0 %v1221, 112
      %v1347 = vpop.permute.xlu0 %1346
      %v1349 = vsel %vm754, %v1345, 0
      %v1352 = vsel %vm754, %v1347, 0
      %1354 = vmatpush.bf16.xpose.msra.mxu0 0
      %1355 = vmatpush.bf16.xpose.msra.mxu0 0
      %1356 = vmatpush.bf16.xpose.msra.mxu0 0
      %1357 = vmatpush.bf16.xpose.msra.mxu0 0
      %1358 = vmatpush.bf16.xpose.msra.mxu0 0
      %1359 = vmatpush.bf16.xpose.msra.mxu0 0
      %1360 = vmatpush.bf16.xpose.msra.mxu0 0
      %1361 = vmatpush.bf16.xpose.msra.mxu0 %v1352
      %1362 = vmatmul.bf16.gmra.mxu0 %v1349
      %v1363 = vpop.f32.mrf.mxu0
      %v1364 = vadd.f32 0.0, %v1363
      %v1365 = vpop.f32.mrf.mxu0
      %1366 = vdwg.mxu0
      %v1367 = vsel %vm754, %v1364, -inf
      %1368 = vmax.xlane.f32.xlu0 %v1367
      %v1369 = vpop.xlane.xlu0 %1368
      %v1370 = vsub.f32 %v1364, %v1369
      %v1371 = vmul.f32 %v1370, 1.442695
      %v1372 = vpow.pop %v1371
      %v1373 = vsel %vm754, %v1372, 0.0
      %1374 = vadd.xlane.f32.xlu0 %v1373
      %v1375 = vpop.xlane.xlu0 %1374
      %v1376 = vpack.c.bf16 %v1372, %v1372
      %1377 = vrot.lane.b32.xlu0 %v1221, 80
      %v1378 = vpop.permute.xlu0 %1377
      %v1380 = vsel %vm754, %v1376, 0
      %v1383 = vsel %vm790, %v1378, 0
      %1385 = vmatpush.bf16.msra.mxu0 0
      %1386 = vmatpush.bf16.msra.mxu0 0
      %1387 = vmatpush.bf16.msra.mxu0 0
      %1388 = vmatpush.bf16.msra.mxu0 0
      %1389 = vmatpush.bf16.msra.mxu0 0
      %1390 = vmatpush.bf16.msra.mxu0 0
      %1391 = vmatpush.bf16.msra.mxu0 0
      %1392 = vmatpush.bf16.msra.mxu0 %v1383
      %1393 = vmatmul.bf16.gmra.mxu0 %v1380
      %v1394 = vpop.f32.mrf.mxu0
      %v1395 = vadd.f32 0.0, %v1394
      %v1396 = vpop.f32.mrf.mxu0
      %1397 = vdwg.mxu0
      %v1398 = vrcp.pop %v1375
      %v1399 = vmul.f32 %v1395, %v1398
      %v1400 = vpack.c.bf16 %v1399, %v1399
      %v1402 = vsel %vm754, %v1400, 0
      %v1405 = vsel %vm790, %v1185, 0
      %1407 = vmatpush.bf16.msra.mxu0 0
      %1408 = vmatpush.bf16.msra.mxu0 0
      %1409 = vmatpush.bf16.msra.mxu0 0
      %1410 = vmatpush.bf16.msra.mxu0 0
      %1411 = vmatpush.bf16.msra.mxu0 0
      %1412 = vmatpush.bf16.msra.mxu0 0
      %1413 = vmatpush.bf16.msra.mxu0 0
      %1414 = vmatpush.bf16.msra.mxu0 %v1405
      %1415 = vmatmul.bf16.gmra.mxu0 %v1402
      %v1416 = vpop.f32.mrf.mxu0
      %v1417 = vadd.f32 0.0, %v1416
      %v1418 = vpop.f32.mrf.mxu0
      %1419 = vdwg.mxu0
      %v1420 = vadd.f32 %v1341, %v1417
      %1421 = vrot.lane.b32.xlu0 %v1248, 104
      %v1422 = vpop.permute.xlu0 %1421
      %1423 = vrot.lane.b32.xlu0 %v1221, 104
      %v1424 = vpop.permute.xlu0 %1423
      %v1426 = vsel %vm754, %v1422, 0
      %v1429 = vsel %vm754, %v1424, 0
      %1431 = vmatpush.bf16.xpose.msra.mxu0 0
      %1432 = vmatpush.bf16.xpose.msra.mxu0 0
      %1433 = vmatpush.bf16.xpose.msra.mxu0 0
      %1434 = vmatpush.bf16.xpose.msra.mxu0 0
      %1435 = vmatpush.bf16.xpose.msra.mxu0 0
      %1436 = vmatpush.bf16.xpose.msra.mxu0 0
      %1437 = vmatpush.bf16.xpose.msra.mxu0 0
      %1438 = vmatpush.bf16.xpose.msra.mxu0 %v1429
      %1439 = vmatmul.bf16.gmra.mxu0 %v1426
      %v1440 = vpop.f32.mrf.mxu0
      %v1441 = vadd.f32 0.0, %v1440
      %v1442 = vpop.f32.mrf.mxu0
      %1443 = vdwg.mxu0
      %v1444 = vsel %vm754, %v1441, -inf
      %1445 = vmax.xlane.f32.xlu0 %v1444
      %v1446 = vpop.xlane.xlu0 %1445
      %v1447 = vsub.f32 %v1441, %v1446
      %v1448 = vmul.f32 %v1447, 1.442695
      %v1449 = vpow.pop %v1448
      %v1450 = vsel %vm754, %v1449, 0.0
      %1451 = vadd.xlane.f32.xlu0 %v1450
      %v1452 = vpop.xlane.xlu0 %1451
      %v1453 = vpack.c.bf16 %v1449, %v1449
      %1454 = vrot.lane.b32.xlu0 %v1221, 72
      %v1455 = vpop.permute.xlu0 %1454
      %v1457 = vsel %vm754, %v1453, 0
      %v1460 = vsel %vm790, %v1455, 0
      %1462 = vmatpush.bf16.msra.mxu0 0
      %1463 = vmatpush.bf16.msra.mxu0 0
      %1464 = vmatpush.bf16.msra.mxu0 0
      %1465 = vmatpush.bf16.msra.mxu0 0
      %1466 = vmatpush.bf16.msra.mxu0 0
      %1467 = vmatpush.bf16.msra.mxu0 0
      %1468 = vmatpush.bf16.msra.mxu0 0
      %1469 = vmatpush.bf16.msra.mxu0 %v1460
      %1470 = vmatmul.bf16.gmra.mxu0 %v1457
      %v1471 = vpop.f32.mrf.mxu0
      %v1472 = vadd.f32 0.0, %v1471
      %v1473 = vpop.f32.mrf.mxu0
      %1474 = vdwg.mxu0
      %v1475 = vrcp.pop %v1452
      %v1476 = vmul.f32 %v1472, %v1475
      %v1477 = vpack.c.bf16 %v1476, %v1476
      %v1479 = vsel %vm754, %v1477, 0
      %v1482 = vsel %vm790, %v1186, 0
      %1484 = vmatpush.bf16.msra.mxu0 0
      %1485 = vmatpush.bf16.msra.mxu0 0
      %1486 = vmatpush.bf16.msra.mxu0 0
      %1487 = vmatpush.bf16.msra.mxu0 0
      %1488 = vmatpush.bf16.msra.mxu0 0
      %1489 = vmatpush.bf16.msra.mxu0 0
      %1490 = vmatpush.bf16.msra.mxu0 0
      %1491 = vmatpush.bf16.msra.mxu0 %v1482
      %1492 = vmatmul.bf16.gmra.mxu0 %v1479
      %v1493 = vpop.f32.mrf.mxu0
      %v1494 = vadd.f32 0.0, %v1493
      %v1495 = vpop.f32.mrf.mxu0
      %1496 = vdwg.mxu0
      %v1497 = vadd.f32 %v1420, %v1494
      %v1498 = vadd.f32 %v1109, %v1497
      %v1499 = vld [vmem:[%s13] sm:$0x1]
      %v1501 = vperm.slane %v1499, 0
      %v1503 = vadd.f32 %v1498, %v1501
      %v1504 = vld [vmem:[%s14] sm:$0x1]
      %v1505 = vld [vmem:[%s15] sm:$0x1]
      %v1506 = vsel %vm720, %v1503, 0.0
      %1507 = vadd.xlane.f32.xlu0 %v1506
      %v1508 = vpop.xlane.xlu0 %1507
      %v1509 = vmul.f32 %v1508, %v1082
      %v1510 = vsub.f32 %v1503, %v1509
      %v1511 = vmul.f32 %v1510, %v1510
      %v1512 = vsel %vm720, %v1511, 0.0
      %1513 = vadd.xlane.f32.xlu0 %v1512
      %v1514 = vpop.xlane.xlu0 %1513
      %v1515 = vmul.f32 %v1514, %v1082
      %v1516 = vadd.f32 %v1515, 1e-05
      %v1517 = vrsqrt.pop %v1516
      %v1518 = vmul.f32 %v1517, %v1516
      %v1519 = vmul.f32 %v1518, %v1517
      %v1520 = vmul.f32 0.5, %v1519
      %v1521 = vsub.f32 1.5, %v1520
      %v1522 = vmul.f32 %v1517, %v1521
      %vm1523 = vweird.f32 %v1516
      %vm1524 = vweird.f32 %v1517
      %vm1525 = vmor %vm1523, %vm1524
      %v1526 = vsel %vm1525, %v1517, %v1522
      %v1527 = vmul.f32 %v1510, %v1526
      %v1529 = vperm.slane %v1504, 0
      %v1531 = vmul.f32 %v1527, %v1529
      %v1533 = vperm.slane %v1505, 0
      %v1535 = vadd.f32 %v1531, %v1533
      %v1536 = vpack.c.bf16 %v1535, %v1535
      %v1537 = vld [vmem:[%s16] sm:$0xff]
      %v1538 = vld [vmem:[%s16 + $0x8] sm:$0xff]
      %v1539 = vld [vmem:[%s16 + $0x10] sm:$0xff]
      %v1540 = vld [vmem:[%s16 + $0x18] sm:$0xff]
      %v1541 = vld [vmem:[%s16 + $0x20] sm:$0xff]
      %v1542 = vld [vmem:[%s16 + $0x28] sm:$0xff]
      %v1543 = vld [vmem:[%s16 + $0x30] sm:$0xff]
      %v1544 = vld [vmem:[%s16 + $0x38] sm:$0xff]
      %v1545 = vld [vmem:[%s16 + $0x40] sm:$0xff]
      %v1546 = vld [vmem:[%s16 + $0x48] sm:$0xff]
      %v1547 = vld [vmem:[%s16 + $0x50] sm:$0xff]
      %v1548 = vld [vmem:[%s16 + $0x58] sm:$0xff]
      %v1549 = vld [vmem:[%s16 + $0x60] sm:$0xff]
      %v1550 = vld [vmem:[%s16 + $0x68] sm:$0xff]
      %v1551 = vld [vmem:[%s16 + $0x70] sm:$0xff]
      %v1552 = vld [vmem:[%s16 + $0x78] sm:$0xff]
      %v1553 = vld [vmem:[%s16 + $0x80] sm:$0xff]
      %v1554 = vld [vmem:[%s16 + $0x88] sm:$0xff]
      %v1555 = vld [vmem:[%s16 + $0x90] sm:$0xff]
      %v1556 = vld [vmem:[%s16 + $0x98] sm:$0xff]
      %v1557 = vld [vmem:[%s16 + $0xa0] sm:$0xff]
      %v1558 = vld [vmem:[%s16 + $0xa8] sm:$0xff]
      %v1559 = vld [vmem:[%s16 + $0xb0] sm:$0xff]
      %v1560 = vld [vmem:[%s16 + $0xb8] sm:$0xff]
      %v1561 = vld [vmem:[%s16 + $0xc0] sm:$0xff]
      %v1562 = vld [vmem:[%s16 + $0xc8] sm:$0xff]
      %v1563 = vld [vmem:[%s16 + $0xd0] sm:$0xff]
      %v1564 = vld [vmem:[%s16 + $0xd8] sm:$0xff]
      %v1565 = vld [vmem:[%s16 + $0xe0] sm:$0xff]
      %v1566 = vld [vmem:[%s16 + $0xe8] sm:$0xff]
      %v1567 = vld [vmem:[%s16 + $0xf0] sm:$0xff]
      %v1568 = vld [vmem:[%s16 + $0xf8] sm:$0xff]
      %v1569 = vld [vmem:[%s17] sm:$0xff]
      %v1570 = vld [vmem:[%s17 + $0x8] sm:$0xff]
      %v1573 = vperm.slane %v1569, 0
      %v1574 = vperm.slane %v1569, 1
      %v1575 = vperm.slane %v1569, 2
      %v1576 = vperm.slane %v1569, 3
      %v1577 = vperm.slane %v1569, 4
      %v1578 = vperm.slane %v1569, 5
      %v1579 = vperm.slane %v1569, 6
      %v1580 = vperm.slane %v1569, 7
      %v1581 = vperm.slane %v1570, 0
      %v1582 = vperm.slane %v1570, 1
      %v1583 = vperm.slane %v1570, 2
      %v1584 = vperm.slane %v1570, 3
      %v1585 = vperm.slane %v1570, 4
      %v1586 = vperm.slane %v1570, 5
      %v1587 = vperm.slane %v1570, 6
      %v1588 = vperm.slane %v1570, 7
      %v1637 = vunpack.c.l.b16 %v1537
      %v1638 = vunpack.c.h.b16 %v1537
      %v1639 = vunpack.c.l.b16 %v1538
      %v1640 = vunpack.c.h.b16 %v1538
      %v1641 = vunpack.c.l.b16 %v1539
      %v1642 = vunpack.c.h.b16 %v1539
      %v1643 = vunpack.c.l.b16 %v1540
      %v1644 = vunpack.c.h.b16 %v1540
      %v1645 = vunpack.c.l.b16 %v1541
      %v1646 = vunpack.c.h.b16 %v1541
      %v1647 = vunpack.c.l.b16 %v1542
      %v1648 = vunpack.c.h.b16 %v1542
      %v1649 = vunpack.c.l.b16 %v1543
      %v1650 = vunpack.c.h.b16 %v1543
      %v1651 = vunpack.c.l.b16 %v1544
      %v1652 = vunpack.c.h.b16 %v1544
      %v1653 = vunpack.c.l.b16 %v1545
      %v1654 = vunpack.c.h.b16 %v1545
      %v1655 = vunpack.c.l.b16 %v1546
      %v1656 = vunpack.c.h.b16 %v1546
      %v1657 = vunpack.c.l.b16 %v1547
      %v1658 = vunpack.c.h.b16 %v1547
      %v1659 = vunpack.c.l.b16 %v1548
      %v1660 = vunpack.c.h.b16 %v1548
      %v1661 = vunpack.c.l.b16 %v1549
      %v1662 = vunpack.c.h.b16 %v1549
      %v1663 = vunpack.c.l.b16 %v1550
      %v1664 = vunpack.c.h.b16 %v1550
      %v1665 = vunpack.c.l.b16 %v1551
      %v1666 = vunpack.c.h.b16 %v1551
      %v1667 = vunpack.c.l.b16 %v1552
      %v1668 = vunpack.c.h.b16 %v1552
      %v1669 = vunpack.c.l.b16 %v1553
      %v1670 = vunpack.c.h.b16 %v1553
      %v1671 = vunpack.c.l.b16 %v1554
      %v1672 = vunpack.c.h.b16 %v1554
      %v1673 = vunpack.c.l.b16 %v1555
      %v1674 = vunpack.c.h.b16 %v1555
      %v1675 = vunpack.c.l.b16 %v1556
      %v1676 = vunpack.c.h.b16 %v1556
      %v1677 = vunpack.c.l.b16 %v1557
      %v1678 = vunpack.c.h.b16 %v1557
      %v1679 = vunpack.c.l.b16 %v1558
      %v1680 = vunpack.c.h.b16 %v1558
      %v1681 = vunpack.c.l.b16 %v1559
      %v1682 = vunpack.c.h.b16 %v1559
      %v1683 = vunpack.c.l.b16 %v1560
      %v1684 = vunpack.c.h.b16 %v1560
      %v1685 = vunpack.c.l.b16 %v1561
      %v1686 = vunpack.c.h.b16 %v1561
      %v1687 = vunpack.c.l.b16 %v1562
      %v1688 = vunpack.c.h.b16 %v1562
      %v1689 = vunpack.c.l.b16 %v1563
      %v1690 = vunpack.c.h.b16 %v1563
      %v1691 = vunpack.c.l.b16 %v1564
      %v1692 = vunpack.c.h.b16 %v1564
      %v1693 = vunpack.c.l.b16 %v1565
      %v1694 = vunpack.c.h.b16 %v1565
      %v1695 = vunpack.c.l.b16 %v1566
      %v1696 = vunpack.c.h.b16 %v1566
      %v1697 = vunpack.c.l.b16 %v1567
      %v1698 = vunpack.c.h.b16 %v1567
      %v1699 = vunpack.c.l.b16 %v1568
      %v1700 = vunpack.c.h.b16 %v1568
      %v1701 = vpack.c.b16 %v1653, %v1637
      %v1702 = vpack.c.b16 %v1654, %v1638
      %v1703 = vpack.c.b16 %v1655, %v1639
      %v1704 = vpack.c.b16 %v1656, %v1640
      %v1705 = vpack.c.b16 %v1657, %v1641
      %v1706 = vpack.c.b16 %v1658, %v1642
      %v1707 = vpack.c.b16 %v1659, %v1643
      %v1708 = vpack.c.b16 %v1660, %v1644
      %v1709 = vpack.c.b16 %v1661, %v1645
      %v1710 = vpack.c.b16 %v1662, %v1646
      %v1711 = vpack.c.b16 %v1663, %v1647
      %v1712 = vpack.c.b16 %v1664, %v1648
      %v1713 = vpack.c.b16 %v1665, %v1649
      %v1714 = vpack.c.b16 %v1666, %v1650
      %v1715 = vpack.c.b16 %v1667, %v1651
      %v1716 = vpack.c.b16 %v1668, %v1652
      %v1717 = vpack.c.b16 %v1685, %v1669
      %v1718 = vpack.c.b16 %v1686, %v1670
      %v1719 = vpack.c.b16 %v1687, %v1671
      %v1720 = vpack.c.b16 %v1688, %v1672
      %v1721 = vpack.c.b16 %v1689, %v1673
      %v1722 = vpack.c.b16 %v1690, %v1674
      %v1723 = vpack.c.b16 %v1691, %v1675
      %v1724 = vpack.c.b16 %v1692, %v1676
      %v1725 = vpack.c.b16 %v1693, %v1677
      %v1726 = vpack.c.b16 %v1694, %v1678
      %v1727 = vpack.c.b16 %v1695, %v1679
      %v1728 = vpack.c.b16 %v1696, %v1680
      %v1729 = vpack.c.b16 %v1697, %v1681
      %v1730 = vpack.c.b16 %v1698, %v1682
      %v1731 = vpack.c.b16 %v1699, %v1683
      %v1732 = vpack.c.b16 %v1700, %v1684
      %v1766 = vsel %vm720, %v1536, 0
      %1768 = vmatpush.bf16.msra.mxu0 0
      %1769 = vmatpush.bf16.msra.mxu0 0
      %1770 = vmatpush.bf16.msra.mxu0 0
      %1771 = vmatpush.bf16.msra.mxu0 0
      %1772 = vmatpush.bf16.msra.mxu0 0
      %1773 = vmatpush.bf16.msra.mxu0 0
      %1774 = vmatpush.bf16.msra.mxu0 %v1717
      %1775 = vmatpush.bf16.msra.mxu0 %v1701
      %1776 = vmatmul.bf16.gmra.mxu0 %v1766
      %v1777 = vpop.f32.mrf.mxu0
      %v1778 = vadd.f32 %v1573, %v1777
      %v1779 = vpop.f32.mrf.mxu0
      %1780 = vdwg.mxu0
      %1781 = vmatpush.bf16.msra.mxu0 0
      %1782 = vmatpush.bf16.msra.mxu0 0
      %1783 = vmatpush.bf16.msra.mxu0 0
      %1784 = vmatpush.bf16.msra.mxu0 0
      %1785 = vmatpush.bf16.msra.mxu0 0
      %1786 = vmatpush.bf16.msra.mxu0 0
      %1787 = vmatpush.bf16.msra.mxu0 %v1718
      %1788 = vmatpush.bf16.msra.mxu0 %v1702
      %1789 = vmatmul.bf16.gmra.mxu0 %v1766
      %v1790 = vpop.f32.mrf.mxu0
      %v1791 = vadd.f32 %v1574, %v1790
      %v1792 = vpop.f32.mrf.mxu0
      %1793 = vdwg.mxu0
      %1794 = vmatpush.bf16.msra.mxu0 0
      %1795 = vmatpush.bf16.msra.mxu0 0
      %1796 = vmatpush.bf16.msra.mxu0 0
      %1797 = vmatpush.bf16.msra.mxu0 0
      %1798 = vmatpush.bf16.msra.mxu0 0
      %1799 = vmatpush.bf16.msra.mxu0 0
      %1800 = vmatpush.bf16.msra.mxu0 %v1719
      %1801 = vmatpush.bf16.msra.mxu0 %v1703
      %1802 = vmatmul.bf16.gmra.mxu0 %v1766
      %v1803 = vpop.f32.mrf.mxu0
      %v1804 = vadd.f32 %v1575, %v1803
      %v1805 = vpop.f32.mrf.mxu0
      %1806 = vdwg.mxu0
      %1807 = vmatpush.bf16.msra.mxu0 0
      %1808 = vmatpush.bf16.msra.mxu0 0
      %1809 = vmatpush.bf16.msra.mxu0 0
      %1810 = vmatpush.bf16.msra.mxu0 0
      %1811 = vmatpush.bf16.msra.mxu0 0
      %1812 = vmatpush.bf16.msra.mxu0 0
      %1813 = vmatpush.bf16.msra.mxu0 %v1720
      %1814 = vmatpush.bf16.msra.mxu0 %v1704
      %1815 = vmatmul.bf16.gmra.mxu0 %v1766
      %v1816 = vpop.f32.mrf.mxu0
      %v1817 = vadd.f32 %v1576, %v1816
      %v1818 = vpop.f32.mrf.mxu0
      %1819 = vdwg.mxu0
      %1820 = vmatpush.bf16.msra.mxu0 0
      %1821 = vmatpush.bf16.msra.mxu0 0
      %1822 = vmatpush.bf16.msra.mxu0 0
      %1823 = vmatpush.bf16.msra.mxu0 0
      %1824 = vmatpush.bf16.msra.mxu0 0
      %1825 = vmatpush.bf16.msra.mxu0 0
      %1826 = vmatpush.bf16.msra.mxu0 %v1721
      %1827 = vmatpush.bf16.msra.mxu0 %v1705
      %1828 = vmatmul.bf16.gmra.mxu0 %v1766
      %v1829 = vpop.f32.mrf.mxu0
      %v1830 = vadd.f32 %v1577, %v1829
      %v1831 = vpop.f32.mrf.mxu0
      %1832 = vdwg.mxu0
      %1833 = vmatpush.bf16.msra.mxu0 0
      %1834 = vmatpush.bf16.msra.mxu0 0
      %1835 = vmatpush.bf16.msra.mxu0 0
      %1836 = vmatpush.bf16.msra.mxu0 0
      %1837 = vmatpush.bf16.msra.mxu0 0
      %1838 = vmatpush.bf16.msra.mxu0 0
      %1839 = vmatpush.bf16.msra.mxu0 %v1722
      %1840 = vmatpush.bf16.msra.mxu0 %v1706
      %1841 = vmatmul.bf16.gmra.mxu0 %v1766
      %v1842 = vpop.f32.mrf.mxu0
      %v1843 = vadd.f32 %v1578, %v1842
      %v1844 = vpop.f32.mrf.mxu0
      %1845 = vdwg.mxu0
      %1846 = vmatpush.bf16.msra.mxu0 0
      %1847 = vmatpush.bf16.msra.mxu0 0
      %1848 = vmatpush.bf16.msra.mxu0 0
      %1849 = vmatpush.bf16.msra.mxu0 0
      %1850 = vmatpush.bf16.msra.mxu0 0
      %1851 = vmatpush.bf16.msra.mxu0 0
      %1852 = vmatpush.bf16.msra.mxu0 %v1723
      %1853 = vmatpush.bf16.msra.mxu0 %v1707
      %1854 = vmatmul.bf16.gmra.mxu0 %v1766
      %v1855 = vpop.f32.mrf.mxu0
      %v1856 = vadd.f32 %v1579, %v1855
      %v1857 = vpop.f32.mrf.mxu0
      %1858 = vdwg.mxu0
      %1859 = vmatpush.bf16.msra.mxu0 0
      %1860 = vmatpush.bf16.msra.mxu0 0
      %1861 = vmatpush.bf16.msra.mxu0 0
      %1862 = vmatpush.bf16.msra.mxu0 0
      %1863 = vmatpush.bf16.msra.mxu0 0
      %1864 = vmatpush.bf16.msra.mxu0 0
      %1865 = vmatpush.bf16.msra.mxu0 %v1724
      %1866 = vmatpush.bf16.msra.mxu0 %v1708
      %1867 = vmatmul.bf16.gmra.mxu0 %v1766
      %v1868 = vpop.f32.mrf.mxu0
      %v1869 = vadd.f32 %v1580, %v1868
      %v1870 = vpop.f32.mrf.mxu0
      %1871 = vdwg.mxu0
      %1872 = vmatpush.bf16.msra.mxu0 0
      %1873 = vmatpush.bf16.msra.mxu0 0
      %1874 = vmatpush.bf16.msra.mxu0 0
      %1875 = vmatpush.bf16.msra.mxu0 0
      %1876 = vmatpush.bf16.msra.mxu0 0
      %1877 = vmatpush.bf16.msra.mxu0 0
      %1878 = vmatpush.bf16.msra.mxu0 %v1725
      %1879 = vmatpush.bf16.msra.mxu0 %v1709
      %1880 = vmatmul.bf16.gmra.mxu0 %v1766
      %v1881 = vpop.f32.mrf.mxu0
      %v1882 = vadd.f32 %v1581, %v1881
      %v1883 = vpop.f32.mrf.mxu0
      %1884 = vdwg.mxu0
      %1885 = vmatpush.bf16.msra.mxu0 0
      %1886 = vmatpush.bf16.msra.mxu0 0
      %1887 = vmatpush.bf16.msra.mxu0 0
      %1888 = vmatpush.bf16.msra.mxu0 0
      %1889 = vmatpush.bf16.msra.mxu0 0
      %1890 = vmatpush.bf16.msra.mxu0 0
      %1891 = vmatpush.bf16.msra.mxu0 %v1726
      %1892 = vmatpush.bf16.msra.mxu0 %v1710
      %1893 = vmatmul.bf16.gmra.mxu0 %v1766
      %v1894 = vpop.f32.mrf.mxu0
      %v1895 = vadd.f32 %v1582, %v1894
      %v1896 = vpop.f32.mrf.mxu0
      %1897 = vdwg.mxu0
      %1898 = vmatpush.bf16.msra.mxu0 0
      %1899 = vmatpush.bf16.msra.mxu0 0
      %1900 = vmatpush.bf16.msra.mxu0 0
      %1901 = vmatpush.bf16.msra.mxu0 0
      %1902 = vmatpush.bf16.msra.mxu0 0
      %1903 = vmatpush.bf16.msra.mxu0 0
      %1904 = vmatpush.bf16.msra.mxu0 %v1727
      %1905 = vmatpush.bf16.msra.mxu0 %v1711
      %1906 = vmatmul.bf16.gmra.mxu0 %v1766
      %v1907 = vpop.f32.mrf.mxu0
      %v1908 = vadd.f32 %v1583, %v1907
      %v1909 = vpop.f32.mrf.mxu0
      %1910 = vdwg.mxu0
      %1911 = vmatpush.bf16.msra.mxu0 0
      %1912 = vmatpush.bf16.msra.mxu0 0
      %1913 = vmatpush.bf16.msra.mxu0 0
      %1914 = vmatpush.bf16.msra.mxu0 0
      %1915 = vmatpush.bf16.msra.mxu0 0
      %1916 = vmatpush.bf16.msra.mxu0 0
      %1917 = vmatpush.bf16.msra.mxu0 %v1728
      %1918 = vmatpush.bf16.msra.mxu0 %v1712
      %1919 = vmatmul.bf16.gmra.mxu0 %v1766
      %v1920 = vpop.f32.mrf.mxu0
      %v1921 = vadd.f32 %v1584, %v1920
      %v1922 = vpop.f32.mrf.mxu0
      %1923 = vdwg.mxu0
      %1924 = vmatpush.bf16.msra.mxu0 0
      %1925 = vmatpush.bf16.msra.mxu0 0
      %1926 = vmatpush.bf16.msra.mxu0 0
      %1927 = vmatpush.bf16.msra.mxu0 0
      %1928 = vmatpush.bf16.msra.mxu0 0
      %1929 = vmatpush.bf16.msra.mxu0 0
      %1930 = vmatpush.bf16.msra.mxu0 %v1729
      %1931 = vmatpush.bf16.msra.mxu0 %v1713
      %1932 = vmatmul.bf16.gmra.mxu0 %v1766
      %v1933 = vpop.f32.mrf.mxu0
      %v1934 = vadd.f32 %v1585, %v1933
      %v1935 = vpop.f32.mrf.mxu0
      %1936 = vdwg.mxu0
      %1937 = vmatpush.bf16.msra.mxu0 0
      %1938 = vmatpush.bf16.msra.mxu0 0
      %1939 = vmatpush.bf16.msra.mxu0 0
      %1940 = vmatpush.bf16.msra.mxu0 0
      %1941 = vmatpush.bf16.msra.mxu0 0
      %1942 = vmatpush.bf16.msra.mxu0 0
      %1943 = vmatpush.bf16.msra.mxu0 %v1730
      %1944 = vmatpush.bf16.msra.mxu0 %v1714
      %1945 = vmatmul.bf16.gmra.mxu0 %v1766
      %v1946 = vpop.f32.mrf.mxu0
      %v1947 = vadd.f32 %v1586, %v1946
      %v1948 = vpop.f32.mrf.mxu0
      %1949 = vdwg.mxu0
      %1950 = vmatpush.bf16.msra.mxu0 0
      %1951 = vmatpush.bf16.msra.mxu0 0
      %1952 = vmatpush.bf16.msra.mxu0 0
      %1953 = vmatpush.bf16.msra.mxu0 0
      %1954 = vmatpush.bf16.msra.mxu0 0
      %1955 = vmatpush.bf16.msra.mxu0 0
      %1956 = vmatpush.bf16.msra.mxu0 %v1731
      %1957 = vmatpush.bf16.msra.mxu0 %v1715
      %1958 = vmatmul.bf16.gmra.mxu0 %v1766
      %v1959 = vpop.f32.mrf.mxu0
      %v1960 = vadd.f32 %v1587, %v1959
      %v1961 = vpop.f32.mrf.mxu0
      %1962 = vdwg.mxu0
      %1963 = vmatpush.bf16.msra.mxu0 0
      %1964 = vmatpush.bf16.msra.mxu0 0
      %1965 = vmatpush.bf16.msra.mxu0 0
      %1966 = vmatpush.bf16.msra.mxu0 0
      %1967 = vmatpush.bf16.msra.mxu0 0
      %1968 = vmatpush.bf16.msra.mxu0 0
      %1969 = vmatpush.bf16.msra.mxu0 %v1732
      %1970 = vmatpush.bf16.msra.mxu0 %v1716
      %1971 = vmatmul.bf16.gmra.mxu0 %v1766
      %v1972 = vpop.f32.mrf.mxu0
      %v1973 = vadd.f32 %v1588, %v1972
      %v1974 = vpop.f32.mrf.mxu0
      %1975 = vdwg.mxu0
      %v1976 = vmax.f32 %v1778, 0.0
      %v1977 = vmax.f32 %v1791, 0.0
      %v1978 = vmax.f32 %v1804, 0.0
      %v1979 = vmax.f32 %v1817, 0.0
      %v1980 = vmax.f32 %v1830, 0.0
      %v1981 = vmax.f32 %v1843, 0.0
      %v1982 = vmax.f32 %v1856, 0.0
      %v1983 = vmax.f32 %v1869, 0.0
      %v1984 = vmax.f32 %v1882, 0.0
      %v1985 = vmax.f32 %v1895, 0.0
      %v1986 = vmax.f32 %v1908, 0.0
      %v1987 = vmax.f32 %v1921, 0.0
      %v1988 = vmax.f32 %v1934, 0.0
      %v1989 = vmax.f32 %v1947, 0.0
      %v1990 = vmax.f32 %v1960, 0.0
      %v1991 = vmax.f32 %v1973, 0.0
      %v1992 = vpack.c.bf16 %v1976, %v1976
      %v1993 = vpack.c.bf16 %v1977, %v1977
      %v1994 = vpack.c.bf16 %v1978, %v1978
      %v1995 = vpack.c.bf16 %v1979, %v1979
      %v1996 = vpack.c.bf16 %v1980, %v1980
      %v1997 = vpack.c.bf16 %v1981, %v1981
      %v1998 = vpack.c.bf16 %v1982, %v1982
      %v1999 = vpack.c.bf16 %v1983, %v1983
      %v2000 = vpack.c.bf16 %v1984, %v1984
      %v2001 = vpack.c.bf16 %v1985, %v1985
      %v2002 = vpack.c.bf16 %v1986, %v1986
      %v2003 = vpack.c.bf16 %v1987, %v1987
      %v2004 = vpack.c.bf16 %v1988, %v1988
      %v2005 = vpack.c.bf16 %v1989, %v1989
      %v2006 = vpack.c.bf16 %v1990, %v1990
      %v2007 = vpack.c.bf16 %v1991, %v1991
      %v2008 = vld [vmem:[%s18] sm:$0xf]
      %v2009 = vld [vmem:[%s18 + $0x4] sm:$0xf]
      %v2010 = vld [vmem:[%s18 + $0x8] sm:$0xf]
      %v2011 = vld [vmem:[%s18 + $0xc] sm:$0xf]
      %v2012 = vld [vmem:[%s18 + $0x10] sm:$0xf]
      %v2013 = vld [vmem:[%s18 + $0x14] sm:$0xf]
      %v2014 = vld [vmem:[%s18 + $0x18] sm:$0xf]
      %v2015 = vld [vmem:[%s18 + $0x1c] sm:$0xf]
      %v2016 = vld [vmem:[%s18 + $0x20] sm:$0xf]
      %v2017 = vld [vmem:[%s18 + $0x24] sm:$0xf]
      %v2018 = vld [vmem:[%s18 + $0x28] sm:$0xf]
      %v2019 = vld [vmem:[%s18 + $0x2c] sm:$0xf]
      %v2020 = vld [vmem:[%s18 + $0x30] sm:$0xf]
      %v2021 = vld [vmem:[%s18 + $0x34] sm:$0xf]
      %v2022 = vld [vmem:[%s18 + $0x38] sm:$0xf]
      %v2023 = vld [vmem:[%s18 + $0x3c] sm:$0xf]
      %v2024 = vld [vmem:[%s18 + $0x40] sm:$0xf]
      %v2025 = vld [vmem:[%s18 + $0x44] sm:$0xf]
      %v2026 = vld [vmem:[%s18 + $0x48] sm:$0xf]
      %v2027 = vld [vmem:[%s18 + $0x4c] sm:$0xf]
      %v2028 = vld [vmem:[%s18 + $0x50] sm:$0xf]
      %v2029 = vld [vmem:[%s18 + $0x54] sm:$0xf]
      %v2030 = vld [vmem:[%s18 + $0x58] sm:$0xf]
      %v2031 = vld [vmem:[%s18 + $0x5c] sm:$0xf]
      %v2032 = vld [vmem:[%s18 + $0x60] sm:$0xf]
      %v2033 = vld [vmem:[%s18 + $0x64] sm:$0xf]
      %v2034 = vld [vmem:[%s18 + $0x68] sm:$0xf]
      %v2035 = vld [vmem:[%s18 + $0x6c] sm:$0xf]
      %v2036 = vld [vmem:[%s18 + $0x70] sm:$0xf]
      %v2037 = vld [vmem:[%s18 + $0x74] sm:$0xf]
      %v2038 = vld [vmem:[%s18 + $0x78] sm:$0xf]
      %v2039 = vld [vmem:[%s18 + $0x7c] sm:$0xf]
      %v2040 = vld [vmem:[%s18 + $0x80] sm:$0xf]
      %v2041 = vld [vmem:[%s18 + $0x84] sm:$0xf]
      %v2042 = vld [vmem:[%s18 + $0x88] sm:$0xf]
      %v2043 = vld [vmem:[%s18 + $0x8c] sm:$0xf]
      %v2044 = vld [vmem:[%s18 + $0x90] sm:$0xf]
      %v2045 = vld [vmem:[%s18 + $0x94] sm:$0xf]
      %v2046 = vld [vmem:[%s18 + $0x98] sm:$0xf]
      %v2047 = vld [vmem:[%s18 + $0x9c] sm:$0xf]
      %v2048 = vld [vmem:[%s18 + $0xa0] sm:$0xf]
      %v2049 = vld [vmem:[%s18 + $0xa4] sm:$0xf]
      %v2050 = vld [vmem:[%s18 + $0xa8] sm:$0xf]
      %v2051 = vld [vmem:[%s18 + $0xac] sm:$0xf]
      %v2052 = vld [vmem:[%s18 + $0xb0] sm:$0xf]
      %v2053 = vld [vmem:[%s18 + $0xb4] sm:$0xf]
      %v2054 = vld [vmem:[%s18 + $0xb8] sm:$0xf]
      %v2055 = vld [vmem:[%s18 + $0xbc] sm:$0xf]
      %v2056 = vld [vmem:[%s18 + $0xc0] sm:$0xf]
      %v2057 = vld [vmem:[%s18 + $0xc4] sm:$0xf]
      %v2058 = vld [vmem:[%s18 + $0xc8] sm:$0xf]
      %v2059 = vld [vmem:[%s18 + $0xcc] sm:$0xf]
      %v2060 = vld [vmem:[%s18 + $0xd0] sm:$0xf]
      %v2061 = vld [vmem:[%s18 + $0xd4] sm:$0xf]
      %v2062 = vld [vmem:[%s18 + $0xd8] sm:$0xf]
      %v2063 = vld [vmem:[%s18 + $0xdc] sm:$0xf]
      %v2064 = vld [vmem:[%s18 + $0xe0] sm:$0xf]
      %v2065 = vld [vmem:[%s18 + $0xe4] sm:$0xf]
      %v2066 = vld [vmem:[%s18 + $0xe8] sm:$0xf]
      %v2067 = vld [vmem:[%s18 + $0xec] sm:$0xf]
      %v2068 = vld [vmem:[%s18 + $0xf0] sm:$0xf]
      %v2069 = vld [vmem:[%s18 + $0xf4] sm:$0xf]
      %v2070 = vld [vmem:[%s18 + $0xf8] sm:$0xf]
      %v2071 = vld [vmem:[%s18 + $0xfc] sm:$0xf]
      %v2072 = vld [vmem:[%s18 + $0x100] sm:$0xf]
      %v2073 = vld [vmem:[%s18 + $0x104] sm:$0xf]
      %v2074 = vld [vmem:[%s18 + $0x108] sm:$0xf]
      %v2075 = vld [vmem:[%s18 + $0x10c] sm:$0xf]
      %v2076 = vld [vmem:[%s18 + $0x110] sm:$0xf]
      %v2077 = vld [vmem:[%s18 + $0x114] sm:$0xf]
      %v2078 = vld [vmem:[%s18 + $0x118] sm:$0xf]
      %v2079 = vld [vmem:[%s18 + $0x11c] sm:$0xf]
      %v2080 = vld [vmem:[%s18 + $0x120] sm:$0xf]
      %v2081 = vld [vmem:[%s18 + $0x124] sm:$0xf]
      %v2082 = vld [vmem:[%s18 + $0x128] sm:$0xf]
      %v2083 = vld [vmem:[%s18 + $0x12c] sm:$0xf]
      %v2084 = vld [vmem:[%s18 + $0x130] sm:$0xf]
      %v2085 = vld [vmem:[%s18 + $0x134] sm:$0xf]
      %v2086 = vld [vmem:[%s18 + $0x138] sm:$0xf]
      %v2087 = vld [vmem:[%s18 + $0x13c] sm:$0xf]
      %v2088 = vld [vmem:[%s18 + $0x140] sm:$0xf]
      %v2089 = vld [vmem:[%s18 + $0x144] sm:$0xf]
      %v2090 = vld [vmem:[%s18 + $0x148] sm:$0xf]
      %v2091 = vld [vmem:[%s18 + $0x14c] sm:$0xf]
      %v2092 = vld [vmem:[%s18 + $0x150] sm:$0xf]
      %v2093 = vld [vmem:[%s18 + $0x154] sm:$0xf]
      %v2094 = vld [vmem:[%s18 + $0x158] sm:$0xf]
      %v2095 = vld [vmem:[%s18 + $0x15c] sm:$0xf]
      %v2096 = vld [vmem:[%s18 + $0x160] sm:$0xf]
      %v2097 = vld [vmem:[%s18 + $0x164] sm:$0xf]
      %v2098 = vld [vmem:[%s18 + $0x168] sm:$0xf]
      %v2099 = vld [vmem:[%s18 + $0x16c] sm:$0xf]
      %v2100 = vld [vmem:[%s18 + $0x170] sm:$0xf]
      %v2101 = vld [vmem:[%s18 + $0x174] sm:$0xf]
      %v2102 = vld [vmem:[%s18 + $0x178] sm:$0xf]
      %v2103 = vld [vmem:[%s18 + $0x17c] sm:$0xf]
      %v2104 = vld [vmem:[%s18 + $0x180] sm:$0xf]
      %v2105 = vld [vmem:[%s18 + $0x184] sm:$0xf]
      %v2106 = vld [vmem:[%s18 + $0x188] sm:$0xf]
      %v2107 = vld [vmem:[%s18 + $0x18c] sm:$0xf]
      %v2108 = vld [vmem:[%s18 + $0x190] sm:$0xf]
      %v2109 = vld [vmem:[%s18 + $0x194] sm:$0xf]
      %v2110 = vld [vmem:[%s18 + $0x198] sm:$0xf]
      %v2111 = vld [vmem:[%s18 + $0x19c] sm:$0xf]
      %v2112 = vld [vmem:[%s18 + $0x1a0] sm:$0xf]
      %v2113 = vld [vmem:[%s18 + $0x1a4] sm:$0xf]
      %v2114 = vld [vmem:[%s18 + $0x1a8] sm:$0xf]
      %v2115 = vld [vmem:[%s18 + $0x1ac] sm:$0xf]
      %v2116 = vld [vmem:[%s18 + $0x1b0] sm:$0xf]
      %v2117 = vld [vmem:[%s18 + $0x1b4] sm:$0xf]
      %v2118 = vld [vmem:[%s18 + $0x1b8] sm:$0xf]
      %v2119 = vld [vmem:[%s18 + $0x1bc] sm:$0xf]
      %v2120 = vld [vmem:[%s18 + $0x1c0] sm:$0xf]
      %v2121 = vld [vmem:[%s18 + $0x1c4] sm:$0xf]
      %v2122 = vld [vmem:[%s18 + $0x1c8] sm:$0xf]
      %v2123 = vld [vmem:[%s18 + $0x1cc] sm:$0xf]
      %v2124 = vld [vmem:[%s18 + $0x1d0] sm:$0xf]
      %v2125 = vld [vmem:[%s18 + $0x1d4] sm:$0xf]
      %v2126 = vld [vmem:[%s18 + $0x1d8] sm:$0xf]
      %v2127 = vld [vmem:[%s18 + $0x1dc] sm:$0xf]
      %v2128 = vld [vmem:[%s18 + $0x1e0] sm:$0xf]
      %v2129 = vld [vmem:[%s18 + $0x1e4] sm:$0xf]
      %v2130 = vld [vmem:[%s18 + $0x1e8] sm:$0xf]
      %v2131 = vld [vmem:[%s18 + $0x1ec] sm:$0xf]
      %v2132 = vld [vmem:[%s18 + $0x1f0] sm:$0xf]
      %v2133 = vld [vmem:[%s18 + $0x1f4] sm:$0xf]
      %v2134 = vld [vmem:[%s18 + $0x1f8] sm:$0xf]
      %v2135 = vld [vmem:[%s18 + $0x1fc] sm:$0xf]
      %v2136 = vld [vmem:[%s18 + $0x200] sm:$0xf]
      %v2137 = vld [vmem:[%s18 + $0x204] sm:$0xf]
      %v2138 = vld [vmem:[%s18 + $0x208] sm:$0xf]
      %v2139 = vld [vmem:[%s18 + $0x20c] sm:$0xf]
      %v2140 = vld [vmem:[%s18 + $0x210] sm:$0xf]
      %v2141 = vld [vmem:[%s18 + $0x214] sm:$0xf]
      %v2142 = vld [vmem:[%s18 + $0x218] sm:$0xf]
      %v2143 = vld [vmem:[%s18 + $0x21c] sm:$0xf]
      %v2144 = vld [vmem:[%s18 + $0x220] sm:$0xf]
      %v2145 = vld [vmem:[%s18 + $0x224] sm:$0xf]
      %v2146 = vld [vmem:[%s18 + $0x228] sm:$0xf]
      %v2147 = vld [vmem:[%s18 + $0x22c] sm:$0xf]
      %v2148 = vld [vmem:[%s18 + $0x230] sm:$0xf]
      %v2149 = vld [vmem:[%s18 + $0x234] sm:$0xf]
      %v2150 = vld [vmem:[%s18 + $0x238] sm:$0xf]
      %v2151 = vld [vmem:[%s18 + $0x23c] sm:$0xf]
      %v2152 = vld [vmem:[%s18 + $0x240] sm:$0xf]
      %v2153 = vld [vmem:[%s18 + $0x244] sm:$0xf]
      %v2154 = vld [vmem:[%s18 + $0x248] sm:$0xf]
      %v2155 = vld [vmem:[%s18 + $0x24c] sm:$0xf]
      %v2156 = vld [vmem:[%s18 + $0x250] sm:$0xf]
      %v2157 = vld [vmem:[%s18 + $0x254] sm:$0xf]
      %v2158 = vld [vmem:[%s18 + $0x258] sm:$0xf]
      %v2159 = vld [vmem:[%s18 + $0x25c] sm:$0xf]
      %v2160 = vld [vmem:[%s18 + $0x260] sm:$0xf]
      %v2161 = vld [vmem:[%s18 + $0x264] sm:$0xf]
      %v2162 = vld [vmem:[%s18 + $0x268] sm:$0xf]
      %v2163 = vld [vmem:[%s18 + $0x26c] sm:$0xf]
      %v2164 = vld [vmem:[%s18 + $0x270] sm:$0xf]
      %v2165 = vld [vmem:[%s18 + $0x274] sm:$0xf]
      %v2166 = vld [vmem:[%s18 + $0x278] sm:$0xf]
      %v2167 = vld [vmem:[%s18 + $0x27c] sm:$0xf]
      %v2168 = vld [vmem:[%s18 + $0x280] sm:$0xf]
      %v2169 = vld [vmem:[%s18 + $0x284] sm:$0xf]
      %v2170 = vld [vmem:[%s18 + $0x288] sm:$0xf]
      %v2171 = vld [vmem:[%s18 + $0x28c] sm:$0xf]
      %v2172 = vld [vmem:[%s18 + $0x290] sm:$0xf]
      %v2173 = vld [vmem:[%s18 + $0x294] sm:$0xf]
      %v2174 = vld [vmem:[%s18 + $0x298] sm:$0xf]
      %v2175 = vld [vmem:[%s18 + $0x29c] sm:$0xf]
      %v2176 = vld [vmem:[%s18 + $0x2a0] sm:$0xf]
      %v2177 = vld [vmem:[%s18 + $0x2a4] sm:$0xf]
      %v2178 = vld [vmem:[%s18 + $0x2a8] sm:$0xf]
      %v2179 = vld [vmem:[%s18 + $0x2ac] sm:$0xf]
      %v2180 = vld [vmem:[%s18 + $0x2b0] sm:$0xf]
      %v2181 = vld [vmem:[%s18 + $0x2b4] sm:$0xf]
      %v2182 = vld [vmem:[%s18 + $0x2b8] sm:$0xf]
      %v2183 = vld [vmem:[%s18 + $0x2bc] sm:$0xf]
      %v2184 = vld [vmem:[%s18 + $0x2c0] sm:$0xf]
      %v2185 = vld [vmem:[%s18 + $0x2c4] sm:$0xf]
      %v2186 = vld [vmem:[%s18 + $0x2c8] sm:$0xf]
      %v2187 = vld [vmem:[%s18 + $0x2cc] sm:$0xf]
      %v2188 = vld [vmem:[%s18 + $0x2d0] sm:$0xf]
      %v2189 = vld [vmem:[%s18 + $0x2d4] sm:$0xf]
      %v2190 = vld [vmem:[%s18 + $0x2d8] sm:$0xf]
      %v2191 = vld [vmem:[%s18 + $0x2dc] sm:$0xf]
      %v2192 = vld [vmem:[%s18 + $0x2e0] sm:$0xf]
      %v2193 = vld [vmem:[%s18 + $0x2e4] sm:$0xf]
      %v2194 = vld [vmem:[%s18 + $0x2e8] sm:$0xf]
      %v2195 = vld [vmem:[%s18 + $0x2ec] sm:$0xf]
      %v2196 = vld [vmem:[%s18 + $0x2f0] sm:$0xf]
      %v2197 = vld [vmem:[%s18 + $0x2f4] sm:$0xf]
      %v2198 = vld [vmem:[%s18 + $0x2f8] sm:$0xf]
      %v2199 = vld [vmem:[%s18 + $0x2fc] sm:$0xf]
      %v2200 = vld [vmem:[%s18 + $0x300] sm:$0xf]
      %v2201 = vld [vmem:[%s18 + $0x304] sm:$0xf]
      %v2202 = vld [vmem:[%s18 + $0x308] sm:$0xf]
      %v2203 = vld [vmem:[%s18 + $0x30c] sm:$0xf]
      %v2204 = vld [vmem:[%s18 + $0x310] sm:$0xf]
      %v2205 = vld [vmem:[%s18 + $0x314] sm:$0xf]
      %v2206 = vld [vmem:[%s18 + $0x318] sm:$0xf]
      %v2207 = vld [vmem:[%s18 + $0x31c] sm:$0xf]
      %v2208 = vld [vmem:[%s18 + $0x320] sm:$0xf]
      %v2209 = vld [vmem:[%s18 + $0x324] sm:$0xf]
      %v2210 = vld [vmem:[%s18 + $0x328] sm:$0xf]
      %v2211 = vld [vmem:[%s18 + $0x32c] sm:$0xf]
      %v2212 = vld [vmem:[%s18 + $0x330] sm:$0xf]
      %v2213 = vld [vmem:[%s18 + $0x334] sm:$0xf]
      %v2214 = vld [vmem:[%s18 + $0x338] sm:$0xf]
      %v2215 = vld [vmem:[%s18 + $0x33c] sm:$0xf]
      %v2216 = vld [vmem:[%s18 + $0x340] sm:$0xf]
      %v2217 = vld [vmem:[%s18 + $0x344] sm:$0xf]
      %v2218 = vld [vmem:[%s18 + $0x348] sm:$0xf]
      %v2219 = vld [vmem:[%s18 + $0x34c] sm:$0xf]
      %v2220 = vld [vmem:[%s18 + $0x350] sm:$0xf]
      %v2221 = vld [vmem:[%s18 + $0x354] sm:$0xf]
      %v2222 = vld [vmem:[%s18 + $0x358] sm:$0xf]
      %v2223 = vld [vmem:[%s18 + $0x35c] sm:$0xf]
      %v2224 = vld [vmem:[%s18 + $0x360] sm:$0xf]
      %v2225 = vld [vmem:[%s18 + $0x364] sm:$0xf]
      %v2226 = vld [vmem:[%s18 + $0x368] sm:$0xf]
      %v2227 = vld [vmem:[%s18 + $0x36c] sm:$0xf]
      %v2228 = vld [vmem:[%s18 + $0x370] sm:$0xf]
      %v2229 = vld [vmem:[%s18 + $0x374] sm:$0xf]
      %v2230 = vld [vmem:[%s18 + $0x378] sm:$0xf]
      %v2231 = vld [vmem:[%s18 + $0x37c] sm:$0xf]
      %v2232 = vld [vmem:[%s18 + $0x380] sm:$0xf]
      %v2233 = vld [vmem:[%s18 + $0x384] sm:$0xf]
      %v2234 = vld [vmem:[%s18 + $0x388] sm:$0xf]
      %v2235 = vld [vmem:[%s18 + $0x38c] sm:$0xf]
      %v2236 = vld [vmem:[%s18 + $0x390] sm:$0xf]
      %v2237 = vld [vmem:[%s18 + $0x394] sm:$0xf]
      %v2238 = vld [vmem:[%s18 + $0x398] sm:$0xf]
      %v2239 = vld [vmem:[%s18 + $0x39c] sm:$0xf]
      %v2240 = vld [vmem:[%s18 + $0x3a0] sm:$0xf]
      %v2241 = vld [vmem:[%s18 + $0x3a4] sm:$0xf]
      %v2242 = vld [vmem:[%s18 + $0x3a8] sm:$0xf]
      %v2243 = vld [vmem:[%s18 + $0x3ac] sm:$0xf]
      %v2244 = vld [vmem:[%s18 + $0x3b0] sm:$0xf]
      %v2245 = vld [vmem:[%s18 + $0x3b4] sm:$0xf]
      %v2246 = vld [vmem:[%s18 + $0x3b8] sm:$0xf]
      %v2247 = vld [vmem:[%s18 + $0x3bc] sm:$0xf]
      %v2248 = vld [vmem:[%s18 + $0x3c0] sm:$0xf]
      %v2249 = vld [vmem:[%s18 + $0x3c4] sm:$0xf]
      %v2250 = vld [vmem:[%s18 + $0x3c8] sm:$0xf]
      %v2251 = vld [vmem:[%s18 + $0x3cc] sm:$0xf]
      %v2252 = vld [vmem:[%s18 + $0x3d0] sm:$0xf]
      %v2253 = vld [vmem:[%s18 + $0x3d4] sm:$0xf]
      %v2254 = vld [vmem:[%s18 + $0x3d8] sm:$0xf]
      %v2255 = vld [vmem:[%s18 + $0x3dc] sm:$0xf]
      %v2256 = vld [vmem:[%s18 + $0x3e0] sm:$0xf]
      %v2257 = vld [vmem:[%s18 + $0x3e4] sm:$0xf]
      %v2258 = vld [vmem:[%s18 + $0x3e8] sm:$0xf]
      %v2259 = vld [vmem:[%s18 + $0x3ec] sm:$0xf]
      %v2260 = vld [vmem:[%s18 + $0x3f0] sm:$0xf]
      %v2261 = vld [vmem:[%s18 + $0x3f4] sm:$0xf]
      %v2262 = vld [vmem:[%s18 + $0x3f8] sm:$0xf]
      %v2263 = vld [vmem:[%s18 + $0x3fc] sm:$0xf]
      %v2264 = vld [vmem:[%s19] sm:$0x1]
      %v2266 = vperm.slane %v2264, 0
      %v2524 = vunpack.c.l.b16 %v2008
      %v2525 = vunpack.c.l.b16 %v2009
      %v2526 = vunpack.c.l.b16 %v2010
      %v2527 = vunpack.c.l.b16 %v2011
      %v2528 = vunpack.c.l.b16 %v2012
      %v2529 = vunpack.c.l.b16 %v2013
      %v2530 = vunpack.c.l.b16 %v2014
      %v2531 = vunpack.c.l.b16 %v2015
      %v2532 = vunpack.c.l.b16 %v2016
      %v2533 = vunpack.c.l.b16 %v2017
      %v2534 = vunpack.c.l.b16 %v2018
      %v2535 = vunpack.c.l.b16 %v2019
      %v2536 = vunpack.c.l.b16 %v2020
      %v2537 = vunpack.c.l.b16 %v2021
      %v2538 = vunpack.c.l.b16 %v2022
      %v2539 = vunpack.c.l.b16 %v2023
      %v2540 = vunpack.c.l.b16 %v2024
      %v2541 = vunpack.c.l.b16 %v2025
      %v2542 = vunpack.c.l.b16 %v2026
      %v2543 = vunpack.c.l.b16 %v2027
      %v2544 = vunpack.c.l.b16 %v2028
      %v2545 = vunpack.c.l.b16 %v2029
      %v2546 = vunpack.c.l.b16 %v2030
      %v2547 = vunpack.c.l.b16 %v2031
      %v2548 = vunpack.c.l.b16 %v2032
      %v2549 = vunpack.c.l.b16 %v2033
      %v2550 = vunpack.c.l.b16 %v2034
      %v2551 = vunpack.c.l.b16 %v2035
      %v2552 = vunpack.c.l.b16 %v2036
      %v2553 = vunpack.c.l.b16 %v2037
      %v2554 = vunpack.c.l.b16 %v2038
      %v2555 = vunpack.c.l.b16 %v2039
      %v2556 = vunpack.c.l.b16 %v2040
      %v2557 = vunpack.c.l.b16 %v2041
      %v2558 = vunpack.c.l.b16 %v2042
      %v2559 = vunpack.c.l.b16 %v2043
      %v2560 = vunpack.c.l.b16 %v2044
      %v2561 = vunpack.c.l.b16 %v2045
      %v2562 = vunpack.c.l.b16 %v2046
      %v2563 = vunpack.c.l.b16 %v2047
      %v2564 = vunpack.c.l.b16 %v2048
      %v2565 = vunpack.c.l.b16 %v2049
      %v2566 = vunpack.c.l.b16 %v2050
      %v2567 = vunpack.c.l.b16 %v2051
      %v2568 = vunpack.c.l.b16 %v2052
      %v2569 = vunpack.c.l.b16 %v2053
      %v2570 = vunpack.c.l.b16 %v2054
      %v2571 = vunpack.c.l.b16 %v2055
      %v2572 = vunpack.c.l.b16 %v2056
      %v2573 = vunpack.c.l.b16 %v2057
      %v2574 = vunpack.c.l.b16 %v2058
      %v2575 = vunpack.c.l.b16 %v2059
      %v2576 = vunpack.c.l.b16 %v2060
      %v2577 = vunpack.c.l.b16 %v2061
      %v2578 = vunpack.c.l.b16 %v2062
      %v2579 = vunpack.c.l.b16 %v2063
      %v2580 = vunpack.c.l.b16 %v2064
      %v2581 = vunpack.c.l.b16 %v2065
      %v2582 = vunpack.c.l.b16 %v2066
      %v2583 = vunpack.c.l.b16 %v2067
      %v2584 = vunpack.c.l.b16 %v2068
      %v2585 = vunpack.c.l.b16 %v2069
      %v2586 = vunpack.c.l.b16 %v2070
      %v2587 = vunpack.c.l.b16 %v2071
      %v2588 = vunpack.c.l.b16 %v2072
      %v2589 = vunpack.c.l.b16 %v2073
      %v2590 = vunpack.c.l.b16 %v2074
      %v2591 = vunpack.c.l.b16 %v2075
      %v2592 = vunpack.c.l.b16 %v2076
      %v2593 = vunpack.c.l.b16 %v2077
      %v2594 = vunpack.c.l.b16 %v2078
      %v2595 = vunpack.c.l.b16 %v2079
      %v2596 = vunpack.c.l.b16 %v2080
      %v2597 = vunpack.c.l.b16 %v2081
      %v2598 = vunpack.c.l.b16 %v2082
      %v2599 = vunpack.c.l.b16 %v2083
      %v2600 = vunpack.c.l.b16 %v2084
      %v2601 = vunpack.c.l.b16 %v2085
      %v2602 = vunpack.c.l.b16 %v2086
      %v2603 = vunpack.c.l.b16 %v2087
      %v2604 = vunpack.c.l.b16 %v2088
      %v2605 = vunpack.c.l.b16 %v2089
      %v2606 = vunpack.c.l.b16 %v2090
      %v2607 = vunpack.c.l.b16 %v2091
      %v2608 = vunpack.c.l.b16 %v2092
      %v2609 = vunpack.c.l.b16 %v2093
      %v2610 = vunpack.c.l.b16 %v2094
      %v2611 = vunpack.c.l.b16 %v2095
      %v2612 = vunpack.c.l.b16 %v2096
      %v2613 = vunpack.c.l.b16 %v2097
      %v2614 = vunpack.c.l.b16 %v2098
      %v2615 = vunpack.c.l.b16 %v2099
      %v2616 = vunpack.c.l.b16 %v2100
      %v2617 = vunpack.c.l.b16 %v2101
      %v2618 = vunpack.c.l.b16 %v2102
      %v2619 = vunpack.c.l.b16 %v2103
      %v2620 = vunpack.c.l.b16 %v2104
      %v2621 = vunpack.c.l.b16 %v2105
      %v2622 = vunpack.c.l.b16 %v2106
      %v2623 = vunpack.c.l.b16 %v2107
      %v2624 = vunpack.c.l.b16 %v2108
      %v2625 = vunpack.c.l.b16 %v2109
      %v2626 = vunpack.c.l.b16 %v2110
      %v2627 = vunpack.c.l.b16 %v2111
      %v2628 = vunpack.c.l.b16 %v2112
      %v2629 = vunpack.c.l.b16 %v2113
      %v2630 = vunpack.c.l.b16 %v2114
      %v2631 = vunpack.c.l.b16 %v2115
      %v2632 = vunpack.c.l.b16 %v2116
      %v2633 = vunpack.c.l.b16 %v2117
      %v2634 = vunpack.c.l.b16 %v2118
      %v2635 = vunpack.c.l.b16 %v2119
      %v2636 = vunpack.c.l.b16 %v2120
      %v2637 = vunpack.c.l.b16 %v2121
      %v2638 = vunpack.c.l.b16 %v2122
      %v2639 = vunpack.c.l.b16 %v2123
      %v2640 = vunpack.c.l.b16 %v2124
      %v2641 = vunpack.c.l.b16 %v2125
      %v2642 = vunpack.c.l.b16 %v2126
      %v2643 = vunpack.c.l.b16 %v2127
      %v2644 = vunpack.c.l.b16 %v2128
      %v2645 = vunpack.c.l.b16 %v2129
      %v2646 = vunpack.c.l.b16 %v2130
      %v2647 = vunpack.c.l.b16 %v2131
      %v2648 = vunpack.c.l.b16 %v2132
      %v2649 = vunpack.c.l.b16 %v2133
      %v2650 = vunpack.c.l.b16 %v2134
      %v2651 = vunpack.c.l.b16 %v2135
      %v2652 = vunpack.c.l.b16 %v2136
      %v2653 = vunpack.c.l.b16 %v2137
      %v2654 = vunpack.c.l.b16 %v2138
      %v2655 = vunpack.c.l.b16 %v2139
      %v2656 = vunpack.c.l.b16 %v2140
      %v2657 = vunpack.c.l.b16 %v2141
      %v2658 = vunpack.c.l.b16 %v2142
      %v2659 = vunpack.c.l.b16 %v2143
      %v2660 = vunpack.c.l.b16 %v2144
      %v2661 = vunpack.c.l.b16 %v2145
      %v2662 = vunpack.c.l.b16 %v2146
      %v2663 = vunpack.c.l.b16 %v2147
      %v2664 = vunpack.c.l.b16 %v2148
      %v2665 = vunpack.c.l.b16 %v2149
      %v2666 = vunpack.c.l.b16 %v2150
      %v2667 = vunpack.c.l.b16 %v2151
      %v2668 = vunpack.c.l.b16 %v2152
      %v2669 = vunpack.c.l.b16 %v2153
      %v2670 = vunpack.c.l.b16 %v2154
      %v2671 = vunpack.c.l.b16 %v2155
      %v2672 = vunpack.c.l.b16 %v2156
      %v2673 = vunpack.c.l.b16 %v2157
      %v2674 = vunpack.c.l.b16 %v2158
      %v2675 = vunpack.c.l.b16 %v2159
      %v2676 = vunpack.c.l.b16 %v2160
      %v2677 = vunpack.c.l.b16 %v2161
      %v2678 = vunpack.c.l.b16 %v2162
      %v2679 = vunpack.c.l.b16 %v2163
      %v2680 = vunpack.c.l.b16 %v2164
      %v2681 = vunpack.c.l.b16 %v2165
      %v2682 = vunpack.c.l.b16 %v2166
      %v2683 = vunpack.c.l.b16 %v2167
      %v2684 = vunpack.c.l.b16 %v2168
      %v2685 = vunpack.c.l.b16 %v2169
      %v2686 = vunpack.c.l.b16 %v2170
      %v2687 = vunpack.c.l.b16 %v2171
      %v2688 = vunpack.c.l.b16 %v2172
      %v2689 = vunpack.c.l.b16 %v2173
      %v2690 = vunpack.c.l.b16 %v2174
      %v2691 = vunpack.c.l.b16 %v2175
      %v2692 = vunpack.c.l.b16 %v2176
      %v2693 = vunpack.c.l.b16 %v2177
      %v2694 = vunpack.c.l.b16 %v2178
      %v2695 = vunpack.c.l.b16 %v2179
      %v2696 = vunpack.c.l.b16 %v2180
      %v2697 = vunpack.c.l.b16 %v2181
      %v2698 = vunpack.c.l.b16 %v2182
      %v2699 = vunpack.c.l.b16 %v2183
      %v2700 = vunpack.c.l.b16 %v2184
      %v2701 = vunpack.c.l.b16 %v2185
      %v2702 = vunpack.c.l.b16 %v2186
      %v2703 = vunpack.c.l.b16 %v2187
      %v2704 = vunpack.c.l.b16 %v2188
      %v2705 = vunpack.c.l.b16 %v2189
      %v2706 = vunpack.c.l.b16 %v2190
      %v2707 = vunpack.c.l.b16 %v2191
      %v2708 = vunpack.c.l.b16 %v2192
      %v2709 = vunpack.c.l.b16 %v2193
      %v2710 = vunpack.c.l.b16 %v2194
      %v2711 = vunpack.c.l.b16 %v2195
      %v2712 = vunpack.c.l.b16 %v2196
      %v2713 = vunpack.c.l.b16 %v2197
      %v2714 = vunpack.c.l.b16 %v2198
      %v2715 = vunpack.c.l.b16 %v2199
      %v2716 = vunpack.c.l.b16 %v2200
      %v2717 = vunpack.c.l.b16 %v2201
      %v2718 = vunpack.c.l.b16 %v2202
      %v2719 = vunpack.c.l.b16 %v2203
      %v2720 = vunpack.c.l.b16 %v2204
      %v2721 = vunpack.c.l.b16 %v2205
      %v2722 = vunpack.c.l.b16 %v2206
      %v2723 = vunpack.c.l.b16 %v2207
      %v2724 = vunpack.c.l.b16 %v2208
      %v2725 = vunpack.c.l.b16 %v2209
      %v2726 = vunpack.c.l.b16 %v2210
      %v2727 = vunpack.c.l.b16 %v2211
      %v2728 = vunpack.c.l.b16 %v2212
      %v2729 = vunpack.c.l.b16 %v2213
      %v2730 = vunpack.c.l.b16 %v2214
      %v2731 = vunpack.c.l.b16 %v2215
      %v2732 = vunpack.c.l.b16 %v2216
      %v2733 = vunpack.c.l.b16 %v2217
      %v2734 = vunpack.c.l.b16 %v2218
      %v2735 = vunpack.c.l.b16 %v2219
      %v2736 = vunpack.c.l.b16 %v2220
      %v2737 = vunpack.c.l.b16 %v2221
      %v2738 = vunpack.c.l.b16 %v2222
      %v2739 = vunpack.c.l.b16 %v2223
      %v2740 = vunpack.c.l.b16 %v2224
      %v2741 = vunpack.c.l.b16 %v2225
      %v2742 = vunpack.c.l.b16 %v2226
      %v2743 = vunpack.c.l.b16 %v2227
      %v2744 = vunpack.c.l.b16 %v2228
      %v2745 = vunpack.c.l.b16 %v2229
      %v2746 = vunpack.c.l.b16 %v2230
      %v2747 = vunpack.c.l.b16 %v2231
      %v2748 = vunpack.c.l.b16 %v2232
      %v2749 = vunpack.c.l.b16 %v2233
      %v2750 = vunpack.c.l.b16 %v2234
      %v2751 = vunpack.c.l.b16 %v2235
      %v2752 = vunpack.c.l.b16 %v2236
      %v2753 = vunpack.c.l.b16 %v2237
      %v2754 = vunpack.c.l.b16 %v2238
      %v2755 = vunpack.c.l.b16 %v2239
      %v2756 = vunpack.c.l.b16 %v2240
      %v2757 = vunpack.c.l.b16 %v2241
      %v2758 = vunpack.c.l.b16 %v2242
      %v2759 = vunpack.c.l.b16 %v2243
      %v2760 = vunpack.c.l.b16 %v2244
      %v2761 = vunpack.c.l.b16 %v2245
      %v2762 = vunpack.c.l.b16 %v2246
      %v2763 = vunpack.c.l.b16 %v2247
      %v2764 = vunpack.c.l.b16 %v2248
      %v2765 = vunpack.c.l.b16 %v2249
      %v2766 = vunpack.c.l.b16 %v2250
      %v2767 = vunpack.c.l.b16 %v2251
      %v2768 = vunpack.c.l.b16 %v2252
      %v2769 = vunpack.c.l.b16 %v2253
      %v2770 = vunpack.c.l.b16 %v2254
      %v2771 = vunpack.c.l.b16 %v2255
      %v2772 = vunpack.c.l.b16 %v2256
      %v2773 = vunpack.c.l.b16 %v2257
      %v2774 = vunpack.c.l.b16 %v2258
      %v2775 = vunpack.c.l.b16 %v2259
      %v2776 = vunpack.c.l.b16 %v2260
      %v2777 = vunpack.c.l.b16 %v2261
      %v2778 = vunpack.c.l.b16 %v2262
      %v2779 = vunpack.c.l.b16 %v2263
      %v2780 = vpack.c.b16 %v2525, %v2524
      %v2781 = vpack.c.b16 %v2527, %v2526
      %v2782 = vpack.c.b16 %v2529, %v2528
      %v2783 = vpack.c.b16 %v2531, %v2530
      %v2784 = vpack.c.b16 %v2533, %v2532
      %v2785 = vpack.c.b16 %v2535, %v2534
      %v2786 = vpack.c.b16 %v2537, %v2536
      %v2787 = vpack.c.b16 %v2539, %v2538
      %v2788 = vpack.c.b16 %v2541, %v2540
      %v2789 = vpack.c.b16 %v2543, %v2542
      %v2790 = vpack.c.b16 %v2545, %v2544
      %v2791 = vpack.c.b16 %v2547, %v2546
      %v2792 = vpack.c.b16 %v2549, %v2548
      %v2793 = vpack.c.b16 %v2551, %v2550
      %v2794 = vpack.c.b16 %v2553, %v2552
      %v2795 = vpack.c.b16 %v2555, %v2554
      %v2796 = vpack.c.b16 %v2557, %v2556
      %v2797 = vpack.c.b16 %v2559, %v2558
      %v2798 = vpack.c.b16 %v2561, %v2560
      %v2799 = vpack.c.b16 %v2563, %v2562
      %v2800 = vpack.c.b16 %v2565, %v2564
      %v2801 = vpack.c.b16 %v2567, %v2566
      %v2802 = vpack.c.b16 %v2569, %v2568
      %v2803 = vpack.c.b16 %v2571, %v2570
      %v2804 = vpack.c.b16 %v2573, %v2572
      %v2805 = vpack.c.b16 %v2575, %v2574
      %v2806 = vpack.c.b16 %v2577, %v2576
      %v2807 = vpack.c.b16 %v2579, %v2578
      %v2808 = vpack.c.b16 %v2581, %v2580
      %v2809 = vpack.c.b16 %v2583, %v2582
      %v2810 = vpack.c.b16 %v2585, %v2584
      %v2811 = vpack.c.b16 %v2587, %v2586
      %v2812 = vpack.c.b16 %v2589, %v2588
      %v2813 = vpack.c.b16 %v2591, %v2590
      %v2814 = vpack.c.b16 %v2593, %v2592
      %v2815 = vpack.c.b16 %v2595, %v2594
      %v2816 = vpack.c.b16 %v2597, %v2596
      %v2817 = vpack.c.b16 %v2599, %v2598
      %v2818 = vpack.c.b16 %v2601, %v2600
      %v2819 = vpack.c.b16 %v2603, %v2602
      %v2820 = vpack.c.b16 %v2605, %v2604
      %v2821 = vpack.c.b16 %v2607, %v2606
      %v2822 = vpack.c.b16 %v2609, %v2608
      %v2823 = vpack.c.b16 %v2611, %v2610
      %v2824 = vpack.c.b16 %v2613, %v2612
      %v2825 = vpack.c.b16 %v2615, %v2614
      %v2826 = vpack.c.b16 %v2617, %v2616
      %v2827 = vpack.c.b16 %v2619, %v2618
      %v2828 = vpack.c.b16 %v2621, %v2620
      %v2829 = vpack.c.b16 %v2623, %v2622
      %v2830 = vpack.c.b16 %v2625, %v2624
      %v2831 = vpack.c.b16 %v2627, %v2626
      %v2832 = vpack.c.b16 %v2629, %v2628
      %v2833 = vpack.c.b16 %v2631, %v2630
      %v2834 = vpack.c.b16 %v2633, %v2632
      %v2835 = vpack.c.b16 %v2635, %v2634
      %v2836 = vpack.c.b16 %v2637, %v2636
      %v2837 = vpack.c.b16 %v2639, %v2638
      %v2838 = vpack.c.b16 %v2641, %v2640
      %v2839 = vpack.c.b16 %v2643, %v2642
      %v2840 = vpack.c.b16 %v2645, %v2644
      %v2841 = vpack.c.b16 %v2647, %v2646
      %v2842 = vpack.c.b16 %v2649, %v2648
      %v2843 = vpack.c.b16 %v2651, %v2650
      %v2844 = vpack.c.b16 %v2653, %v2652
      %v2845 = vpack.c.b16 %v2655, %v2654
      %v2846 = vpack.c.b16 %v2657, %v2656
      %v2847 = vpack.c.b16 %v2659, %v2658
      %v2848 = vpack.c.b16 %v2661, %v2660
      %v2849 = vpack.c.b16 %v2663, %v2662
      %v2850 = vpack.c.b16 %v2665, %v2664
      %v2851 = vpack.c.b16 %v2667, %v2666
      %v2852 = vpack.c.b16 %v2669, %v2668
      %v2853 = vpack.c.b16 %v2671, %v2670
      %v2854 = vpack.c.b16 %v2673, %v2672
      %v2855 = vpack.c.b16 %v2675, %v2674
      %v2856 = vpack.c.b16 %v2677, %v2676
      %v2857 = vpack.c.b16 %v2679, %v2678
      %v2858 = vpack.c.b16 %v2681, %v2680
      %v2859 = vpack.c.b16 %v2683, %v2682
      %v2860 = vpack.c.b16 %v2685, %v2684
      %v2861 = vpack.c.b16 %v2687, %v2686
      %v2862 = vpack.c.b16 %v2689, %v2688
      %v2863 = vpack.c.b16 %v2691, %v2690
      %v2864 = vpack.c.b16 %v2693, %v2692
      %v2865 = vpack.c.b16 %v2695, %v2694
      %v2866 = vpack.c.b16 %v2697, %v2696
      %v2867 = vpack.c.b16 %v2699, %v2698
      %v2868 = vpack.c.b16 %v2701, %v2700
      %v2869 = vpack.c.b16 %v2703, %v2702
      %v2870 = vpack.c.b16 %v2705, %v2704
      %v2871 = vpack.c.b16 %v2707, %v2706
      %v2872 = vpack.c.b16 %v2709, %v2708
      %v2873 = vpack.c.b16 %v2711, %v2710
      %v2874 = vpack.c.b16 %v2713, %v2712
      %v2875 = vpack.c.b16 %v2715, %v2714
      %v2876 = vpack.c.b16 %v2717, %v2716
      %v2877 = vpack.c.b16 %v2719, %v2718
      %v2878 = vpack.c.b16 %v2721, %v2720
      %v2879 = vpack.c.b16 %v2723, %v2722
      %v2880 = vpack.c.b16 %v2725, %v2724
      %v2881 = vpack.c.b16 %v2727, %v2726
      %v2882 = vpack.c.b16 %v2729, %v2728
      %v2883 = vpack.c.b16 %v2731, %v2730
      %v2884 = vpack.c.b16 %v2733, %v2732
      %v2885 = vpack.c.b16 %v2735, %v2734
      %v2886 = vpack.c.b16 %v2737, %v2736
      %v2887 = vpack.c.b16 %v2739, %v2738
      %v2888 = vpack.c.b16 %v2741, %v2740
      %v2889 = vpack.c.b16 %v2743, %v2742
      %v2890 = vpack.c.b16 %v2745, %v2744
      %v2891 = vpack.c.b16 %v2747, %v2746
      %v2892 = vpack.c.b16 %v2749, %v2748
      %v2893 = vpack.c.b16 %v2751, %v2750
      %v2894 = vpack.c.b16 %v2753, %v2752
      %v2895 = vpack.c.b16 %v2755, %v2754
      %v2896 = vpack.c.b16 %v2757, %v2756
      %v2897 = vpack.c.b16 %v2759, %v2758
      %v2898 = vpack.c.b16 %v2761, %v2760
      %v2899 = vpack.c.b16 %v2763, %v2762
      %v2900 = vpack.c.b16 %v2765, %v2764
      %v2901 = vpack.c.b16 %v2767, %v2766
      %v2902 = vpack.c.b16 %v2769, %v2768
      %v2903 = vpack.c.b16 %v2771, %v2770
      %v2904 = vpack.c.b16 %v2773, %v2772
      %v2905 = vpack.c.b16 %v2775, %v2774
      %v2906 = vpack.c.b16 %v2777, %v2776
      %v2907 = vpack.c.b16 %v2779, %v2778
      %3036 = vmatpush.bf16.msra.mxu0 %v2787
      %3037 = vmatpush.bf16.msra.mxu0 %v2786
      %3038 = vmatpush.bf16.msra.mxu0 %v2785
      %3039 = vmatpush.bf16.msra.mxu0 %v2784
      %3040 = vmatpush.bf16.msra.mxu0 %v2783
      %3041 = vmatpush.bf16.msra.mxu0 %v2782
      %3042 = vmatpush.bf16.msra.mxu0 %v2781
      %3043 = vmatpush.bf16.msra.mxu0 %v2780
      %3044 = vmatmul.bf16.gmra.mxu0 %v1992
      %v3045 = vpop.f32.mrf.mxu0
      %v3046 = vadd.f32 %v2266, %v3045
      %v3047 = vpop.f32.mrf.mxu0
      %3048 = vdwg.mxu0
      %3049 = vmatpush.bf16.msra.mxu0 %v2795
      %3050 = vmatpush.bf16.msra.mxu0 %v2794
      %3051 = vmatpush.bf16.msra.mxu0 %v2793
      %3052 = vmatpush.bf16.msra.mxu0 %v2792
      %3053 = vmatpush.bf16.msra.mxu0 %v2791
      %3054 = vmatpush.bf16.msra.mxu0 %v2790
      %3055 = vmatpush.bf16.msra.mxu0 %v2789
      %3056 = vmatpush.bf16.msra.mxu0 %v2788
      %3057 = vmatmul.bf16.gmra.mxu0 %v1993
      %v3058 = vpop.f32.mrf.mxu0
      %v3059 = vadd.f32 %v3046, %v3058
      %v3060 = vpop.f32.mrf.mxu0
      %3061 = vdwg.mxu0
      %3062 = vmatpush.bf16.msra.mxu0 %v2803
      %3063 = vmatpush.bf16.msra.mxu0 %v2802
      %3064 = vmatpush.bf16.msra.mxu0 %v2801
      %3065 = vmatpush.bf16.msra.mxu0 %v2800
      %3066 = vmatpush.bf16.msra.mxu0 %v2799
      %3067 = vmatpush.bf16.msra.mxu0 %v2798
      %3068 = vmatpush.bf16.msra.mxu0 %v2797
      %3069 = vmatpush.bf16.msra.mxu0 %v2796
      %3070 = vmatmul.bf16.gmra.mxu0 %v1994
      %v3071 = vpop.f32.mrf.mxu0
      %v3072 = vadd.f32 %v3059, %v3071
      %v3073 = vpop.f32.mrf.mxu0
      %3074 = vdwg.mxu0
      %3075 = vmatpush.bf16.msra.mxu0 %v2811
      %3076 = vmatpush.bf16.msra.mxu0 %v2810
      %3077 = vmatpush.bf16.msra.mxu0 %v2809
      %3078 = vmatpush.bf16.msra.mxu0 %v2808
      %3079 = vmatpush.bf16.msra.mxu0 %v2807
      %3080 = vmatpush.bf16.msra.mxu0 %v2806
      %3081 = vmatpush.bf16.msra.mxu0 %v2805
      %3082 = vmatpush.bf16.msra.mxu0 %v2804
      %3083 = vmatmul.bf16.gmra.mxu0 %v1995
      %v3084 = vpop.f32.mrf.mxu0
      %v3085 = vadd.f32 %v3072, %v3084
      %v3086 = vpop.f32.mrf.mxu0
      %3087 = vdwg.mxu0
      %3088 = vmatpush.bf16.msra.mxu0 %v2819
      %3089 = vmatpush.bf16.msra.mxu0 %v2818
      %3090 = vmatpush.bf16.msra.mxu0 %v2817
      %3091 = vmatpush.bf16.msra.mxu0 %v2816
      %3092 = vmatpush.bf16.msra.mxu0 %v2815
      %3093 = vmatpush.bf16.msra.mxu0 %v2814
      %3094 = vmatpush.bf16.msra.mxu0 %v2813
      %3095 = vmatpush.bf16.msra.mxu0 %v2812
      %3096 = vmatmul.bf16.gmra.mxu0 %v1996
      %v3097 = vpop.f32.mrf.mxu0
      %v3098 = vadd.f32 %v3085, %v3097
      %v3099 = vpop.f32.mrf.mxu0
      %3100 = vdwg.mxu0
      %3101 = vmatpush.bf16.msra.mxu0 %v2827
      %3102 = vmatpush.bf16.msra.mxu0 %v2826
      %3103 = vmatpush.bf16.msra.mxu0 %v2825
      %3104 = vmatpush.bf16.msra.mxu0 %v2824
      %3105 = vmatpush.bf16.msra.mxu0 %v2823
      %3106 = vmatpush.bf16.msra.mxu0 %v2822
      %3107 = vmatpush.bf16.msra.mxu0 %v2821
      %3108 = vmatpush.bf16.msra.mxu0 %v2820
      %3109 = vmatmul.bf16.gmra.mxu0 %v1997
      %v3110 = vpop.f32.mrf.mxu0
      %v3111 = vadd.f32 %v3098, %v3110
      %v3112 = vpop.f32.mrf.mxu0
      %3113 = vdwg.mxu0
      %3114 = vmatpush.bf16.msra.mxu0 %v2835
      %3115 = vmatpush.bf16.msra.mxu0 %v2834
      %3116 = vmatpush.bf16.msra.mxu0 %v2833
      %3117 = vmatpush.bf16.msra.mxu0 %v2832
      %3118 = vmatpush.bf16.msra.mxu0 %v2831
      %3119 = vmatpush.bf16.msra.mxu0 %v2830
      %3120 = vmatpush.bf16.msra.mxu0 %v2829
      %3121 = vmatpush.bf16.msra.mxu0 %v2828
      %3122 = vmatmul.bf16.gmra.mxu0 %v1998
      %v3123 = vpop.f32.mrf.mxu0
      %v3124 = vadd.f32 %v3111, %v3123
      %v3125 = vpop.f32.mrf.mxu0
      %3126 = vdwg.mxu0
      %3127 = vmatpush.bf16.msra.mxu0 %v2843
      %3128 = vmatpush.bf16.msra.mxu0 %v2842
      %3129 = vmatpush.bf16.msra.mxu0 %v2841
      %3130 = vmatpush.bf16.msra.mxu0 %v2840
      %3131 = vmatpush.bf16.msra.mxu0 %v2839
      %3132 = vmatpush.bf16.msra.mxu0 %v2838
      %3133 = vmatpush.bf16.msra.mxu0 %v2837
      %3134 = vmatpush.bf16.msra.mxu0 %v2836
      %3135 = vmatmul.bf16.gmra.mxu0 %v1999
      %v3136 = vpop.f32.mrf.mxu0
      %v3137 = vadd.f32 %v3124, %v3136
      %v3138 = vpop.f32.mrf.mxu0
      %3139 = vdwg.mxu0
      %3140 = vmatpush.bf16.msra.mxu0 %v2851
      %3141 = vmatpush.bf16.msra.mxu0 %v2850
      %3142 = vmatpush.bf16.msra.mxu0 %v2849
      %3143 = vmatpush.bf16.msra.mxu0 %v2848
      %3144 = vmatpush.bf16.msra.mxu0 %v2847
      %3145 = vmatpush.bf16.msra.mxu0 %v2846
      %3146 = vmatpush.bf16.msra.mxu0 %v2845
      %3147 = vmatpush.bf16.msra.mxu0 %v2844
      %3148 = vmatmul.bf16.gmra.mxu0 %v2000
      %v3149 = vpop.f32.mrf.mxu0
      %v3150 = vadd.f32 %v3137, %v3149
      %v3151 = vpop.f32.mrf.mxu0
      %3152 = vdwg.mxu0
      %3153 = vmatpush.bf16.msra.mxu0 %v2859
      %3154 = vmatpush.bf16.msra.mxu0 %v2858
      %3155 = vmatpush.bf16.msra.mxu0 %v2857
      %3156 = vmatpush.bf16.msra.mxu0 %v2856
      %3157 = vmatpush.bf16.msra.mxu0 %v2855
      %3158 = vmatpush.bf16.msra.mxu0 %v2854
      %3159 = vmatpush.bf16.msra.mxu0 %v2853
      %3160 = vmatpush.bf16.msra.mxu0 %v2852
      %3161 = vmatmul.bf16.gmra.mxu0 %v2001
      %v3162 = vpop.f32.mrf.mxu0
      %v3163 = vadd.f32 %v3150, %v3162
      %v3164 = vpop.f32.mrf.mxu0
      %3165 = vdwg.mxu0
      %3166 = vmatpush.bf16.msra.mxu0 %v2867
      %3167 = vmatpush.bf16.msra.mxu0 %v2866
      %3168 = vmatpush.bf16.msra.mxu0 %v2865
      %3169 = vmatpush.bf16.msra.mxu0 %v2864
      %3170 = vmatpush.bf16.msra.mxu0 %v2863
      %3171 = vmatpush.bf16.msra.mxu0 %v2862
      %3172 = vmatpush.bf16.msra.mxu0 %v2861
      %3173 = vmatpush.bf16.msra.mxu0 %v2860
      %3174 = vmatmul.bf16.gmra.mxu0 %v2002
      %v3175 = vpop.f32.mrf.mxu0
      %v3176 = vadd.f32 %v3163, %v3175
      %v3177 = vpop.f32.mrf.mxu0
      %3178 = vdwg.mxu0
      %3179 = vmatpush.bf16.msra.mxu0 %v2875
      %3180 = vmatpush.bf16.msra.mxu0 %v2874
      %3181 = vmatpush.bf16.msra.mxu0 %v2873
      %3182 = vmatpush.bf16.msra.mxu0 %v2872
      %3183 = vmatpush.bf16.msra.mxu0 %v2871
      %3184 = vmatpush.bf16.msra.mxu0 %v2870
      %3185 = vmatpush.bf16.msra.mxu0 %v2869
      %3186 = vmatpush.bf16.msra.mxu0 %v2868
      %3187 = vmatmul.bf16.gmra.mxu0 %v2003
      %v3188 = vpop.f32.mrf.mxu0
      %v3189 = vadd.f32 %v3176, %v3188
      %v3190 = vpop.f32.mrf.mxu0
      %3191 = vdwg.mxu0
      %3192 = vmatpush.bf16.msra.mxu0 %v2883
      %3193 = vmatpush.bf16.msra.mxu0 %v2882
      %3194 = vmatpush.bf16.msra.mxu0 %v2881
      %3195 = vmatpush.bf16.msra.mxu0 %v2880
      %3196 = vmatpush.bf16.msra.mxu0 %v2879
      %3197 = vmatpush.bf16.msra.mxu0 %v2878
      %3198 = vmatpush.bf16.msra.mxu0 %v2877
      %3199 = vmatpush.bf16.msra.mxu0 %v2876
      %3200 = vmatmul.bf16.gmra.mxu0 %v2004
      %v3201 = vpop.f32.mrf.mxu0
      %v3202 = vadd.f32 %v3189, %v3201
      %v3203 = vpop.f32.mrf.mxu0
      %3204 = vdwg.mxu0
      %3205 = vmatpush.bf16.msra.mxu0 %v2891
      %3206 = vmatpush.bf16.msra.mxu0 %v2890
      %3207 = vmatpush.bf16.msra.mxu0 %v2889
      %3208 = vmatpush.bf16.msra.mxu0 %v2888
      %3209 = vmatpush.bf16.msra.mxu0 %v2887
      %3210 = vmatpush.bf16.msra.mxu0 %v2886
      %3211 = vmatpush.bf16.msra.mxu0 %v2885
      %3212 = vmatpush.bf16.msra.mxu0 %v2884
      %3213 = vmatmul.bf16.gmra.mxu0 %v2005
      %v3214 = vpop.f32.mrf.mxu0
      %v3215 = vadd.f32 %v3202, %v3214
      %v3216 = vpop.f32.mrf.mxu0
      %3217 = vdwg.mxu0
      %3218 = vmatpush.bf16.msra.mxu0 %v2899
      %3219 = vmatpush.bf16.msra.mxu0 %v2898
      %3220 = vmatpush.bf16.msra.mxu0 %v2897
      %3221 = vmatpush.bf16.msra.mxu0 %v2896
      %3222 = vmatpush.bf16.msra.mxu0 %v2895
      %3223 = vmatpush.bf16.msra.mxu0 %v2894
      %3224 = vmatpush.bf16.msra.mxu0 %v2893
      %3225 = vmatpush.bf16.msra.mxu0 %v2892
      %3226 = vmatmul.bf16.gmra.mxu0 %v2006
      %v3227 = vpop.f32.mrf.mxu0
      %v3228 = vadd.f32 %v3215, %v3227
      %v3229 = vpop.f32.mrf.mxu0
      %3230 = vdwg.mxu0
      %3231 = vmatpush.bf16.msra.mxu0 %v2907
      %3232 = vmatpush.bf16.msra.mxu0 %v2906
      %3233 = vmatpush.bf16.msra.mxu0 %v2905
      %3234 = vmatpush.bf16.msra.mxu0 %v2904
      %3235 = vmatpush.bf16.msra.mxu0 %v2903
      %3236 = vmatpush.bf16.msra.mxu0 %v2902
      %3237 = vmatpush.bf16.msra.mxu0 %v2901
      %3238 = vmatpush.bf16.msra.mxu0 %v2900
      %3239 = vmatmul.bf16.gmra.mxu0 %v2007
      %v3240 = vpop.f32.mrf.mxu0
      %v3241 = vadd.f32 %v3228, %v3240
      %v3242 = vpop.f32.mrf.mxu0
      %3243 = vdwg.mxu0
      %v3244 = vadd.f32 %v1535, %v3241
      %v3245 = vld [vmem:[%s20] sm:$0x1]
      %v3246 = vld [vmem:[%s21] sm:$0x1]
      %v3247 = vsel %vm720, %v3244, 0.0
      %3248 = vadd.xlane.f32.xlu0 %v3247
      %v3249 = vpop.xlane.xlu0 %3248
      %v3250 = vmul.f32 %v3249, %v1082
      %v3251 = vsub.f32 %v3244, %v3250
      %v3252 = vmul.f32 %v3251, %v3251
      %v3253 = vsel %vm720, %v3252, 0.0
      %3254 = vadd.xlane.f32.xlu0 %v3253
      %v3255 = vpop.xlane.xlu0 %3254
      %v3256 = vmul.f32 %v3255, %v1082
      %v3257 = vadd.f32 %v3256, 1e-05
      %v3258 = vrsqrt.pop %v3257
      %v3259 = vmul.f32 %v3258, %v3257
      %v3260 = vmul.f32 %v3259, %v3258
      %v3261 = vmul.f32 0.5, %v3260
      %v3262 = vsub.f32 1.5, %v3261
      %v3263 = vmul.f32 %v3258, %v3262
      %vm3264 = vweird.f32 %v3257
      %vm3265 = vweird.f32 %v3258
      %vm3266 = vmor %vm3264, %vm3265
      %v3267 = vsel %vm3266, %v3258, %v3263
      %v3268 = vmul.f32 %v3251, %v3267
      %v3270 = vperm.slane %v3245, 0
      %v3272 = vmul.f32 %v3268, %v3270
      %v3274 = vperm.slane %v3246, 0
      %v3276 = vadd.f32 %v3272, %v3274
      %v3277 = vpack.c.bf16 %v3276, %v3276
      %vm3278 = vcmask 257024
      %3279 = vst.msk [vmem:[%s695] sm:$0xf] %vm3278, %v3277
      %p3280 = scmp.lt.s32.totalorder %s33, 1
      %s3281 = scalar_select %p3280, %s33, 1
      %s3282 = smul.addr %s3281, 4
      %s3283 = scalar_lea.vmem %s22, %s3282
      // Predicated region
      $region109: #{causal_transformer_forward.3} parent=107 // pred_check
        %p3284 = pneg %p523
      $region110: #{causal_transformer_forward.3} parent=107 // pred_check_branch
        %3286 = sbr.rel (%p3284) target = $region112
      $region111: #{causal_transformer_forward.3} parent=107 // pred_region
        _
      $region112: #{causal_transformer_forward.3} parent=107 // pred_fallthru
        _
    $region108: #{causal_transformer_forward.3} parent=5 // pred_fallthru
      _
    %p3287 = scmp.le.s32.totalorder 2, %s28
    // Predicated region
    $region113: #{causal_transformer_forward.3} parent=5 // pred_check
      %p3288 = pneg %p3287
    $region114: #{causal_transformer_forward.3} parent=5 // pred_check_branch
      %3290 = sbr.rel (%p3288) target = $region116
    $region115: #{causal_transformer_forward.3} parent=5 // pred_region
      %s3291 = ssub.s32 %s28, 2
      // Predicated region
      $region117: #{causal_transformer_forward.3} parent=115 // pred_check
        %p3292 = pneg %p529
      $region118: #{causal_transformer_forward.3} parent=115 // pred_check_branch
        %3294 = sbr.rel (%p3292) target = $region120
      $region119: #{causal_transformer_forward.3} parent=115 // pred_region
        %p3295 = scmp.lt.s32.totalorder %s34, 1
        %s3296 = scalar_select %p3295, %s34, 1
        %s3297 = smul.addr %s3296, 4
        %s3298 = scalar_lea.vmem %s22, %s3297
      $region120: #{causal_transformer_forward.3} parent=115 // pred_fallthru
        _
    $region116: #{causal_transformer_forward.3} parent=5 // pred_fallthru
      _
  $region6: #{causal_transformer_forward.3} parent=0 // loop_footer
    %s32 = sadd.s32 1, %s28
  $region7: #{causal_transformer_forward.3} parent=0 // loop_footer_branch
    %27 = sbr.rel target = $region3
  $region8: #{causal_transformer_forward.3} parent=0 // loop_exit
    _

</llo_original>
